<compile_context>
chip_gen: v5e
topology: v5e:2x2
jax: 0.10.0
libtpu: 0.0.40
codegen_flags: <defaults>
</compile_context>

<pallas_src>
import jax
import jax.numpy as jnp
from jax.experimental import pallas as pl
from jax.experimental.pallas import tpu as pltpu


# ----------------------------- fused kernel -----------------------------
def make_fused_lstm_fc_kernel(num_layers, T, H, O):
    """Returns a kernel: (x_ref, wx0, wh0, b0, ..., fc_w, fc_b, out_ref)."""

    def kernel(x_ref, *refs):
        w_refs = refs[: 3 * num_layers]
        fc_w_ref = refs[3 * num_layers]
        fc_b_ref = refs[3 * num_layers + 1]
        out_ref = refs[3 * num_layers + 2]

        bn = x_ref.shape[0]

        # Load resident weights once (they are small and constant across the grid).
        wx = [w_refs[3 * l + 0][...] for l in range(num_layers)]
        wh = [w_refs[3 * l + 1][...] for l in range(num_layers)]
        b = [w_refs[3 * l + 2][...] for l in range(num_layers)]
        fc_w = fc_w_ref[...]                      # (T*H, O)

        h = [jnp.zeros((bn, H), jnp.float32) for _ in range(num_layers)]
        c = [jnp.zeros((bn, H), jnp.float32) for _ in range(num_layers)]
        y_acc = jnp.zeros((bn, O), jnp.float32)

        # Fully unrolled time loop (T and num_layers are small & static) — gives the
        # LLO scheduler visibility to overlap the gate matmuls with the VPU/EUP math.
        for t in range(T):
            inp = x_ref[:, t, :].astype(jnp.float32)          # (bn, D)
            for l in range(num_layers):
                gates = (jnp.dot(inp, wx[l], preferred_element_type=jnp.float32)
                         + jnp.dot(h[l], wh[l], preferred_element_type=jnp.float32)
                         + b[l])                               # (bn, 4H), gate order i,f,g,o
                i_g = jax.nn.sigmoid(gates[:, 0 * H:1 * H])
                f_g = jax.nn.sigmoid(gates[:, 1 * H:2 * H])
                g_g = jnp.tanh(gates[:, 2 * H:3 * H])
                o_g = jax.nn.sigmoid(gates[:, 3 * H:4 * H])
                c[l] = f_g * c[l] + i_g * g_g
                h[l] = o_g * jnp.tanh(c[l])
                inp = h[l]
            # Fused Linear: accumulate this time step's contribution.
            y_acc = y_acc + jnp.dot(inp, fc_w[t * H:(t + 1) * H, :],
                                    preferred_element_type=jnp.float32)

        out_ref[...] = (y_acc + fc_b_ref[...]).astype(out_ref.dtype)

    return kernel


def _pick_block_n(n):
    """Tile N so the (parallel) grid can span both TensorCores on v7x for large N."""
    for cand in (512, 256, 128, 64, 32, 16, 8):
        if n % cand == 0 and n > cand:
            return cand
    return n


def lstm_model_forward(params, x):
    """x: (batch, num_nodes, time_steps, input_size) -> (batch, num_nodes, output_size)."""
    batch, num_nodes, T, D = x.shape
    N = batch * num_nodes
    H = params["lstm"][0]["wh"].shape[0]
    O = params["fc_w"].shape[1]
    num_layers = len(params["lstm"])

    xs = x.reshape(N, T, D)                      # keep batch-major; no time transpose pass

    block_n = _pick_block_n(N)
    grid = (N // block_n,)

    in_specs = [pl.BlockSpec((block_n, T, D), lambda n: (n, 0, 0))]
    inputs = [xs]
    for lp in params["lstm"]:
        d_in = lp["wx"].shape[0]
        in_specs += [
            pl.BlockSpec((d_in, 4 * H), lambda n: (0, 0)),   # W_ih^T (resident)
            pl.BlockSpec((H, 4 * H), lambda n: (0, 0)),      # W_hh^T (resident)
            pl.BlockSpec((1, 4 * H), lambda n: (0, 0)),      # b_ih + b_hh
        ]
        inputs += [lp["wx"], lp["wh"], lp["b"]]
    in_specs += [
        pl.BlockSpec((T * H, O), lambda n: (0, 0)),          # fc weight (resident)
        pl.BlockSpec((1, O), lambda n: (0, 0)),              # fc bias
    ]
    inputs += [params["fc_w"], params["fc_b"]]

    y = pl.pallas_call(
        make_fused_lstm_fc_kernel(num_layers, T, H, O),
        out_shape=jax.ShapeDtypeStruct((N, O), jnp.float32),
        grid_spec=pltpu.PrefetchScalarGridSpec(
            num_scalar_prefetch=0,
            grid=grid,
            in_specs=in_specs,
            out_specs=pl.BlockSpec((block_n, O), lambda n: (n, 0)),
        ),
        compiler_params=pltpu.CompilerParams(dimension_semantics=("parallel",)),
    )(*inputs)

    return y.reshape(batch, num_nodes, O)


# ----------------------------- params -----------------------------
def init_params(key, input_size, hidden_size, num_layers, output_size, time_steps=12):
    k = 1.0 / jnp.sqrt(jnp.float32(hidden_size))
    params = {"lstm": []}
    for layer in range(num_layers):
        d = input_size if layer == 0 else hidden_size
        key, k1, k2, k3, k4 = jax.random.split(key, 5)
        w_ih = jax.random.uniform(k1, (4 * hidden_size, d), jnp.float32, -k, k)
        w_hh = jax.random.uniform(k2, (4 * hidden_size, hidden_size), jnp.float32, -k, k)
        b_ih = jax.random.uniform(k3, (4 * hidden_size,), jnp.float32, -k, k)
        b_hh = jax.random.uniform(k4, (4 * hidden_size,), jnp.float32, -k, k)
        params["lstm"].append({
            "wx": w_ih.T,                       # (D, 4H)
            "wh": w_hh.T,                       # (H, 4H)
            "b": (b_ih + b_hh)[None, :],        # (1, 4H)
        })
    fc_in = hidden_size * time_steps            # hidden_size * 12 in the reference module
    key, k5, k6 = jax.random.split(key, 3)
    kf = 1.0 / jnp.sqrt(jnp.float32(fc_in))
    params["fc_w"] = jax.random.uniform(k5, (fc_in, output_size), jnp.float32, -kf, kf)
    params["fc_b"] = jax.random.uniform(k6, (1, output_size), jnp.float32, -kf, kf)
    return params


# ----------------------------- pure-JAX reference -----------------------------
def ref_forward(params, x):
    batch, num_nodes, T, D = x.shape
    h_seq = jnp.transpose(x.reshape(batch * num_nodes, T, D), (1, 0, 2))
    for lp in params["lstm"]:
        N = h_seq.shape[1]
        H = lp["wh"].shape[0]

        def step(carry, xt, lp=lp):
            h, c = carry
            gates = xt @ lp["wx"] + h @ lp["wh"] + lp["b"]
            i, f, g, o = jnp.split(gates, 4, axis=-1)
            c = jax.nn.sigmoid(f) * c + jax.nn.sigmoid(i) * jnp.tanh(g)
            h = jax.nn.sigmoid(o) * jnp.tanh(c)
            return (h, c), h

        (_, _), h_seq = jax.lax.scan(
            step, (jnp.zeros((N, H), jnp.float32), jnp.zeros((N, H), jnp.float32)), h_seq)
    out = jnp.transpose(h_seq, (1, 0, 2)).reshape(batch * num_nodes, -1)
    y = out @ params["fc_w"] + params["fc_b"]
    return y.reshape(batch, num_nodes, -1)


if __name__ == "__main__":
    # time_steps must be 12 because fc = Linear(hidden_size * 12, output_size)
    batch, num_nodes, time_steps, input_size = 2, 4, 12, 8
    hidden_size, num_layers, output_size = 32, 2, 16

    key = jax.random.PRNGKey(0)
    kx, kp = jax.random.split(key)
    x = jax.random.normal(kx, (batch, num_nodes, time_steps, input_size), jnp.float32)
    params = init_params(kp, input_size, hidden_size, num_layers, output_size, time_steps)

    y = lstm_model_forward(params, x)
    y = jax.block_until_ready(y)

    y_ref = ref_forward(params, x)
    assert y.shape == (batch, num_nodes, output_size)
    assert jnp.allclose(y, y_ref, atol=1e-4, rtol=1e-4), float(jnp.max(jnp.abs(y - y_ref)))
    print("KERNEL_OK")
</pallas_src>

<mosaic_0001>
module attributes {stable_mosaic.version = 11 : i64} {
  func.func @kernel(%arg0: i32, %arg1: memref<8x12x8xf32, #tpu.memory_space<vmem>>, %arg2: memref<8x128xf32, #tpu.memory_space<vmem>>, %arg3: memref<32x128xf32, #tpu.memory_space<vmem>>, %arg4: memref<1x128xf32, #tpu.memory_space<vmem>>, %arg5: memref<32x128xf32, #tpu.memory_space<vmem>>, %arg6: memref<32x128xf32, #tpu.memory_space<vmem>>, %arg7: memref<1x128xf32, #tpu.memory_space<vmem>>, %arg8: memref<384x16xf32, #tpu.memory_space<vmem>>, %arg9: memref<1x16xf32, #tpu.memory_space<vmem>>, %arg10: memref<8x16xf32, #tpu.memory_space<vmem>>) attributes {dimension_semantics = [#tpu.dimension_semantics<parallel>], iteration_bounds = array<i64: 1>, scalar_prefetch = 0 : i64, scratch_operands = 0 : i64, tpu.core_type = #tpu.core_type<tc>, window_params = [{transform_indices = @transform_0, window_bounds = array<i64: 8, 12, 8>}, {pipeline_mode = #tpu.pipeline_mode<synchronous>, transform_indices = @transform_1, window_bounds = array<i64: 8, 128>}, {pipeline_mode = #tpu.pipeline_mode<synchronous>, transform_indices = @transform_2, window_bounds = array<i64: 32, 128>}, {pipeline_mode = #tpu.pipeline_mode<synchronous>, transform_indices = @transform_3, window_bounds = array<i64: 1, 128>}, {pipeline_mode = #tpu.pipeline_mode<synchronous>, transform_indices = @transform_4, window_bounds = array<i64: 32, 128>}, {pipeline_mode = #tpu.pipeline_mode<synchronous>, transform_indices = @transform_5, window_bounds = array<i64: 32, 128>}, {pipeline_mode = #tpu.pipeline_mode<synchronous>, transform_indices = @transform_6, window_bounds = array<i64: 1, 128>}, {pipeline_mode = #tpu.pipeline_mode<synchronous>, transform_indices = @transform_7, window_bounds = array<i64: 384, 16>}, {pipeline_mode = #tpu.pipeline_mode<synchronous>, transform_indices = @transform_8, window_bounds = array<i64: 1, 16>}, {transform_indices = @transform_9, window_bounds = array<i64: 8, 16>}]} {
    %c0 = arith.constant 0 : index
    %c0_0 = arith.constant 0 : index
    %0 = vector.load %arg2[%c0, %c0_0] : memref<8x128xf32, #tpu.memory_space<vmem>>, vector<8x128xf32>
    %c0_1 = arith.constant 0 : index
    %c0_2 = arith.constant 0 : index
    %1 = vector.load %arg5[%c0_1, %c0_2] : memref<32x128xf32, #tpu.memory_space<vmem>>, vector<32x128xf32>
    %c0_3 = arith.constant 0 : index
    %c0_4 = arith.constant 0 : index
    %2 = vector.load %arg3[%c0_3, %c0_4] : memref<32x128xf32, #tpu.memory_space<vmem>>, vector<32x128xf32>
    %c0_5 = arith.constant 0 : index
    %c0_6 = arith.constant 0 : index
    %3 = vector.load %arg6[%c0_5, %c0_6] : memref<32x128xf32, #tpu.memory_space<vmem>>, vector<32x128xf32>
    %c0_7 = arith.constant 0 : index
    %c0_8 = arith.constant 0 : index
    %4 = vector.load %arg4[%c0_7, %c0_8] : memref<1x128xf32, #tpu.memory_space<vmem>>, vector<1x128xf32>
    %c0_9 = arith.constant 0 : index
    %c0_10 = arith.constant 0 : index
    %5 = vector.load %arg7[%c0_9, %c0_10] : memref<1x128xf32, #tpu.memory_space<vmem>>, vector<1x128xf32>
    %c0_11 = arith.constant 0 : index
    %c0_12 = arith.constant 0 : index
    %6 = vector.load %arg8[%c0_11, %c0_12] : memref<384x16xf32, #tpu.memory_space<vmem>>, vector<384x16xf32>
    %cst = arith.constant 0.000000e+00 : f32
    %7 = vector.broadcast %cst : f32 to vector<8x32xf32>
    %cst_13 = arith.constant 0.000000e+00 : f32
    %8 = vector.broadcast %cst_13 : f32 to vector<8x32xf32>
    %cst_14 = arith.constant 0.000000e+00 : f32
    %9 = vector.broadcast %cst_14 : f32 to vector<8x32xf32>
    %cst_15 = arith.constant 0.000000e+00 : f32
    %10 = vector.broadcast %cst_15 : f32 to vector<8x32xf32>
    %cst_16 = arith.constant 0.000000e+00 : f32
    %11 = vector.broadcast %cst_16 : f32 to vector<8x16xf32>
    %c0_17 = arith.constant 0 : index
    %c0_18 = arith.constant 0 : index
    %c0_19 = arith.constant 0 : index
    %12 = vector.load %arg1[%c0_17, %c0_18, %c0_19] : memref<8x12x8xf32, #tpu.memory_space<vmem>>, vector<8x1x8xf32>
    %13 = vector.shape_cast %12 : vector<8x1x8xf32> to vector<8x8xf32>
    %cst_20 = arith.constant dense<0.000000e+00> : vector<8x128xf32>
    %14 = tpu.matmul %13, %0, %cst_20 {dimension_numbers = #tpu.dot_dimension_numbers<[1], [0], [0], [1], [0, 0, 1, 1], [], []>} : vector<8x8xf32>, vector<8x128xf32>, vector<8x128xf32> -> vector<8x128xf32>
    %cst_21 = arith.constant dense<0.000000e+00> : vector<8x128xf32>
    %15 = tpu.matmul %7, %2, %cst_21 {dimension_numbers = #tpu.dot_dimension_numbers<[1], [0], [0], [1], [0, 0, 1, 1], [], []>} : vector<8x32xf32>, vector<32x128xf32>, vector<8x128xf32> -> vector<8x128xf32>
    %16 = arith.addf %14, %15 : vector<8x128xf32>
    %17 = vector.broadcast %4 : vector<1x128xf32> to vector<8x128xf32>
    %18 = arith.addf %16, %17 : vector<8x128xf32>
    %19 = vector.extract_strided_slice %18 {offsets = [0, 0], sizes = [8, 32], strides = [1, 1]} : vector<8x128xf32> to vector<8x32xf32>
    %20 = arith.negf %19 : vector<8x32xf32>
    %21 = math.exp %20 : vector<8x32xf32>
    %cst_22 = arith.constant 1.000000e+00 : f32
    %22 = vector.broadcast %cst_22 : f32 to vector<8x32xf32>
    %23 = arith.addf %22, %21 : vector<8x32xf32>
    %24 = arith.divf %22, %23 : vector<8x32xf32>
    %25 = vector.extract_strided_slice %18 {offsets = [0, 32], sizes = [8, 32], strides = [1, 1]} : vector<8x128xf32> to vector<8x32xf32>
    %26 = arith.negf %25 : vector<8x32xf32>
    %27 = math.exp %26 : vector<8x32xf32>
    %cst_23 = arith.constant 1.000000e+00 : f32
    %28 = vector.broadcast %cst_23 : f32 to vector<8x32xf32>
    %29 = arith.addf %28, %27 : vector<8x32xf32>
    %30 = arith.divf %28, %29 : vector<8x32xf32>
    %31 = vector.extract_strided_slice %18 {offsets = [0, 64], sizes = [8, 32], strides = [1, 1]} : vector<8x128xf32> to vector<8x32xf32>
    %32 = math.tanh %31 : vector<8x32xf32>
    %33 = vector.extract_strided_slice %18 {offsets = [0, 96], sizes = [8, 32], strides = [1, 1]} : vector<8x128xf32> to vector<8x32xf32>
    %34 = arith.negf %33 : vector<8x32xf32>
    %35 = math.exp %34 : vector<8x32xf32>
    %cst_24 = arith.constant 1.000000e+00 : f32
    %36 = vector.broadcast %cst_24 : f32 to vector<8x32xf32>
    %37 = arith.addf %36, %35 : vector<8x32xf32>
    %38 = arith.divf %36, %37 : vector<8x32xf32>
    %39 = arith.mulf %30, %9 : vector<8x32xf32>
    %40 = arith.mulf %24, %32 : vector<8x32xf32>
    %41 = arith.addf %39, %40 : vector<8x32xf32>
    %42 = math.tanh %41 : vector<8x32xf32>
    %43 = arith.mulf %38, %42 : vector<8x32xf32>
    %cst_25 = arith.constant dense<0.000000e+00> : vector<8x128xf32>
    %44 = tpu.matmul %43, %1, %cst_25 {dimension_numbers = #tpu.dot_dimension_numbers<[1], [0], [0], [1], [0, 0, 1, 1], [], []>} : vector<8x32xf32>, vector<32x128xf32>, vector<8x128xf32> -> vector<8x128xf32>
    %cst_26 = arith.constant dense<0.000000e+00> : vector<8x128xf32>
    %45 = tpu.matmul %8, %3, %cst_26 {dimension_numbers = #tpu.dot_dimension_numbers<[1], [0], [0], [1], [0, 0, 1, 1], [], []>} : vector<8x32xf32>, vector<32x128xf32>, vector<8x128xf32> -> vector<8x128xf32>
    %46 = arith.addf %44, %45 : vector<8x128xf32>
    %47 = vector.broadcast %5 : vector<1x128xf32> to vector<8x128xf32>
    %48 = arith.addf %46, %47 : vector<8x128xf32>
    %49 = vector.extract_strided_slice %48 {offsets = [0, 0], sizes = [8, 32], strides = [1, 1]} : vector<8x128xf32> to vector<8x32xf32>
    %50 = arith.negf %49 : vector<8x32xf32>
    %51 = math.exp %50 : vector<8x32xf32>
    %cst_27 = arith.constant 1.000000e+00 : f32
    %52 = vector.broadcast %cst_27 : f32 to vector<8x32xf32>
    %53 = arith.addf %52, %51 : vector<8x32xf32>
    %54 = arith.divf %52, %53 : vector<8x32xf32>
    %55 = vector.extract_strided_slice %48 {offsets = [0, 32], sizes = [8, 32], strides = [1, 1]} : vector<8x128xf32> to vector<8x32xf32>
    %56 = arith.negf %55 : vector<8x32xf32>
    %57 = math.exp %56 : vector<8x32xf32>
    %cst_28 = arith.constant 1.000000e+00 : f32
    %58 = vector.broadcast %cst_28 : f32 to vector<8x32xf32>
    %59 = arith.addf %58, %57 : vector<8x32xf32>
    %60 = arith.divf %58, %59 : vector<8x32xf32>
    %61 = vector.extract_strided_slice %48 {offsets = [0, 64], sizes = [8, 32], strides = [1, 1]} : vector<8x128xf32> to vector<8x32xf32>
    %62 = math.tanh %61 : vector<8x32xf32>
    %63 = vector.extract_strided_slice %48 {offsets = [0, 96], sizes = [8, 32], strides = [1, 1]} : vector<8x128xf32> to vector<8x32xf32>
    %64 = arith.negf %63 : vector<8x32xf32>
    %65 = math.exp %64 : vector<8x32xf32>
    %cst_29 = arith.constant 1.000000e+00 : f32
    %66 = vector.broadcast %cst_29 : f32 to vector<8x32xf32>
    %67 = arith.addf %66, %65 : vector<8x32xf32>
    %68 = arith.divf %66, %67 : vector<8x32xf32>
    %69 = arith.mulf %60, %10 : vector<8x32xf32>
    %70 = arith.mulf %54, %62 : vector<8x32xf32>
    %71 = arith.addf %69, %70 : vector<8x32xf32>
    %72 = math.tanh %71 : vector<8x32xf32>
    %73 = arith.mulf %68, %72 : vector<8x32xf32>
    %74 = vector.extract_strided_slice %6 {offsets = [0, 0], sizes = [32, 16], strides = [1, 1]} : vector<384x16xf32> to vector<32x16xf32>
    %cst_30 = arith.constant dense<0.000000e+00> : vector<8x16xf32>
    %75 = tpu.matmul %73, %74, %cst_30 {dimension_numbers = #tpu.dot_dimension_numbers<[1], [0], [0], [1], [0, 0, 1, 1], [], []>} : vector<8x32xf32>, vector<32x16xf32>, vector<8x16xf32> -> vector<8x16xf32>
    %76 = arith.addf %11, %75 : vector<8x16xf32>
    %c0_31 = arith.constant 0 : index
    %c1 = arith.constant 1 : index
    %c0_32 = arith.constant 0 : index
    %77 = vector.load %arg1[%c0_31, %c1, %c0_32] : memref<8x12x8xf32, #tpu.memory_space<vmem>>, vector<8x1x8xf32>
    %78 = vector.shape_cast %77 : vector<8x1x8xf32> to vector<8x8xf32>
    %cst_33 = arith.constant dense<0.000000e+00> : vector<8x128xf32>
    %79 = tpu.matmul %78, %0, %cst_33 {dimension_numbers = #tpu.dot_dimension_numbers<[1], [0], [0], [1], [0, 0, 1, 1], [], []>} : vector<8x8xf32>, vector<8x128xf32>, vector<8x128xf32> -> vector<8x128xf32>
    %cst_34 = arith.constant dense<0.000000e+00> : vector<8x128xf32>
    %80 = tpu.matmul %43, %2, %cst_34 {dimension_numbers = #tpu.dot_dimension_numbers<[1], [0], [0], [1], [0, 0, 1, 1], [], []>} : vector<8x32xf32>, vector<32x128xf32>, vector<8x128xf32> -> vector<8x128xf32>
    %81 = arith.addf %79, %80 : vector<8x128xf32>
    %82 = vector.broadcast %4 : vector<1x128xf32> to vector<8x128xf32>
    %83 = arith.addf %81, %82 : vector<8x128xf32>
    %84 = vector.extract_strided_slice %83 {offsets = [0, 0], sizes = [8, 32], strides = [1, 1]} : vector<8x128xf32> to vector<8x32xf32>
    %85 = arith.negf %84 : vector<8x32xf32>
    %86 = math.exp %85 : vector<8x32xf32>
    %cst_35 = arith.constant 1.000000e+00 : f32
    %87 = vector.broadcast %cst_35 : f32 to vector<8x32xf32>
    %88 = arith.addf %87, %86 : vector<8x32xf32>
    %89 = arith.divf %87, %88 : vector<8x32xf32>
    %90 = vector.extract_strided_slice %83 {offsets = [0, 32], sizes = [8, 32], strides = [1, 1]} : vector<8x128xf32> to vector<8x32xf32>
    %91 = arith.negf %90 : vector<8x32xf32>
    %92 = math.exp %91 : vector<8x32xf32>
    %cst_36 = arith.constant 1.000000e+00 : f32
    %93 = vector.broadcast %cst_36 : f32 to vector<8x32xf32>
    %94 = arith.addf %93, %92 : vector<8x32xf32>
    %95 = arith.divf %93, %94 : vector<8x32xf32>
    %96 = vector.extract_strided_slice %83 {offsets = [0, 64], sizes = [8, 32], strides = [1, 1]} : vector<8x128xf32> to vector<8x32xf32>
    %97 = math.tanh %96 : vector<8x32xf32>
    %98 = vector.extract_strided_slice %83 {offsets = [0, 96], sizes = [8, 32], strides = [1, 1]} : vector<8x128xf32> to vector<8x32xf32>
    %99 = arith.negf %98 : vector<8x32xf32>
    %100 = math.exp %99 : vector<8x32xf32>
    %cst_37 = arith.constant 1.000000e+00 : f32
    %101 = vector.broadcast %cst_37 : f32 to vector<8x32xf32>
    %102 = arith.addf %101, %100 : vector<8x32xf32>
    %103 = arith.divf %101, %102 : vector<8x32xf32>
    %104 = arith.mulf %95, %41 : vector<8x32xf32>
    %105 = arith.mulf %89, %97 : vector<8x32xf32>
    %106 = arith.addf %104, %105 : vector<8x32xf32>
    %107 = math.tanh %106 : vector<8x32xf32>
    %108 = arith.mulf %103, %107 : vector<8x32xf32>
    %cst_38 = arith.constant dense<0.000000e+00> : vector<8x128xf32>
    %109 = tpu.matmul %108, %1, %cst_38 {dimension_numbers = #tpu.dot_dimension_numbers<[1], [0], [0], [1], [0, 0, 1, 1], [], []>} : vector<8x32xf32>, vector<32x128xf32>, vector<8x128xf32> -> vector<8x128xf32>
    %cst_39 = arith.constant dense<0.000000e+00> : vector<8x128xf32>
    %110 = tpu.matmul %73, %3, %cst_39 {dimension_numbers = #tpu.dot_dimension_numbers<[1], [0], [0], [1], [0, 0, 1, 1], [], []>} : vector<8x32xf32>, vector<32x128xf32>, vector<8x128xf32> -> vector<8x128xf32>
    %111 = arith.addf %109, %110 : vector<8x128xf32>
    %112 = vector.broadcast %5 : vector<1x128xf32> to vector<8x128xf32>
    %113 = arith.addf %111, %112 : vector<8x128xf32>
    %114 = vector.extract_strided_slice %113 {offsets = [0, 0], sizes = [8, 32], strides = [1, 1]} : vector<8x128xf32> to vector<8x32xf32>
    %115 = arith.negf %114 : vector<8x32xf32>
    %116 = math.exp %115 : vector<8x32xf32>
    %cst_40 = arith.constant 1.000000e+00 : f32
    %117 = vector.broadcast %cst_40 : f32 to vector<8x32xf32>
    %118 = arith.addf %117, %116 : vector<8x32xf32>
    %119 = arith.divf %117, %118 : vector<8x32xf32>
    %120 = vector.extract_strided_slice %113 {offsets = [0, 32], sizes = [8, 32], strides = [1, 1]} : vector<8x128xf32> to vector<8x32xf32>
    %121 = arith.negf %120 : vector<8x32xf32>
    %122 = math.exp %121 : vector<8x32xf32>
    %cst_41 = arith.constant 1.000000e+00 : f32
    %123 = vector.broadcast %cst_41 : f32 to vector<8x32xf32>
    %124 = arith.addf %123, %122 : vector<8x32xf32>
    %125 = arith.divf %123, %124 : vector<8x32xf32>
    %126 = vector.extract_strided_slice %113 {offsets = [0, 64], sizes = [8, 32], strides = [1, 1]} : vector<8x128xf32> to vector<8x32xf32>
    %127 = math.tanh %126 : vector<8x32xf32>
    %128 = vector.extract_strided_slice %113 {offsets = [0, 96], sizes = [8, 32], strides = [1, 1]} : vector<8x128xf32> to vector<8x32xf32>
    %129 = arith.negf %128 : vector<8x32xf32>
    %130 = math.exp %129 : vector<8x32xf32>
    %cst_42 = arith.constant 1.000000e+00 : f32
    %131 = vector.broadcast %cst_42 : f32 to vector<8x32xf32>
    %132 = arith.addf %131, %130 : vector<8x32xf32>
    %133 = arith.divf %131, %132 : vector<8x32xf32>
    %134 = arith.mulf %125, %71 : vector<8x32xf32>
    %135 = arith.mulf %119, %127 : vector<8x32xf32>
    %136 = arith.addf %134, %135 : vector<8x32xf32>
    %137 = math.tanh %136 : vector<8x32xf32>
    %138 = arith.mulf %133, %137 : vector<8x32xf32>
    %139 = vector.extract_strided_slice %6 {offsets = [32, 0], sizes = [32, 16], strides = [1, 1]} : vector<384x16xf32> to vector<32x16xf32>
    %cst_43 = arith.constant dense<0.000000e+00> : vector<8x16xf32>
    %140 = tpu.matmul %138, %139, %cst_43 {dimension_numbers = #tpu.dot_dimension_numbers<[1], [0], [0], [1], [0, 0, 1, 1], [], []>} : vector<8x32xf32>, vector<32x16xf32>, vector<8x16xf32> -> vector<8x16xf32>
    %141 = arith.addf %76, %140 : vector<8x16xf32>
    %c0_44 = arith.constant 0 : index
    %c2 = arith.constant 2 : index
    %c0_45 = arith.constant 0 : index
    %142 = vector.load %arg1[%c0_44, %c2, %c0_45] : memref<8x12x8xf32, #tpu.memory_space<vmem>>, vector<8x1x8xf32>
    %143 = vector.shape_cast %142 : vector<8x1x8xf32> to vector<8x8xf32>
    %cst_46 = arith.constant dense<0.000000e+00> : vector<8x128xf32>
    %144 = tpu.matmul %143, %0, %cst_46 {dimension_numbers = #tpu.dot_dimension_numbers<[1], [0], [0], [1], [0, 0, 1, 1], [], []>} : vector<8x8xf32>, vector<8x128xf32>, vector<8x128xf32> -> vector<8x128xf32>
    %cst_47 = arith.constant dense<0.000000e+00> : vector<8x128xf32>
    %145 = tpu.matmul %108, %2, %cst_47 {dimension_numbers = #tpu.dot_dimension_numbers<[1], [0], [0], [1], [0, 0, 1, 1], [], []>} : vector<8x32xf32>, vector<32x128xf32>, vector<8x128xf32> -> vector<8x128xf32>
    %146 = arith.addf %144, %145 : vector<8x128xf32>
    %147 = vector.broadcast %4 : vector<1x128xf32> to vector<8x128xf32>
    %148 = arith.addf %146, %147 : vector<8x128xf32>
    %149 = vector.extract_strided_slice %148 {offsets = [0, 0], sizes = [8, 32], strides = [1, 1]} : vector<8x128xf32> to vector<8x32xf32>
    %150 = arith.negf %149 : vector<8x32xf32>
    %151 = math.exp %150 : vector<8x32xf32>
    %cst_48 = arith.constant 1.000000e+00 : f32
    %152 = vector.broadcast %cst_48 : f32 to vector<8x32xf32>
    %153 = arith.addf %152, %151 : vector<8x32xf32>
    %154 = arith.divf %152, %153 : vector<8x32xf32>
    %155 = vector.extract_strided_slice %148 {offsets = [0, 32], sizes = [8, 32], strides = [1, 1]} : vector<8x128xf32> to vector<8x32xf32>
    %156 = arith.negf %155 : vector<8x32xf32>
    %157 = math.exp %156 : vector<8x32xf32>
    %cst_49 = arith.constant 1.000000e+00 : f32
    %158 = vector.broadcast %cst_49 : f32 to vector<8x32xf32>
    %159 = arith.addf %158, %157 : vector<8x32xf32>
    %160 = arith.divf %158, %159 : vector<8x32xf32>
    %161 = vector.extract_strided_slice %148 {offsets = [0, 64], sizes = [8, 32], strides = [1, 1]} : vector<8x128xf32> to vector<8x32xf32>
    %162 = math.tanh %161 : vector<8x32xf32>
    %163 = vector.extract_strided_slice %148 {offsets = [0, 96], sizes = [8, 32], strides = [1, 1]} : vector<8x128xf32> to vector<8x32xf32>
    %164 = arith.negf %163 : vector<8x32xf32>
    %165 = math.exp %164 : vector<8x32xf32>
    %cst_50 = arith.constant 1.000000e+00 : f32
    %166 = vector.broadcast %cst_50 : f32 to vector<8x32xf32>
    %167 = arith.addf %166, %165 : vector<8x32xf32>
    %168 = arith.divf %166, %167 : vector<8x32xf32>
    %169 = arith.mulf %160, %106 : vector<8x32xf32>
    %170 = arith.mulf %154, %162 : vector<8x32xf32>
    %171 = arith.addf %169, %170 : vector<8x32xf32>
    %172 = math.tanh %171 : vector<8x32xf32>
    %173 = arith.mulf %168, %172 : vector<8x32xf32>
    %cst_51 = arith.constant dense<0.000000e+00> : vector<8x128xf32>
    %174 = tpu.matmul %173, %1, %cst_51 {dimension_numbers = #tpu.dot_dimension_numbers<[1], [0], [0], [1], [0, 0, 1, 1], [], []>} : vector<8x32xf32>, vector<32x128xf32>, vector<8x128xf32> -> vector<8x128xf32>
    %cst_52 = arith.constant dense<0.000000e+00> : vector<8x128xf32>
    %175 = tpu.matmul %138, %3, %cst_52 {dimension_numbers = #tpu.dot_dimension_numbers<[1], [0], [0], [1], [0, 0, 1, 1], [], []>} : vector<8x32xf32>, vector<32x128xf32>, vector<8x128xf32> -> vector<8x128xf32>
    %176 = arith.addf %174, %175 : vector<8x128xf32>
    %177 = vector.broadcast %5 : vector<1x128xf32> to vector<8x128xf32>
    %178 = arith.addf %176, %177 : vector<8x128xf32>
    %179 = vector.extract_strided_slice %178 {offsets = [0, 0], sizes = [8, 32], strides = [1, 1]} : vector<8x128xf32> to vector<8x32xf32>
    %180 = arith.negf %179 : vector<8x32xf32>
    %181 = math.exp %180 : vector<8x32xf32>
    %cst_53 = arith.constant 1.000000e+00 : f32
    %182 = vector.broadcast %cst_53 : f32 to vector<8x32xf32>
    %183 = arith.addf %182, %181 : vector<8x32xf32>
    %184 = arith.divf %182, %183 : vector<8x32xf32>
    %185 = vector.extract_strided_slice %178 {offsets = [0, 32], sizes = [8, 32], strides = [1, 1]} : vector<8x128xf32> to vector<8x32xf32>
    %186 = arith.negf %185 : vector<8x32xf32>
    %187 = math.exp %186 : vector<8x32xf32>
    %cst_54 = arith.constant 1.000000e+00 : f32
    %188 = vector.broadcast %cst_54 : f32 to vector<8x32xf32>
    %189 = arith.addf %188, %187 : vector<8x32xf32>
    %190 = arith.divf %188, %189 : vector<8x32xf32>
    %191 = vector.extract_strided_slice %178 {offsets = [0, 64], sizes = [8, 32], strides = [1, 1]} : vector<8x128xf32> to vector<8x32xf32>
    %192 = math.tanh %191 : vector<8x32xf32>
    %193 = vector.extract_strided_slice %178 {offsets = [0, 96], sizes = [8, 32], strides = [1, 1]} : vector<8x128xf32> to vector<8x32xf32>
    %194 = arith.negf %193 : vector<8x32xf32>
    %195 = math.exp %194 : vector<8x32xf32>
    %cst_55 = arith.constant 1.000000e+00 : f32
    %196 = vector.broadcast %cst_55 : f32 to vector<8x32xf32>
    %197 = arith.addf %196, %195 : vector<8x32xf32>
    %198 = arith.divf %196, %197 : vector<8x32xf32>
    %199 = arith.mulf %190, %136 : vector<8x32xf32>
    %200 = arith.mulf %184, %192 : vector<8x32xf32>
    %201 = arith.addf %199, %200 : vector<8x32xf32>
    %202 = math.tanh %201 : vector<8x32xf32>
    %203 = arith.mulf %198, %202 : vector<8x32xf32>
    %204 = vector.extract_strided_slice %6 {offsets = [64, 0], sizes = [32, 16], strides = [1, 1]} : vector<384x16xf32> to vector<32x16xf32>
    %cst_56 = arith.constant dense<0.000000e+00> : vector<8x16xf32>
    %205 = tpu.matmul %203, %204, %cst_56 {dimension_numbers = #tpu.dot_dimension_numbers<[1], [0], [0], [1], [0, 0, 1, 1], [], []>} : vector<8x32xf32>, vector<32x16xf32>, vector<8x16xf32> -> vector<8x16xf32>
    %206 = arith.addf %141, %205 : vector<8x16xf32>
    %c0_57 = arith.constant 0 : index
    %c3 = arith.constant 3 : index
    %c0_58 = arith.constant 0 : index
    %207 = vector.load %arg1[%c0_57, %c3, %c0_58] : memref<8x12x8xf32, #tpu.memory_space<vmem>>, vector<8x1x8xf32>
    %208 = vector.shape_cast %207 : vector<8x1x8xf32> to vector<8x8xf32>
    %cst_59 = arith.constant dense<0.000000e+00> : vector<8x128xf32>
    %209 = tpu.matmul %208, %0, %cst_59 {dimension_numbers = #tpu.dot_dimension_numbers<[1], [0], [0], [1], [0, 0, 1, 1], [], []>} : vector<8x8xf32>, vector<8x128xf32>, vector<8x128xf32> -> vector<8x128xf32>
    %cst_60 = arith.constant dense<0.000000e+00> : vector<8x128xf32>
    %210 = tpu.matmul %173, %2, %cst_60 {dimension_numbers = #tpu.dot_dimension_numbers<[1], [0], [0], [1], [0, 0, 1, 1], [], []>} : vector<8x32xf32>, vector<32x128xf32>, vector<8x128xf32> -> vector<8x128xf32>
    %211 = arith.addf %209, %210 : vector<8x128xf32>
    %212 = vector.broadcast %4 : vector<1x128xf32> to vector<8x128xf32>
    %213 = arith.addf %211, %212 : vector<8x128xf32>
    %214 = vector.extract_strided_slice %213 {offsets = [0, 0], sizes = [8, 32], strides = [1, 1]} : vector<8x128xf32> to vector<8x32xf32>
    %215 = arith.negf %214 : vector<8x32xf32>
    %216 = math.exp %215 : vector<8x32xf32>
    %cst_61 = arith.constant 1.000000e+00 : f32
    %217 = vector.broadcast %cst_61 : f32 to vector<8x32xf32>
    %218 = arith.addf %217, %216 : vector<8x32xf32>
    %219 = arith.divf %217, %218 : vector<8x32xf32>
    %220 = vector.extract_strided_slice %213 {offsets = [0, 32], sizes = [8, 32], strides = [1, 1]} : vector<8x128xf32> to vector<8x32xf32>
    %221 = arith.negf %220 : vector<8x32xf32>
    %222 = math.exp %221 : vector<8x32xf32>
    %cst_62 = arith.constant 1.000000e+00 : f32
    %223 = vector.broadcast %cst_62 : f32 to vector<8x32xf32>
    %224 = arith.addf %223, %222 : vector<8x32xf32>
    %225 = arith.divf %223, %224 : vector<8x32xf32>
    %226 = vector.extract_strided_slice %213 {offsets = [0, 64], sizes = [8, 32], strides = [1, 1]} : vector<8x128xf32> to vector<8x32xf32>
    %227 = math.tanh %226 : vector<8x32xf32>
    %228 = vector.extract_strided_slice %213 {offsets = [0, 96], sizes = [8, 32], strides = [1, 1]} : vector<8x128xf32> to vector<8x32xf32>
    %229 = arith.negf %228 : vector<8x32xf32>
    %230 = math.exp %229 : vector<8x32xf32>
    %cst_63 = arith.constant 1.000000e+00 : f32
    %231 = vector.broadcast %cst_63 : f32 to vector<8x32xf32>
    %232 = arith.addf %231, %230 : vector<8x32xf32>
    %233 = arith.divf %231, %232 : vector<8x32xf32>
    %234 = arith.mulf %225, %171 : vector<8x32xf32>
    %235 = arith.mulf %219, %227 : vector<8x32xf32>
    %236 = arith.addf %234, %235 : vector<8x32xf32>
    %237 = math.tanh %236 : vector<8x32xf32>
    %238 = arith.mulf %233, %237 : vector<8x32xf32>
    %cst_64 = arith.constant dense<0.000000e+00> : vector<8x128xf32>
    %239 = tpu.matmul %238, %1, %cst_64 {dimension_numbers = #tpu.dot_dimension_numbers<[1], [0], [0], [1], [0, 0, 1, 1], [], []>} : vector<8x32xf32>, vector<32x128xf32>, vector<8x128xf32> -> vector<8x128xf32>
    %cst_65 = arith.constant dense<0.000000e+00> : vector<8x128xf32>
    %240 = tpu.matmul %203, %3, %cst_65 {dimension_numbers = #tpu.dot_dimension_numbers<[1], [0], [0], [1], [0, 0, 1, 1], [], []>} : vector<8x32xf32>, vector<32x128xf32>, vector<8x128xf32> -> vector<8x128xf32>
    %241 = arith.addf %239, %240 : vector<8x128xf32>
    %242 = vector.broadcast %5 : vector<1x128xf32> to vector<8x128xf32>
    %243 = arith.addf %241, %242 : vector<8x128xf32>
    %244 = vector.extract_strided_slice %243 {offsets = [0, 0], sizes = [8, 32], strides = [1, 1]} : vector<8x128xf32> to vector<8x32xf32>
    %245 = arith.negf %244 : vector<8x32xf32>
    %246 = math.exp %245 : vector<8x32xf32>
    %cst_66 = arith.constant 1.000000e+00 : f32
    %247 = vector.broadcast %cst_66 : f32 to vector<8x32xf32>
    %248 = arith.addf %247, %246 : vector<8x32xf32>
    %249 = arith.divf %247, %248 : vector<8x32xf32>
    %250 = vector.extract_strided_slice %243 {offsets = [0, 32], sizes = [8, 32], strides = [1, 1]} : vector<8x128xf32> to vector<8x32xf32>
    %251 = arith.negf %250 : vector<8x32xf32>
    %252 = math.exp %251 : vector<8x32xf32>
    %cst_67 = arith.constant 1.000000e+00 : f32
    %253 = vector.broadcast %cst_67 : f32 to vector<8x32xf32>
    %254 = arith.addf %253, %252 : vector<8x32xf32>
    %255 = arith.divf %253, %254 : vector<8x32xf32>
    %256 = vector.extract_strided_slice %243 {offsets = [0, 64], sizes = [8, 32], strides = [1, 1]} : vector<8x128xf32> to vector<8x32xf32>
    %257 = math.tanh %256 : vector<8x32xf32>
    %258 = vector.extract_strided_slice %243 {offsets = [0, 96], sizes = [8, 32], strides = [1, 1]} : vector<8x128xf32> to vector<8x32xf32>
    %259 = arith.negf %258 : vector<8x32xf32>
    %260 = math.exp %259 : vector<8x32xf32>
    %cst_68 = arith.constant 1.000000e+00 : f32
    %261 = vector.broadcast %cst_68 : f32 to vector<8x32xf32>
    %262 = arith.addf %261, %260 : vector<8x32xf32>
    %263 = arith.divf %261, %262 : vector<8x32xf32>
    %264 = arith.mulf %255, %201 : vector<8x32xf32>
    %265 = arith.mulf %249, %257 : vector<8x32xf32>
    %266 = arith.addf %264, %265 : vector<8x32xf32>
    %267 = math.tanh %266 : vector<8x32xf32>
    %268 = arith.mulf %263, %267 : vector<8x32xf32>
    %269 = vector.extract_strided_slice %6 {offsets = [96, 0], sizes = [32, 16], strides = [1, 1]} : vector<384x16xf32> to vector<32x16xf32>
    %cst_69 = arith.constant dense<0.000000e+00> : vector<8x16xf32>
    %270 = tpu.matmul %268, %269, %cst_69 {dimension_numbers = #tpu.dot_dimension_numbers<[1], [0], [0], [1], [0, 0, 1, 1], [], []>} : vector<8x32xf32>, vector<32x16xf32>, vector<8x16xf32> -> vector<8x16xf32>
    %271 = arith.addf %206, %270 : vector<8x16xf32>
    %c0_70 = arith.constant 0 : index
    %c4 = arith.constant 4 : index
    %c0_71 = arith.constant 0 : index
    %272 = vector.load %arg1[%c0_70, %c4, %c0_71] : memref<8x12x8xf32, #tpu.memory_space<vmem>>, vector<8x1x8xf32>
    %273 = vector.shape_cast %272 : vector<8x1x8xf32> to vector<8x8xf32>
    %cst_72 = arith.constant dense<0.000000e+00> : vector<8x128xf32>
    %274 = tpu.matmul %273, %0, %cst_72 {dimension_numbers = #tpu.dot_dimension_numbers<[1], [0], [0], [1], [0, 0, 1, 1], [], []>} : vector<8x8xf32>, vector<8x128xf32>, vector<8x128xf32> -> vector<8x128xf32>
    %cst_73 = arith.constant dense<0.000000e+00> : vector<8x128xf32>
    %275 = tpu.matmul %238, %2, %cst_73 {dimension_numbers = #tpu.dot_dimension_numbers<[1], [0], [0], [1], [0, 0, 1, 1], [], []>} : vector<8x32xf32>, vector<32x128xf32>, vector<8x128xf32> -> vector<8x128xf32>
    %276 = arith.addf %274, %275 : vector<8x128xf32>
    %277 = vector.broadcast %4 : vector<1x128xf32> to vector<8x128xf32>
    %278 = arith.addf %276, %277 : vector<8x128xf32>
    %279 = vector.extract_strided_slice %278 {offsets = [0, 0], sizes = [8, 32], strides = [1, 1]} : vector<8x128xf32> to vector<8x32xf32>
    %280 = arith.negf %279 : vector<8x32xf32>
    %281 = math.exp %280 : vector<8x32xf32>
    %cst_74 = arith.constant 1.000000e+00 : f32
    %282 = vector.broadcast %cst_74 : f32 to vector<8x32xf32>
    %283 = arith.addf %282, %281 : vector<8x32xf32>
    %284 = arith.divf %282, %283 : vector<8x32xf32>
    %285 = vector.extract_strided_slice %278 {offsets = [0, 32], sizes = [8, 32], strides = [1, 1]} : vector<8x128xf32> to vector<8x32xf32>
    %286 = arith.negf %285 : vector<8x32xf32>
    %287 = math.exp %286 : vector<8x32xf32>
    %cst_75 = arith.constant 1.000000e+00 : f32
    %288 = vector.broadcast %cst_75 : f32 to vector<8x32xf32>
    %289 = arith.addf %288, %287 : vector<8x32xf32>
    %290 = arith.divf %288, %289 : vector<8x32xf32>
    %291 = vector.extract_strided_slice %278 {offsets = [0, 64], sizes = [8, 32], strides = [1, 1]} : vector<8x128xf32> to vector<8x32xf32>
    %292 = math.tanh %291 : vector<8x32xf32>
    %293 = vector.extract_strided_slice %278 {offsets = [0, 96], sizes = [8, 32], strides = [1, 1]} : vector<8x128xf32> to vector<8x32xf32>
    %294 = arith.negf %293 : vector<8x32xf32>
    %295 = math.exp %294 : vector<8x32xf32>
    %cst_76 = arith.constant 1.000000e+00 : f32
    %296 = vector.broadcast %cst_76 : f32 to vector<8x32xf32>
    %297 = arith.addf %296, %295 : vector<8x32xf32>
    %298 = arith.divf %296, %297 : vector<8x32xf32>
    %299 = arith.mulf %290, %236 : vector<8x32xf32>
    %300 = arith.mulf %284, %292 : vector<8x32xf32>
    %301 = arith.addf %299, %300 : vector<8x32xf32>
    %302 = math.tanh %301 : vector<8x32xf32>
    %303 = arith.mulf %298, %302 : vector<8x32xf32>
    %cst_77 = arith.constant dense<0.000000e+00> : vector<8x128xf32>
    %304 = tpu.matmul %303, %1, %cst_77 {dimension_numbers = #tpu.dot_dimension_numbers<[1], [0], [0], [1], [0, 0, 1, 1], [], []>} : vector<8x32xf32>, vector<32x128xf32>, vector<8x128xf32> -> vector<8x128xf32>
    %cst_78 = arith.constant dense<0.000000e+00> : vector<8x128xf32>
    %305 = tpu.matmul %268, %3, %cst_78 {dimension_numbers = #tpu.dot_dimension_numbers<[1], [0], [0], [1], [0, 0, 1, 1], [], []>} : vector<8x32xf32>, vector<32x128xf32>, vector<8x128xf32> -> vector<8x128xf32>
    %306 = arith.addf %304, %305 : vector<8x128xf32>
    %307 = vector.broadcast %5 : vector<1x128xf32> to vector<8x128xf32>
    %308 = arith.addf %306, %307 : vector<8x128xf32>
    %309 = vector.extract_strided_slice %308 {offsets = [0, 0], sizes = [8, 32], strides = [1, 1]} : vector<8x128xf32> to vector<8x32xf32>
    %310 = arith.negf %309 : vector<8x32xf32>
    %311 = math.exp %310 : vector<8x32xf32>
    %cst_79 = arith.constant 1.000000e+00 : f32
    %312 = vector.broadcast %cst_79 : f32 to vector<8x32xf32>
    %313 = arith.addf %312, %311 : vector<8x32xf32>
    %314 = arith.divf %312, %313 : vector<8x32xf32>
    %315 = vector.extract_strided_slice %308 {offsets = [0, 32], sizes = [8, 32], strides = [1, 1]} : vector<8x128xf32> to vector<8x32xf32>
    %316 = arith.negf %315 : vector<8x32xf32>
    %317 = math.exp %316 : vector<8x32xf32>
    %cst_80 = arith.constant 1.000000e+00 : f32
    %318 = vector.broadcast %cst_80 : f32 to vector<8x32xf32>
    %319 = arith.addf %318, %317 : vector<8x32xf32>
    %320 = arith.divf %318, %319 : vector<8x32xf32>
    %321 = vector.extract_strided_slice %308 {offsets = [0, 64], sizes = [8, 32], strides = [1, 1]} : vector<8x128xf32> to vector<8x32xf32>
    %322 = math.tanh %321 : vector<8x32xf32>
    %323 = vector.extract_strided_slice %308 {offsets = [0, 96], sizes = [8, 32], strides = [1, 1]} : vector<8x128xf32> to vector<8x32xf32>
    %324 = arith.negf %323 : vector<8x32xf32>
    %325 = math.exp %324 : vector<8x32xf32>
    %cst_81 = arith.constant 1.000000e+00 : f32
    %326 = vector.broadcast %cst_81 : f32 to vector<8x32xf32>
    %327 = arith.addf %326, %325 : vector<8x32xf32>
    %328 = arith.divf %326, %327 : vector<8x32xf32>
    %329 = arith.mulf %320, %266 : vector<8x32xf32>
    %330 = arith.mulf %314, %322 : vector<8x32xf32>
    %331 = arith.addf %329, %330 : vector<8x32xf32>
    %332 = math.tanh %331 : vector<8x32xf32>
    %333 = arith.mulf %328, %332 : vector<8x32xf32>
    %334 = vector.extract_strided_slice %6 {offsets = [128, 0], sizes = [32, 16], strides = [1, 1]} : vector<384x16xf32> to vector<32x16xf32>
    %cst_82 = arith.constant dense<0.000000e+00> : vector<8x16xf32>
    %335 = tpu.matmul %333, %334, %cst_82 {dimension_numbers = #tpu.dot_dimension_numbers<[1], [0], [0], [1], [0, 0, 1, 1], [], []>} : vector<8x32xf32>, vector<32x16xf32>, vector<8x16xf32> -> vector<8x16xf32>
    %336 = arith.addf %271, %335 : vector<8x16xf32>
    %c0_83 = arith.constant 0 : index
    %c5 = arith.constant 5 : index
    %c0_84 = arith.constant 0 : index
    %337 = vector.load %arg1[%c0_83, %c5, %c0_84] : memref<8x12x8xf32, #tpu.memory_space<vmem>>, vector<8x1x8xf32>
    %338 = vector.shape_cast %337 : vector<8x1x8xf32> to vector<8x8xf32>
    %cst_85 = arith.constant dense<0.000000e+00> : vector<8x128xf32>
    %339 = tpu.matmul %338, %0, %cst_85 {dimension_numbers = #tpu.dot_dimension_numbers<[1], [0], [0], [1], [0, 0, 1, 1], [], []>} : vector<8x8xf32>, vector<8x128xf32>, vector<8x128xf32> -> vector<8x128xf32>
    %cst_86 = arith.constant dense<0.000000e+00> : vector<8x128xf32>
    %340 = tpu.matmul %303, %2, %cst_86 {dimension_numbers = #tpu.dot_dimension_numbers<[1], [0], [0], [1], [0, 0, 1, 1], [], []>} : vector<8x32xf32>, vector<32x128xf32>, vector<8x128xf32> -> vector<8x128xf32>
    %341 = arith.addf %339, %340 : vector<8x128xf32>
    %342 = vector.broadcast %4 : vector<1x128xf32> to vector<8x128xf32>
    %343 = arith.addf %341, %342 : vector<8x128xf32>
    %344 = vector.extract_strided_slice %343 {offsets = [0, 0], sizes = [8, 32], strides = [1, 1]} : vector<8x128xf32> to vector<8x32xf32>
    %345 = arith.negf %344 : vector<8x32xf32>
    %346 = math.exp %345 : vector<8x32xf32>
    %cst_87 = arith.constant 1.000000e+00 : f32
    %347 = vector.broadcast %cst_87 : f32 to vector<8x32xf32>
    %348 = arith.addf %347, %346 : vector<8x32xf32>
    %349 = arith.divf %347, %348 : vector<8x32xf32>
    %350 = vector.extract_strided_slice %343 {offsets = [0, 32], sizes = [8, 32], strides = [1, 1]} : vector<8x128xf32> to vector<8x32xf32>
    %351 = arith.negf %350 : vector<8x32xf32>
    %352 = math.exp %351 : vector<8x32xf32>
    %cst_88 = arith.constant 1.000000e+00 : f32
    %353 = vector.broadcast %cst_88 : f32 to vector<8x32xf32>
    %354 = arith.addf %353, %352 : vector<8x32xf32>
    %355 = arith.divf %353, %354 : vector<8x32xf32>
    %356 = vector.extract_strided_slice %343 {offsets = [0, 64], sizes = [8, 32], strides = [1, 1]} : vector<8x128xf32> to vector<8x32xf32>
    %357 = math.tanh %356 : vector<8x32xf32>
    %358 = vector.extract_strided_slice %343 {offsets = [0, 96], sizes = [8, 32], strides = [1, 1]} : vector<8x128xf32> to vector<8x32xf32>
    %359 = arith.negf %358 : vector<8x32xf32>
    %360 = math.exp %359 : vector<8x32xf32>
    %cst_89 = arith.constant 1.000000e+00 : f32
    %361 = vector.broadcast %cst_89 : f32 to vector<8x32xf32>
    %362 = arith.addf %361, %360 : vector<8x32xf32>
    %363 = arith.divf %361, %362 : vector<8x32xf32>
    %364 = arith.mulf %355, %301 : vector<8x32xf32>
    %365 = arith.mulf %349, %357 : vector<8x32xf32>
    %366 = arith.addf %364, %365 : vector<8x32xf32>
    %367 = math.tanh %366 : vector<8x32xf32>
    %368 = arith.mulf %363, %367 : vector<8x32xf32>
    %cst_90 = arith.constant dense<0.000000e+00> : vector<8x128xf32>
    %369 = tpu.matmul %368, %1, %cst_90 {dimension_numbers = #tpu.dot_dimension_numbers<[1], [0], [0], [1], [0, 0, 1, 1], [], []>} : vector<8x32xf32>, vector<32x128xf32>, vector<8x128xf32> -> vector<8x128xf32>
    %cst_91 = arith.constant dense<0.000000e+00> : vector<8x128xf32>
    %370 = tpu.matmul %333, %3, %cst_91 {dimension_numbers = #tpu.dot_dimension_numbers<[1], [0], [0], [1], [0, 0, 1, 1], [], []>} : vector<8x32xf32>, vector<32x128xf32>, vector<8x128xf32> -> vector<8x128xf32>
    %371 = arith.addf %369, %370 : vector<8x128xf32>
    %372 = vector.broadcast %5 : vector<1x128xf32> to vector<8x128xf32>
    %373 = arith.addf %371, %372 : vector<8x128xf32>
    %374 = vector.extract_strided_slice %373 {offsets = [0, 0], sizes = [8, 32], strides = [1, 1]} : vector<8x128xf32> to vector<8x32xf32>
    %375 = arith.negf %374 : vector<8x32xf32>
    %376 = math.exp %375 : vector<8x32xf32>
    %cst_92 = arith.constant 1.000000e+00 : f32
    %377 = vector.broadcast %cst_92 : f32 to vector<8x32xf32>
    %378 = arith.addf %377, %376 : vector<8x32xf32>
    %379 = arith.divf %377, %378 : vector<8x32xf32>
    %380 = vector.extract_strided_slice %373 {offsets = [0, 32], sizes = [8, 32], strides = [1, 1]} : vector<8x128xf32> to vector<8x32xf32>
    %381 = arith.negf %380 : vector<8x32xf32>
    %382 = math.exp %381 : vector<8x32xf32>
    %cst_93 = arith.constant 1.000000e+00 : f32
    %383 = vector.broadcast %cst_93 : f32 to vector<8x32xf32>
    %384 = arith.addf %383, %382 : vector<8x32xf32>
    %385 = arith.divf %383, %384 : vector<8x32xf32>
    %386 = vector.extract_strided_slice %373 {offsets = [0, 64], sizes = [8, 32], strides = [1, 1]} : vector<8x128xf32> to vector<8x32xf32>
    %387 = math.tanh %386 : vector<8x32xf32>
    %388 = vector.extract_strided_slice %373 {offsets = [0, 96], sizes = [8, 32], strides = [1, 1]} : vector<8x128xf32> to vector<8x32xf32>
    %389 = arith.negf %388 : vector<8x32xf32>
    %390 = math.exp %389 : vector<8x32xf32>
    %cst_94 = arith.constant 1.000000e+00 : f32
    %391 = vector.broadcast %cst_94 : f32 to vector<8x32xf32>
    %392 = arith.addf %391, %390 : vector<8x32xf32>
    %393 = arith.divf %391, %392 : vector<8x32xf32>
    %394 = arith.mulf %385, %331 : vector<8x32xf32>
    %395 = arith.mulf %379, %387 : vector<8x32xf32>
    %396 = arith.addf %394, %395 : vector<8x32xf32>
    %397 = math.tanh %396 : vector<8x32xf32>
    %398 = arith.mulf %393, %397 : vector<8x32xf32>
    %399 = vector.extract_strided_slice %6 {offsets = [160, 0], sizes = [32, 16], strides = [1, 1]} : vector<384x16xf32> to vector<32x16xf32>
    %cst_95 = arith.constant dense<0.000000e+00> : vector<8x16xf32>
    %400 = tpu.matmul %398, %399, %cst_95 {dimension_numbers = #tpu.dot_dimension_numbers<[1], [0], [0], [1], [0, 0, 1, 1], [], []>} : vector<8x32xf32>, vector<32x16xf32>, vector<8x16xf32> -> vector<8x16xf32>
    %401 = arith.addf %336, %400 : vector<8x16xf32>
    %c0_96 = arith.constant 0 : index
    %c6 = arith.constant 6 : index
    %c0_97 = arith.constant 0 : index
    %402 = vector.load %arg1[%c0_96, %c6, %c0_97] : memref<8x12x8xf32, #tpu.memory_space<vmem>>, vector<8x1x8xf32>
    %403 = vector.shape_cast %402 : vector<8x1x8xf32> to vector<8x8xf32>
    %cst_98 = arith.constant dense<0.000000e+00> : vector<8x128xf32>
    %404 = tpu.matmul %403, %0, %cst_98 {dimension_numbers = #tpu.dot_dimension_numbers<[1], [0], [0], [1], [0, 0, 1, 1], [], []>} : vector<8x8xf32>, vector<8x128xf32>, vector<8x128xf32> -> vector<8x128xf32>
    %cst_99 = arith.constant dense<0.000000e+00> : vector<8x128xf32>
    %405 = tpu.matmul %368, %2, %cst_99 {dimension_numbers = #tpu.dot_dimension_numbers<[1], [0], [0], [1], [0, 0, 1, 1], [], []>} : vector<8x32xf32>, vector<32x128xf32>, vector<8x128xf32> -> vector<8x128xf32>
    %406 = arith.addf %404, %405 : vector<8x128xf32>
    %407 = vector.broadcast %4 : vector<1x128xf32> to vector<8x128xf32>
    %408 = arith.addf %406, %407 : vector<8x128xf32>
    %409 = vector.extract_strided_slice %408 {offsets = [0, 0], sizes = [8, 32], strides = [1, 1]} : vector<8x128xf32> to vector<8x32xf32>
    %410 = arith.negf %409 : vector<8x32xf32>
    %411 = math.exp %410 : vector<8x32xf32>
    %cst_100 = arith.constant 1.000000e+00 : f32
    %412 = vector.broadcast %cst_100 : f32 to vector<8x32xf32>
    %413 = arith.addf %412, %411 : vector<8x32xf32>
    %414 = arith.divf %412, %413 : vector<8x32xf32>
    %415 = vector.extract_strided_slice %408 {offsets = [0, 32], sizes = [8, 32], strides = [1, 1]} : vector<8x128xf32> to vector<8x32xf32>
    %416 = arith.negf %415 : vector<8x32xf32>
    %417 = math.exp %416 : vector<8x32xf32>
    %cst_101 = arith.constant 1.000000e+00 : f32
    %418 = vector.broadcast %cst_101 : f32 to vector<8x32xf32>
    %419 = arith.addf %418, %417 : vector<8x32xf32>
    %420 = arith.divf %418, %419 : vector<8x32xf32>
    %421 = vector.extract_strided_slice %408 {offsets = [0, 64], sizes = [8, 32], strides = [1, 1]} : vector<8x128xf32> to vector<8x32xf32>
    %422 = math.tanh %421 : vector<8x32xf32>
    %423 = vector.extract_strided_slice %408 {offsets = [0, 96], sizes = [8, 32], strides = [1, 1]} : vector<8x128xf32> to vector<8x32xf32>
    %424 = arith.negf %423 : vector<8x32xf32>
    %425 = math.exp %424 : vector<8x32xf32>
    %cst_102 = arith.constant 1.000000e+00 : f32
    %426 = vector.broadcast %cst_102 : f32 to vector<8x32xf32>
    %427 = arith.addf %426, %425 : vector<8x32xf32>
    %428 = arith.divf %426, %427 : vector<8x32xf32>
    %429 = arith.mulf %420, %366 : vector<8x32xf32>
    %430 = arith.mulf %414, %422 : vector<8x32xf32>
    %431 = arith.addf %429, %430 : vector<8x32xf32>
    %432 = math.tanh %431 : vector<8x32xf32>
    %433 = arith.mulf %428, %432 : vector<8x32xf32>
    %cst_103 = arith.constant dense<0.000000e+00> : vector<8x128xf32>
    %434 = tpu.matmul %433, %1, %cst_103 {dimension_numbers = #tpu.dot_dimension_numbers<[1], [0], [0], [1], [0, 0, 1, 1], [], []>} : vector<8x32xf32>, vector<32x128xf32>, vector<8x128xf32> -> vector<8x128xf32>
    %cst_104 = arith.constant dense<0.000000e+00> : vector<8x128xf32>
    %435 = tpu.matmul %398, %3, %cst_104 {dimension_numbers = #tpu.dot_dimension_numbers<[1], [0], [0], [1], [0, 0, 1, 1], [], []>} : vector<8x32xf32>, vector<32x128xf32>, vector<8x128xf32> -> vector<8x128xf32>
    %436 = arith.addf %434, %435 : vector<8x128xf32>
    %437 = vector.broadcast %5 : vector<1x128xf32> to vector<8x128xf32>
    %438 = arith.addf %436, %437 : vector<8x128xf32>
    %439 = vector.extract_strided_slice %438 {offsets = [0, 0], sizes = [8, 32], strides = [1, 1]} : vector<8x128xf32> to vector<8x32xf32>
    %440 = arith.negf %439 : vector<8x32xf32>
    %441 = math.exp %440 : vector<8x32xf32>
    %cst_105 = arith.constant 1.000000e+00 : f32
    %442 = vector.broadcast %cst_105 : f32 to vector<8x32xf32>
    %443 = arith.addf %442, %441 : vector<8x32xf32>
    %444 = arith.divf %442, %443 : vector<8x32xf32>
    %445 = vector.extract_strided_slice %438 {offsets = [0, 32], sizes = [8, 32], strides = [1, 1]} : vector<8x128xf32> to vector<8x32xf32>
    %446 = arith.negf %445 : vector<8x32xf32>
    %447 = math.exp %446 : vector<8x32xf32>
    %cst_106 = arith.constant 1.000000e+00 : f32
    %448 = vector.broadcast %cst_106 : f32 to vector<8x32xf32>
    %449 = arith.addf %448, %447 : vector<8x32xf32>
    %450 = arith.divf %448, %449 : vector<8x32xf32>
    %451 = vector.extract_strided_slice %438 {offsets = [0, 64], sizes = [8, 32], strides = [1, 1]} : vector<8x128xf32> to vector<8x32xf32>
    %452 = math.tanh %451 : vector<8x32xf32>
    %453 = vector.extract_strided_slice %438 {offsets = [0, 96], sizes = [8, 32], strides = [1, 1]} : vector<8x128xf32> to vector<8x32xf32>
    %454 = arith.negf %453 : vector<8x32xf32>
    %455 = math.exp %454 : vector<8x32xf32>
    %cst_107 = arith.constant 1.000000e+00 : f32
    %456 = vector.broadcast %cst_107 : f32 to vector<8x32xf32>
    %457 = arith.addf %456, %455 : vector<8x32xf32>
    %458 = arith.divf %456, %457 : vector<8x32xf32>
    %459 = arith.mulf %450, %396 : vector<8x32xf32>
    %460 = arith.mulf %444, %452 : vector<8x32xf32>
    %461 = arith.addf %459, %460 : vector<8x32xf32>
    %462 = math.tanh %461 : vector<8x32xf32>
    %463 = arith.mulf %458, %462 : vector<8x32xf32>
    %464 = vector.extract_strided_slice %6 {offsets = [192, 0], sizes = [32, 16], strides = [1, 1]} : vector<384x16xf32> to vector<32x16xf32>
    %cst_108 = arith.constant dense<0.000000e+00> : vector<8x16xf32>
    %465 = tpu.matmul %463, %464, %cst_108 {dimension_numbers = #tpu.dot_dimension_numbers<[1], [0], [0], [1], [0, 0, 1, 1], [], []>} : vector<8x32xf32>, vector<32x16xf32>, vector<8x16xf32> -> vector<8x16xf32>
    %466 = arith.addf %401, %465 : vector<8x16xf32>
    %c0_109 = arith.constant 0 : index
    %c7 = arith.constant 7 : index
    %c0_110 = arith.constant 0 : index
    %467 = vector.load %arg1[%c0_109, %c7, %c0_110] : memref<8x12x8xf32, #tpu.memory_space<vmem>>, vector<8x1x8xf32>
    %468 = vector.shape_cast %467 : vector<8x1x8xf32> to vector<8x8xf32>
    %cst_111 = arith.constant dense<0.000000e+00> : vector<8x128xf32>
    %469 = tpu.matmul %468, %0, %cst_111 {dimension_numbers = #tpu.dot_dimension_numbers<[1], [0], [0], [1], [0, 0, 1, 1], [], []>} : vector<8x8xf32>, vector<8x128xf32>, vector<8x128xf32> -> vector<8x128xf32>
    %cst_112 = arith.constant dense<0.000000e+00> : vector<8x128xf32>
    %470 = tpu.matmul %433, %2, %cst_112 {dimension_numbers = #tpu.dot_dimension_numbers<[1], [0], [0], [1], [0, 0, 1, 1], [], []>} : vector<8x32xf32>, vector<32x128xf32>, vector<8x128xf32> -> vector<8x128xf32>
    %471 = arith.addf %469, %470 : vector<8x128xf32>
    %472 = vector.broadcast %4 : vector<1x128xf32> to vector<8x128xf32>
    %473 = arith.addf %471, %472 : vector<8x128xf32>
    %474 = vector.extract_strided_slice %473 {offsets = [0, 0], sizes = [8, 32], strides = [1, 1]} : vector<8x128xf32> to vector<8x32xf32>
    %475 = arith.negf %474 : vector<8x32xf32>
    %476 = math.exp %475 : vector<8x32xf32>
    %cst_113 = arith.constant 1.000000e+00 : f32
    %477 = vector.broadcast %cst_113 : f32 to vector<8x32xf32>
    %478 = arith.addf %477, %476 : vector<8x32xf32>
    %479 = arith.divf %477, %478 : vector<8x32xf32>
    %480 = vector.extract_strided_slice %473 {offsets = [0, 32], sizes = [8, 32], strides = [1, 1]} : vector<8x128xf32> to vector<8x32xf32>
    %481 = arith.negf %480 : vector<8x32xf32>
    %482 = math.exp %481 : vector<8x32xf32>
    %cst_114 = arith.constant 1.000000e+00 : f32
    %483 = vector.broadcast %cst_114 : f32 to vector<8x32xf32>
    %484 = arith.addf %483, %482 : vector<8x32xf32>
    %485 = arith.divf %483, %484 : vector<8x32xf32>
    %486 = vector.extract_strided_slice %473 {offsets = [0, 64], sizes = [8, 32], strides = [1, 1]} : vector<8x128xf32> to vector<8x32xf32>
    %487 = math.tanh %486 : vector<8x32xf32>
    %488 = vector.extract_strided_slice %473 {offsets = [0, 96], sizes = [8, 32], strides = [1, 1]} : vector<8x128xf32> to vector<8x32xf32>
    %489 = arith.negf %488 : vector<8x32xf32>
    %490 = math.exp %489 : vector<8x32xf32>
    %cst_115 = arith.constant 1.000000e+00 : f32
    %491 = vector.broadcast %cst_115 : f32 to vector<8x32xf32>
    %492 = arith.addf %491, %490 : vector<8x32xf32>
    %493 = arith.divf %491, %492 : vector<8x32xf32>
    %494 = arith.mulf %485, %431 : vector<8x32xf32>
    %495 = arith.mulf %479, %487 : vector<8x32xf32>
    %496 = arith.addf %494, %495 : vector<8x32xf32>
    %497 = math.tanh %496 : vector<8x32xf32>
    %498 = arith.mulf %493, %497 : vector<8x32xf32>
    %cst_116 = arith.constant dense<0.000000e+00> : vector<8x128xf32>
    %499 = tpu.matmul %498, %1, %cst_116 {dimension_numbers = #tpu.dot_dimension_numbers<[1], [0], [0], [1], [0, 0, 1, 1], [], []>} : vector<8x32xf32>, vector<32x128xf32>, vector<8x128xf32> -> vector<8x128xf32>
    %cst_117 = arith.constant dense<0.000000e+00> : vector<8x128xf32>
    %500 = tpu.matmul %463, %3, %cst_117 {dimension_numbers = #tpu.dot_dimension_numbers<[1], [0], [0], [1], [0, 0, 1, 1], [], []>} : vector<8x32xf32>, vector<32x128xf32>, vector<8x128xf32> -> vector<8x128xf32>
    %501 = arith.addf %499, %500 : vector<8x128xf32>
    %502 = vector.broadcast %5 : vector<1x128xf32> to vector<8x128xf32>
    %503 = arith.addf %501, %502 : vector<8x128xf32>
    %504 = vector.extract_strided_slice %503 {offsets = [0, 0], sizes = [8, 32], strides = [1, 1]} : vector<8x128xf32> to vector<8x32xf32>
    %505 = arith.negf %504 : vector<8x32xf32>
    %506 = math.exp %505 : vector<8x32xf32>
    %cst_118 = arith.constant 1.000000e+00 : f32
    %507 = vector.broadcast %cst_118 : f32 to vector<8x32xf32>
    %508 = arith.addf %507, %506 : vector<8x32xf32>
    %509 = arith.divf %507, %508 : vector<8x32xf32>
    %510 = vector.extract_strided_slice %503 {offsets = [0, 32], sizes = [8, 32], strides = [1, 1]} : vector<8x128xf32> to vector<8x32xf32>
    %511 = arith.negf %510 : vector<8x32xf32>
    %512 = math.exp %511 : vector<8x32xf32>
    %cst_119 = arith.constant 1.000000e+00 : f32
    %513 = vector.broadcast %cst_119 : f32 to vector<8x32xf32>
    %514 = arith.addf %513, %512 : vector<8x32xf32>
    %515 = arith.divf %513, %514 : vector<8x32xf32>
    %516 = vector.extract_strided_slice %503 {offsets = [0, 64], sizes = [8, 32], strides = [1, 1]} : vector<8x128xf32> to vector<8x32xf32>
    %517 = math.tanh %516 : vector<8x32xf32>
    %518 = vector.extract_strided_slice %503 {offsets = [0, 96], sizes = [8, 32], strides = [1, 1]} : vector<8x128xf32> to vector<8x32xf32>
    %519 = arith.negf %518 : vector<8x32xf32>
    %520 = math.exp %519 : vector<8x32xf32>
    %cst_120 = arith.constant 1.000000e+00 : f32
    %521 = vector.broadcast %cst_120 : f32 to vector<8x32xf32>
    %522 = arith.addf %521, %520 : vector<8x32xf32>
    %523 = arith.divf %521, %522 : vector<8x32xf32>
    %524 = arith.mulf %515, %461 : vector<8x32xf32>
    %525 = arith.mulf %509, %517 : vector<8x32xf32>
    %526 = arith.addf %524, %525 : vector<8x32xf32>
    %527 = math.tanh %526 : vector<8x32xf32>
    %528 = arith.mulf %523, %527 : vector<8x32xf32>
    %529 = vector.extract_strided_slice %6 {offsets = [224, 0], sizes = [32, 16], strides = [1, 1]} : vector<384x16xf32> to vector<32x16xf32>
    %cst_121 = arith.constant dense<0.000000e+00> : vector<8x16xf32>
    %530 = tpu.matmul %528, %529, %cst_121 {dimension_numbers = #tpu.dot_dimension_numbers<[1], [0], [0], [1], [0, 0, 1, 1], [], []>} : vector<8x32xf32>, vector<32x16xf32>, vector<8x16xf32> -> vector<8x16xf32>
    %531 = arith.addf %466, %530 : vector<8x16xf32>
    %c0_122 = arith.constant 0 : index
    %c8 = arith.constant 8 : index
    %c0_123 = arith.constant 0 : index
    %532 = vector.load %arg1[%c0_122, %c8, %c0_123] : memref<8x12x8xf32, #tpu.memory_space<vmem>>, vector<8x1x8xf32>
    %533 = vector.shape_cast %532 : vector<8x1x8xf32> to vector<8x8xf32>
    %cst_124 = arith.constant dense<0.000000e+00> : vector<8x128xf32>
    %534 = tpu.matmul %533, %0, %cst_124 {dimension_numbers = #tpu.dot_dimension_numbers<[1], [0], [0], [1], [0, 0, 1, 1], [], []>} : vector<8x8xf32>, vector<8x128xf32>, vector<8x128xf32> -> vector<8x128xf32>
    %cst_125 = arith.constant dense<0.000000e+00> : vector<8x128xf32>
    %535 = tpu.matmul %498, %2, %cst_125 {dimension_numbers = #tpu.dot_dimension_numbers<[1], [0], [0], [1], [0, 0, 1, 1], [], []>} : vector<8x32xf32>, vector<32x128xf32>, vector<8x128xf32> -> vector<8x128xf32>
    %536 = arith.addf %534, %535 : vector<8x128xf32>
    %537 = vector.broadcast %4 : vector<1x128xf32> to vector<8x128xf32>
    %538 = arith.addf %536, %537 : vector<8x128xf32>
    %539 = vector.extract_strided_slice %538 {offsets = [0, 0], sizes = [8, 32], strides = [1, 1]} : vector<8x128xf32> to vector<8x32xf32>
    %540 = arith.negf %539 : vector<8x32xf32>
    %541 = math.exp %540 : vector<8x32xf32>
    %cst_126 = arith.constant 1.000000e+00 : f32
    %542 = vector.broadcast %cst_126 : f32 to vector<8x32xf32>
    %543 = arith.addf %542, %541 : vector<8x32xf32>
    %544 = arith.divf %542, %543 : vector<8x32xf32>
    %545 = vector.extract_strided_slice %538 {offsets = [0, 32], sizes = [8, 32], strides = [1, 1]} : vector<8x128xf32> to vector<8x32xf32>
    %546 = arith.negf %545 : vector<8x32xf32>
    %547 = math.exp %546 : vector<8x32xf32>
    %cst_127 = arith.constant 1.000000e+00 : f32
    %548 = vector.broadcast %cst_127 : f32 to vector<8x32xf32>
    %549 = arith.addf %548, %547 : vector<8x32xf32>
    %550 = arith.divf %548, %549 : vector<8x32xf32>
    %551 = vector.extract_strided_slice %538 {offsets = [0, 64], sizes = [8, 32], strides = [1, 1]} : vector<8x128xf32> to vector<8x32xf32>
    %552 = math.tanh %551 : vector<8x32xf32>
    %553 = vector.extract_strided_slice %538 {offsets = [0, 96], sizes = [8, 32], strides = [1, 1]} : vector<8x128xf32> to vector<8x32xf32>
    %554 = arith.negf %553 : vector<8x32xf32>
    %555 = math.exp %554 : vector<8x32xf32>
    %cst_128 = arith.constant 1.000000e+00 : f32
    %556 = vector.broadcast %cst_128 : f32 to vector<8x32xf32>
    %557 = arith.addf %556, %555 : vector<8x32xf32>
    %558 = arith.divf %556, %557 : vector<8x32xf32>
    %559 = arith.mulf %550, %496 : vector<8x32xf32>
    %560 = arith.mulf %544, %552 : vector<8x32xf32>
    %561 = arith.addf %559, %560 : vector<8x32xf32>
    %562 = math.tanh %561 : vector<8x32xf32>
    %563 = arith.mulf %558, %562 : vector<8x32xf32>
    %cst_129 = arith.constant dense<0.000000e+00> : vector<8x128xf32>
    %564 = tpu.matmul %563, %1, %cst_129 {dimension_numbers = #tpu.dot_dimension_numbers<[1], [0], [0], [1], [0, 0, 1, 1], [], []>} : vector<8x32xf32>, vector<32x128xf32>, vector<8x128xf32> -> vector<8x128xf32>
    %cst_130 = arith.constant dense<0.000000e+00> : vector<8x128xf32>
    %565 = tpu.matmul %528, %3, %cst_130 {dimension_numbers = #tpu.dot_dimension_numbers<[1], [0], [0], [1], [0, 0, 1, 1], [], []>} : vector<8x32xf32>, vector<32x128xf32>, vector<8x128xf32> -> vector<8x128xf32>
    %566 = arith.addf %564, %565 : vector<8x128xf32>
    %567 = vector.broadcast %5 : vector<1x128xf32> to vector<8x128xf32>
    %568 = arith.addf %566, %567 : vector<8x128xf32>
    %569 = vector.extract_strided_slice %568 {offsets = [0, 0], sizes = [8, 32], strides = [1, 1]} : vector<8x128xf32> to vector<8x32xf32>
    %570 = arith.negf %569 : vector<8x32xf32>
    %571 = math.exp %570 : vector<8x32xf32>
    %cst_131 = arith.constant 1.000000e+00 : f32
    %572 = vector.broadcast %cst_131 : f32 to vector<8x32xf32>
    %573 = arith.addf %572, %571 : vector<8x32xf32>
    %574 = arith.divf %572, %573 : vector<8x32xf32>
    %575 = vector.extract_strided_slice %568 {offsets = [0, 32], sizes = [8, 32], strides = [1, 1]} : vector<8x128xf32> to vector<8x32xf32>
    %576 = arith.negf %575 : vector<8x32xf32>
    %577 = math.exp %576 : vector<8x32xf32>
    %cst_132 = arith.constant 1.000000e+00 : f32
    %578 = vector.broadcast %cst_132 : f32 to vector<8x32xf32>
    %579 = arith.addf %578, %577 : vector<8x32xf32>
    %580 = arith.divf %578, %579 : vector<8x32xf32>
    %581 = vector.extract_strided_slice %568 {offsets = [0, 64], sizes = [8, 32], strides = [1, 1]} : vector<8x128xf32> to vector<8x32xf32>
    %582 = math.tanh %581 : vector<8x32xf32>
    %583 = vector.extract_strided_slice %568 {offsets = [0, 96], sizes = [8, 32], strides = [1, 1]} : vector<8x128xf32> to vector<8x32xf32>
    %584 = arith.negf %583 : vector<8x32xf32>
    %585 = math.exp %584 : vector<8x32xf32>
    %cst_133 = arith.constant 1.000000e+00 : f32
    %586 = vector.broadcast %cst_133 : f32 to vector<8x32xf32>
    %587 = arith.addf %586, %585 : vector<8x32xf32>
    %588 = arith.divf %586, %587 : vector<8x32xf32>
    %589 = arith.mulf %580, %526 : vector<8x32xf32>
    %590 = arith.mulf %574, %582 : vector<8x32xf32>
    %591 = arith.addf %589, %590 : vector<8x32xf32>
    %592 = math.tanh %591 : vector<8x32xf32>
    %593 = arith.mulf %588, %592 : vector<8x32xf32>
    %594 = vector.extract_strided_slice %6 {offsets = [256, 0], sizes = [32, 16], strides = [1, 1]} : vector<384x16xf32> to vector<32x16xf32>
    %cst_134 = arith.constant dense<0.000000e+00> : vector<8x16xf32>
    %595 = tpu.matmul %593, %594, %cst_134 {dimension_numbers = #tpu.dot_dimension_numbers<[1], [0], [0], [1], [0, 0, 1, 1], [], []>} : vector<8x32xf32>, vector<32x16xf32>, vector<8x16xf32> -> vector<8x16xf32>
    %596 = arith.addf %531, %595 : vector<8x16xf32>
    %c0_135 = arith.constant 0 : index
    %c9 = arith.constant 9 : index
    %c0_136 = arith.constant 0 : index
    %597 = vector.load %arg1[%c0_135, %c9, %c0_136] : memref<8x12x8xf32, #tpu.memory_space<vmem>>, vector<8x1x8xf32>
    %598 = vector.shape_cast %597 : vector<8x1x8xf32> to vector<8x8xf32>
    %cst_137 = arith.constant dense<0.000000e+00> : vector<8x128xf32>
    %599 = tpu.matmul %598, %0, %cst_137 {dimension_numbers = #tpu.dot_dimension_numbers<[1], [0], [0], [1], [0, 0, 1, 1], [], []>} : vector<8x8xf32>, vector<8x128xf32>, vector<8x128xf32> -> vector<8x128xf32>
    %cst_138 = arith.constant dense<0.000000e+00> : vector<8x128xf32>
    %600 = tpu.matmul %563, %2, %cst_138 {dimension_numbers = #tpu.dot_dimension_numbers<[1], [0], [0], [1], [0, 0, 1, 1], [], []>} : vector<8x32xf32>, vector<32x128xf32>, vector<8x128xf32> -> vector<8x128xf32>
    %601 = arith.addf %599, %600 : vector<8x128xf32>
    %602 = vector.broadcast %4 : vector<1x128xf32> to vector<8x128xf32>
    %603 = arith.addf %601, %602 : vector<8x128xf32>
    %604 = vector.extract_strided_slice %603 {offsets = [0, 0], sizes = [8, 32], strides = [1, 1]} : vector<8x128xf32> to vector<8x32xf32>
    %605 = arith.negf %604 : vector<8x32xf32>
    %606 = math.exp %605 : vector<8x32xf32>
    %cst_139 = arith.constant 1.000000e+00 : f32
    %607 = vector.broadcast %cst_139 : f32 to vector<8x32xf32>
    %608 = arith.addf %607, %606 : vector<8x32xf32>
    %609 = arith.divf %607, %608 : vector<8x32xf32>
    %610 = vector.extract_strided_slice %603 {offsets = [0, 32], sizes = [8, 32], strides = [1, 1]} : vector<8x128xf32> to vector<8x32xf32>
    %611 = arith.negf %610 : vector<8x32xf32>
    %612 = math.exp %611 : vector<8x32xf32>
    %cst_140 = arith.constant 1.000000e+00 : f32
    %613 = vector.broadcast %cst_140 : f32 to vector<8x32xf32>
    %614 = arith.addf %613, %612 : vector<8x32xf32>
    %615 = arith.divf %613, %614 : vector<8x32xf32>
    %616 = vector.extract_strided_slice %603 {offsets = [0, 64], sizes = [8, 32], strides = [1, 1]} : vector<8x128xf32> to vector<8x32xf32>
    %617 = math.tanh %616 : vector<8x32xf32>
    %618 = vector.extract_strided_slice %603 {offsets = [0, 96], sizes = [8, 32], strides = [1, 1]} : vector<8x128xf32> to vector<8x32xf32>
    %619 = arith.negf %618 : vector<8x32xf32>
    %620 = math.exp %619 : vector<8x32xf32>
    %cst_141 = arith.constant 1.000000e+00 : f32
    %621 = vector.broadcast %cst_141 : f32 to vector<8x32xf32>
    %622 = arith.addf %621, %620 : vector<8x32xf32>
    %623 = arith.divf %621, %622 : vector<8x32xf32>
    %624 = arith.mulf %615, %561 : vector<8x32xf32>
    %625 = arith.mulf %609, %617 : vector<8x32xf32>
    %626 = arith.addf %624, %625 : vector<8x32xf32>
    %627 = math.tanh %626 : vector<8x32xf32>
    %628 = arith.mulf %623, %627 : vector<8x32xf32>
    %cst_142 = arith.constant dense<0.000000e+00> : vector<8x128xf32>
    %629 = tpu.matmul %628, %1, %cst_142 {dimension_numbers = #tpu.dot_dimension_numbers<[1], [0], [0], [1], [0, 0, 1, 1], [], []>} : vector<8x32xf32>, vector<32x128xf32>, vector<8x128xf32> -> vector<8x128xf32>
    %cst_143 = arith.constant dense<0.000000e+00> : vector<8x128xf32>
    %630 = tpu.matmul %593, %3, %cst_143 {dimension_numbers = #tpu.dot_dimension_numbers<[1], [0], [0], [1], [0, 0, 1, 1], [], []>} : vector<8x32xf32>, vector<32x128xf32>, vector<8x128xf32> -> vector<8x128xf32>
    %631 = arith.addf %629, %630 : vector<8x128xf32>
    %632 = vector.broadcast %5 : vector<1x128xf32> to vector<8x128xf32>
    %633 = arith.addf %631, %632 : vector<8x128xf32>
    %634 = vector.extract_strided_slice %633 {offsets = [0, 0], sizes = [8, 32], strides = [1, 1]} : vector<8x128xf32> to vector<8x32xf32>
    %635 = arith.negf %634 : vector<8x32xf32>
    %636 = math.exp %635 : vector<8x32xf32>
    %cst_144 = arith.constant 1.000000e+00 : f32
    %637 = vector.broadcast %cst_144 : f32 to vector<8x32xf32>
    %638 = arith.addf %637, %636 : vector<8x32xf32>
    %639 = arith.divf %637, %638 : vector<8x32xf32>
    %640 = vector.extract_strided_slice %633 {offsets = [0, 32], sizes = [8, 32], strides = [1, 1]} : vector<8x128xf32> to vector<8x32xf32>
    %641 = arith.negf %640 : vector<8x32xf32>
    %642 = math.exp %641 : vector<8x32xf32>
    %cst_145 = arith.constant 1.000000e+00 : f32
    %643 = vector.broadcast %cst_145 : f32 to vector<8x32xf32>
    %644 = arith.addf %643, %642 : vector<8x32xf32>
    %645 = arith.divf %643, %644 : vector<8x32xf32>
    %646 = vector.extract_strided_slice %633 {offsets = [0, 64], sizes = [8, 32], strides = [1, 1]} : vector<8x128xf32> to vector<8x32xf32>
    %647 = math.tanh %646 : vector<8x32xf32>
    %648 = vector.extract_strided_slice %633 {offsets = [0, 96], sizes = [8, 32], strides = [1, 1]} : vector<8x128xf32> to vector<8x32xf32>
    %649 = arith.negf %648 : vector<8x32xf32>
    %650 = math.exp %649 : vector<8x32xf32>
    %cst_146 = arith.constant 1.000000e+00 : f32
    %651 = vector.broadcast %cst_146 : f32 to vector<8x32xf32>
    %652 = arith.addf %651, %650 : vector<8x32xf32>
    %653 = arith.divf %651, %652 : vector<8x32xf32>
    %654 = arith.mulf %645, %591 : vector<8x32xf32>
    %655 = arith.mulf %639, %647 : vector<8x32xf32>
    %656 = arith.addf %654, %655 : vector<8x32xf32>
    %657 = math.tanh %656 : vector<8x32xf32>
    %658 = arith.mulf %653, %657 : vector<8x32xf32>
    %659 = vector.extract_strided_slice %6 {offsets = [288, 0], sizes = [32, 16], strides = [1, 1]} : vector<384x16xf32> to vector<32x16xf32>
    %cst_147 = arith.constant dense<0.000000e+00> : vector<8x16xf32>
    %660 = tpu.matmul %658, %659, %cst_147 {dimension_numbers = #tpu.dot_dimension_numbers<[1], [0], [0], [1], [0, 0, 1, 1], [], []>} : vector<8x32xf32>, vector<32x16xf32>, vector<8x16xf32> -> vector<8x16xf32>
    %661 = arith.addf %596, %660 : vector<8x16xf32>
    %c0_148 = arith.constant 0 : index
    %c10 = arith.constant 10 : index
    %c0_149 = arith.constant 0 : index
    %662 = vector.load %arg1[%c0_148, %c10, %c0_149] : memref<8x12x8xf32, #tpu.memory_space<vmem>>, vector<8x1x8xf32>
    %663 = vector.shape_cast %662 : vector<8x1x8xf32> to vector<8x8xf32>
    %cst_150 = arith.constant dense<0.000000e+00> : vector<8x128xf32>
    %664 = tpu.matmul %663, %0, %cst_150 {dimension_numbers = #tpu.dot_dimension_numbers<[1], [0], [0], [1], [0, 0, 1, 1], [], []>} : vector<8x8xf32>, vector<8x128xf32>, vector<8x128xf32> -> vector<8x128xf32>
    %cst_151 = arith.constant dense<0.000000e+00> : vector<8x128xf32>
    %665 = tpu.matmul %628, %2, %cst_151 {dimension_numbers = #tpu.dot_dimension_numbers<[1], [0], [0], [1], [0, 0, 1, 1], [], []>} : vector<8x32xf32>, vector<32x128xf32>, vector<8x128xf32> -> vector<8x128xf32>
    %666 = arith.addf %664, %665 : vector<8x128xf32>
    %667 = vector.broadcast %4 : vector<1x128xf32> to vector<8x128xf32>
    %668 = arith.addf %666, %667 : vector<8x128xf32>
    %669 = vector.extract_strided_slice %668 {offsets = [0, 0], sizes = [8, 32], strides = [1, 1]} : vector<8x128xf32> to vector<8x32xf32>
    %670 = arith.negf %669 : vector<8x32xf32>
    %671 = math.exp %670 : vector<8x32xf32>
    %cst_152 = arith.constant 1.000000e+00 : f32
    %672 = vector.broadcast %cst_152 : f32 to vector<8x32xf32>
    %673 = arith.addf %672, %671 : vector<8x32xf32>
    %674 = arith.divf %672, %673 : vector<8x32xf32>
    %675 = vector.extract_strided_slice %668 {offsets = [0, 32], sizes = [8, 32], strides = [1, 1]} : vector<8x128xf32> to vector<8x32xf32>
    %676 = arith.negf %675 : vector<8x32xf32>
    %677 = math.exp %676 : vector<8x32xf32>
    %cst_153 = arith.constant 1.000000e+00 : f32
    %678 = vector.broadcast %cst_153 : f32 to vector<8x32xf32>
    %679 = arith.addf %678, %677 : vector<8x32xf32>
    %680 = arith.divf %678, %679 : vector<8x32xf32>
    %681 = vector.extract_strided_slice %668 {offsets = [0, 64], sizes = [8, 32], strides = [1, 1]} : vector<8x128xf32> to vector<8x32xf32>
    %682 = math.tanh %681 : vector<8x32xf32>
    %683 = vector.extract_strided_slice %668 {offsets = [0, 96], sizes = [8, 32], strides = [1, 1]} : vector<8x128xf32> to vector<8x32xf32>
    %684 = arith.negf %683 : vector<8x32xf32>
    %685 = math.exp %684 : vector<8x32xf32>
    %cst_154 = arith.constant 1.000000e+00 : f32
    %686 = vector.broadcast %cst_154 : f32 to vector<8x32xf32>
    %687 = arith.addf %686, %685 : vector<8x32xf32>
    %688 = arith.divf %686, %687 : vector<8x32xf32>
    %689 = arith.mulf %680, %626 : vector<8x32xf32>
    %690 = arith.mulf %674, %682 : vector<8x32xf32>
    %691 = arith.addf %689, %690 : vector<8x32xf32>
    %692 = math.tanh %691 : vector<8x32xf32>
    %693 = arith.mulf %688, %692 : vector<8x32xf32>
    %cst_155 = arith.constant dense<0.000000e+00> : vector<8x128xf32>
    %694 = tpu.matmul %693, %1, %cst_155 {dimension_numbers = #tpu.dot_dimension_numbers<[1], [0], [0], [1], [0, 0, 1, 1], [], []>} : vector<8x32xf32>, vector<32x128xf32>, vector<8x128xf32> -> vector<8x128xf32>
    %cst_156 = arith.constant dense<0.000000e+00> : vector<8x128xf32>
    %695 = tpu.matmul %658, %3, %cst_156 {dimension_numbers = #tpu.dot_dimension_numbers<[1], [0], [0], [1], [0, 0, 1, 1], [], []>} : vector<8x32xf32>, vector<32x128xf32>, vector<8x128xf32> -> vector<8x128xf32>
    %696 = arith.addf %694, %695 : vector<8x128xf32>
    %697 = vector.broadcast %5 : vector<1x128xf32> to vector<8x128xf32>
    %698 = arith.addf %696, %697 : vector<8x128xf32>
    %699 = vector.extract_strided_slice %698 {offsets = [0, 0], sizes = [8, 32], strides = [1, 1]} : vector<8x128xf32> to vector<8x32xf32>
    %700 = arith.negf %699 : vector<8x32xf32>
    %701 = math.exp %700 : vector<8x32xf32>
    %cst_157 = arith.constant 1.000000e+00 : f32
    %702 = vector.broadcast %cst_157 : f32 to vector<8x32xf32>
    %703 = arith.addf %702, %701 : vector<8x32xf32>
    %704 = arith.divf %702, %703 : vector<8x32xf32>
    %705 = vector.extract_strided_slice %698 {offsets = [0, 32], sizes = [8, 32], strides = [1, 1]} : vector<8x128xf32> to vector<8x32xf32>
    %706 = arith.negf %705 : vector<8x32xf32>
    %707 = math.exp %706 : vector<8x32xf32>
    %cst_158 = arith.constant 1.000000e+00 : f32
    %708 = vector.broadcast %cst_158 : f32 to vector<8x32xf32>
    %709 = arith.addf %708, %707 : vector<8x32xf32>
    %710 = arith.divf %708, %709 : vector<8x32xf32>
    %711 = vector.extract_strided_slice %698 {offsets = [0, 64], sizes = [8, 32], strides = [1, 1]} : vector<8x128xf32> to vector<8x32xf32>
    %712 = math.tanh %711 : vector<8x32xf32>
    %713 = vector.extract_strided_slice %698 {offsets = [0, 96], sizes = [8, 32], strides = [1, 1]} : vector<8x128xf32> to vector<8x32xf32>
    %714 = arith.negf %713 : vector<8x32xf32>
    %715 = math.exp %714 : vector<8x32xf32>
    %cst_159 = arith.constant 1.000000e+00 : f32
    %716 = vector.broadcast %cst_159 : f32 to vector<8x32xf32>
    %717 = arith.addf %716, %715 : vector<8x32xf32>
    %718 = arith.divf %716, %717 : vector<8x32xf32>
    %719 = arith.mulf %710, %656 : vector<8x32xf32>
    %720 = arith.mulf %704, %712 : vector<8x32xf32>
    %721 = arith.addf %719, %720 : vector<8x32xf32>
    %722 = math.tanh %721 : vector<8x32xf32>
    %723 = arith.mulf %718, %722 : vector<8x32xf32>
    %724 = vector.extract_strided_slice %6 {offsets = [320, 0], sizes = [32, 16], strides = [1, 1]} : vector<384x16xf32> to vector<32x16xf32>
    %cst_160 = arith.constant dense<0.000000e+00> : vector<8x16xf32>
    %725 = tpu.matmul %723, %724, %cst_160 {dimension_numbers = #tpu.dot_dimension_numbers<[1], [0], [0], [1], [0, 0, 1, 1], [], []>} : vector<8x32xf32>, vector<32x16xf32>, vector<8x16xf32> -> vector<8x16xf32>
    %726 = arith.addf %661, %725 : vector<8x16xf32>
    %c0_161 = arith.constant 0 : index
    %c11 = arith.constant 11 : index
    %c0_162 = arith.constant 0 : index
    %727 = vector.load %arg1[%c0_161, %c11, %c0_162] : memref<8x12x8xf32, #tpu.memory_space<vmem>>, vector<8x1x8xf32>
    %728 = vector.shape_cast %727 : vector<8x1x8xf32> to vector<8x8xf32>
    %cst_163 = arith.constant dense<0.000000e+00> : vector<8x128xf32>
    %729 = tpu.matmul %728, %0, %cst_163 {dimension_numbers = #tpu.dot_dimension_numbers<[1], [0], [0], [1], [0, 0, 1, 1], [], []>} : vector<8x8xf32>, vector<8x128xf32>, vector<8x128xf32> -> vector<8x128xf32>
    %cst_164 = arith.constant dense<0.000000e+00> : vector<8x128xf32>
    %730 = tpu.matmul %693, %2, %cst_164 {dimension_numbers = #tpu.dot_dimension_numbers<[1], [0], [0], [1], [0, 0, 1, 1], [], []>} : vector<8x32xf32>, vector<32x128xf32>, vector<8x128xf32> -> vector<8x128xf32>
    %731 = arith.addf %729, %730 : vector<8x128xf32>
    %732 = vector.broadcast %4 : vector<1x128xf32> to vector<8x128xf32>
    %733 = arith.addf %731, %732 : vector<8x128xf32>
    %734 = vector.extract_strided_slice %733 {offsets = [0, 0], sizes = [8, 32], strides = [1, 1]} : vector<8x128xf32> to vector<8x32xf32>
    %735 = arith.negf %734 : vector<8x32xf32>
    %736 = math.exp %735 : vector<8x32xf32>
    %cst_165 = arith.constant 1.000000e+00 : f32
    %737 = vector.broadcast %cst_165 : f32 to vector<8x32xf32>
    %738 = arith.addf %737, %736 : vector<8x32xf32>
    %739 = arith.divf %737, %738 : vector<8x32xf32>
    %740 = vector.extract_strided_slice %733 {offsets = [0, 32], sizes = [8, 32], strides = [1, 1]} : vector<8x128xf32> to vector<8x32xf32>
    %741 = arith.negf %740 : vector<8x32xf32>
    %742 = math.exp %741 : vector<8x32xf32>
    %cst_166 = arith.constant 1.000000e+00 : f32
    %743 = vector.broadcast %cst_166 : f32 to vector<8x32xf32>
    %744 = arith.addf %743, %742 : vector<8x32xf32>
    %745 = arith.divf %743, %744 : vector<8x32xf32>
    %746 = vector.extract_strided_slice %733 {offsets = [0, 64], sizes = [8, 32], strides = [1, 1]} : vector<8x128xf32> to vector<8x32xf32>
    %747 = math.tanh %746 : vector<8x32xf32>
    %748 = vector.extract_strided_slice %733 {offsets = [0, 96], sizes = [8, 32], strides = [1, 1]} : vector<8x128xf32> to vector<8x32xf32>
    %749 = arith.negf %748 : vector<8x32xf32>
    %750 = math.exp %749 : vector<8x32xf32>
    %cst_167 = arith.constant 1.000000e+00 : f32
    %751 = vector.broadcast %cst_167 : f32 to vector<8x32xf32>
    %752 = arith.addf %751, %750 : vector<8x32xf32>
    %753 = arith.divf %751, %752 : vector<8x32xf32>
    %754 = arith.mulf %745, %691 : vector<8x32xf32>
    %755 = arith.mulf %739, %747 : vector<8x32xf32>
    %756 = arith.addf %754, %755 : vector<8x32xf32>
    %757 = math.tanh %756 : vector<8x32xf32>
    %758 = arith.mulf %753, %757 : vector<8x32xf32>
    %cst_168 = arith.constant dense<0.000000e+00> : vector<8x128xf32>
    %759 = tpu.matmul %758, %1, %cst_168 {dimension_numbers = #tpu.dot_dimension_numbers<[1], [0], [0], [1], [0, 0, 1, 1], [], []>} : vector<8x32xf32>, vector<32x128xf32>, vector<8x128xf32> -> vector<8x128xf32>
    %cst_169 = arith.constant dense<0.000000e+00> : vector<8x128xf32>
    %760 = tpu.matmul %723, %3, %cst_169 {dimension_numbers = #tpu.dot_dimension_numbers<[1], [0], [0], [1], [0, 0, 1, 1], [], []>} : vector<8x32xf32>, vector<32x128xf32>, vector<8x128xf32> -> vector<8x128xf32>
    %761 = arith.addf %759, %760 : vector<8x128xf32>
    %762 = vector.broadcast %5 : vector<1x128xf32> to vector<8x128xf32>
    %763 = arith.addf %761, %762 : vector<8x128xf32>
    %764 = vector.extract_strided_slice %763 {offsets = [0, 0], sizes = [8, 32], strides = [1, 1]} : vector<8x128xf32> to vector<8x32xf32>
    %765 = arith.negf %764 : vector<8x32xf32>
    %766 = math.exp %765 : vector<8x32xf32>
    %cst_170 = arith.constant 1.000000e+00 : f32
    %767 = vector.broadcast %cst_170 : f32 to vector<8x32xf32>
    %768 = arith.addf %767, %766 : vector<8x32xf32>
    %769 = arith.divf %767, %768 : vector<8x32xf32>
    %770 = vector.extract_strided_slice %763 {offsets = [0, 32], sizes = [8, 32], strides = [1, 1]} : vector<8x128xf32> to vector<8x32xf32>
    %771 = arith.negf %770 : vector<8x32xf32>
    %772 = math.exp %771 : vector<8x32xf32>
    %cst_171 = arith.constant 1.000000e+00 : f32
    %773 = vector.broadcast %cst_171 : f32 to vector<8x32xf32>
    %774 = arith.addf %773, %772 : vector<8x32xf32>
    %775 = arith.divf %773, %774 : vector<8x32xf32>
    %776 = vector.extract_strided_slice %763 {offsets = [0, 64], sizes = [8, 32], strides = [1, 1]} : vector<8x128xf32> to vector<8x32xf32>
    %777 = math.tanh %776 : vector<8x32xf32>
    %778 = vector.extract_strided_slice %763 {offsets = [0, 96], sizes = [8, 32], strides = [1, 1]} : vector<8x128xf32> to vector<8x32xf32>
    %779 = arith.negf %778 : vector<8x32xf32>
    %780 = math.exp %779 : vector<8x32xf32>
    %cst_172 = arith.constant 1.000000e+00 : f32
    %781 = vector.broadcast %cst_172 : f32 to vector<8x32xf32>
    %782 = arith.addf %781, %780 : vector<8x32xf32>
    %783 = arith.divf %781, %782 : vector<8x32xf32>
    %784 = arith.mulf %775, %721 : vector<8x32xf32>
    %785 = arith.mulf %769, %777 : vector<8x32xf32>
    %786 = arith.addf %784, %785 : vector<8x32xf32>
    %787 = math.tanh %786 : vector<8x32xf32>
    %788 = arith.mulf %783, %787 : vector<8x32xf32>
    %789 = vector.extract_strided_slice %6 {offsets = [352, 0], sizes = [32, 16], strides = [1, 1]} : vector<384x16xf32> to vector<32x16xf32>
    %cst_173 = arith.constant dense<0.000000e+00> : vector<8x16xf32>
    %790 = tpu.matmul %788, %789, %cst_173 {dimension_numbers = #tpu.dot_dimension_numbers<[1], [0], [0], [1], [0, 0, 1, 1], [], []>} : vector<8x32xf32>, vector<32x16xf32>, vector<8x16xf32> -> vector<8x16xf32>
    %791 = arith.addf %726, %790 : vector<8x16xf32>
    %c0_174 = arith.constant 0 : index
    %c0_175 = arith.constant 0 : index
    %792 = vector.load %arg9[%c0_174, %c0_175] : memref<1x16xf32, #tpu.memory_space<vmem>>, vector<1x16xf32>
    %793 = vector.broadcast %792 : vector<1x16xf32> to vector<8x16xf32>
    %794 = arith.addf %791, %793 : vector<8x16xf32>
    %c0_176 = arith.constant 0 : index
    %c0_177 = arith.constant 0 : index
    %795 = vector.load %arg10[%c0_176, %c0_177] : memref<8x16xf32, #tpu.memory_space<vmem>>, vector<8x16xf32>
    tpu.vector_store %arg10[%c0_176, %c0_177], %794 {strides = array<i32>} : memref<8x16xf32, #tpu.memory_space<vmem>>, vector<8x16xf32>,
    return
  }
  func.func @transform_0(%arg0: i32) -> (i32, i32, i32) {
    %c0_i32 = arith.constant 0 : i32
    %c0_i32_0 = arith.constant 0 : i32
    %c0_i32_1 = arith.constant 0 : i32
    return %arg0, %c0_i32, %c0_i32_0 : i32, i32, i32
  }
  func.func @transform_1(%arg0: i32) -> (i32, i32) {
    %c0_i32 = arith.constant 0 : i32
    %c0_i32_0 = arith.constant 0 : i32
    %c0_i32_1 = arith.constant 0 : i32
    return %c0_i32, %c0_i32_0 : i32, i32
  }
  func.func @transform_2(%arg0: i32) -> (i32, i32) {
    %c0_i32 = arith.constant 0 : i32
    %c0_i32_0 = arith.constant 0 : i32
    %c0_i32_1 = arith.constant 0 : i32
    return %c0_i32, %c0_i32_0 : i32, i32
  }
  func.func @transform_3(%arg0: i32) -> (i32, i32) {
    %c0_i32 = arith.constant 0 : i32
    %c0_i32_0 = arith.constant 0 : i32
    %c0_i32_1 = arith.constant 0 : i32
    return %c0_i32, %c0_i32_0 : i32, i32
  }
  func.func @transform_4(%arg0: i32) -> (i32, i32) {
    %c0_i32 = arith.constant 0 : i32
    %c0_i32_0 = arith.constant 0 : i32
    %c0_i32_1 = arith.constant 0 : i32
    return %c0_i32, %c0_i32_0 : i32, i32
  }
  func.func @transform_5(%arg0: i32) -> (i32, i32) {
    %c0_i32 = arith.constant 0 : i32
    %c0_i32_0 = arith.constant 0 : i32
    %c0_i32_1 = arith.constant 0 : i32
    return %c0_i32, %c0_i32_0 : i32, i32
  }
  func.func @transform_6(%arg0: i32) -> (i32, i32) {
    %c0_i32 = arith.constant 0 : i32
    %c0_i32_0 = arith.constant 0 : i32
    %c0_i32_1 = arith.constant 0 : i32
    return %c0_i32, %c0_i32_0 : i32, i32
  }
  func.func @transform_7(%arg0: i32) -> (i32, i32) {
    %c0_i32 = arith.constant 0 : i32
    %c0_i32_0 = arith.constant 0 : i32
    %c0_i32_1 = arith.constant 0 : i32
    return %c0_i32, %c0_i32_0 : i32, i32
  }
  func.func @transform_8(%arg0: i32) -> (i32, i32) {
    %c0_i32 = arith.constant 0 : i32
    %c0_i32_0 = arith.constant 0 : i32
    %c0_i32_1 = arith.constant 0 : i32
    return %c0_i32, %c0_i32_0 : i32, i32
  }
  func.func @transform_9(%arg0: i32) -> (i32, i32) {
    %c0_i32 = arith.constant 0 : i32
    %c0_i32_0 = arith.constant 0 : i32
    return %arg0, %c0_i32 : i32, i32
  }
}

</mosaic_0001>

<llo_original>
// kernel: tpu_custom_call.1
$region0: #{tpu_custom_call.1}
  #allocation0 [shape = 'u32[]', space=smem, size = 0x4, offset = 0x4, fixed_abs, tag = 'smem constant byte address 0x4 - core index']
  #allocation1 [shape = 'u32[72,128]{1,0:T(1,128)}', space=vmem, size = 0x9000, scoped, tag = 'internal scratch']
  %s0 = inlined_call_operand.vmem [shape: f32[8,12,8], index: 0, kind: input, shape index: {}]
  %s1 = inlined_call_operand.vmem [shape: f32[8,128], index: 1, kind: input, shape index: {}]
  %s2 = inlined_call_operand.vmem [shape: f32[32,128], index: 2, kind: input, shape index: {}]
  %s3 = inlined_call_operand.vmem [shape: f32[1,128], index: 3, kind: input, shape index: {}]
  %s4 = inlined_call_operand.vmem [shape: f32[32,128], index: 4, kind: input, shape index: {}]
  %s5 = inlined_call_operand.vmem [shape: f32[32,128], index: 5, kind: input, shape index: {}]
  %s6 = inlined_call_operand.vmem [shape: f32[1,128], index: 6, kind: input, shape index: {}]
  %s7 = inlined_call_operand.vmem [shape: f32[384,16], index: 7, kind: input, shape index: {}]
  %s8 = inlined_call_operand.vmem [shape: f32[1,16], index: 8, kind: input, shape index: {}]
  %s9 = inlined_call_operand.hbm [shape: f32[8,16], index: 9, kind: output, shape index: {}]
  %s10 = sld [smem:[#allocation0]]
  $region46: #{tpu_custom_call.1} parent=0
    _
  %s12 = ssub.s32 1, %s10
  %s13 = scalar_select 0, %s12, %s10
  $region1: #{tpu_custom_call.1} parent=0
    #allocation2 [shape = 'u8[4096]{0}', space=vmem, size = 0x1000, scoped, tag = 'output window, operand 0, single buffered']
    #allocation3 [shape = 's32[1]{0}', space=sflag, size = 0x4, scoped, tag = 'scoped memory for tpu_custom_call.1']
    %14 = vsyncpa [#allocation3], 0
    // Predicated region
    $region2: #{tpu_custom_call.1} parent=1 // pred_check
      _
    $region3: #{tpu_custom_call.1} parent=1 // pred_check_branch
      %16 = sbr.rel (0) target = $region5
    $region4: #{tpu_custom_call.1} parent=1 // pred_region
      _
    $region5: #{tpu_custom_call.1} parent=1 // pred_fallthru
      _
    // Predicated region
    $region6: #{tpu_custom_call.1} parent=1 // pred_check
      _
    $region7: #{tpu_custom_call.1} parent=1 // pred_check_branch
      %18 = sbr.rel (0) target = $region9
    $region8: #{tpu_custom_call.1} parent=1 // pred_region
      _
    $region9: #{tpu_custom_call.1} parent=1 // pred_fallthru
      _
    // Predicated region
    $region10: #{tpu_custom_call.1} parent=1 // pred_check
      _
    $region11: #{tpu_custom_call.1} parent=1 // pred_check_branch
      %20 = sbr.rel (0) target = $region13
    $region12: #{tpu_custom_call.1} parent=1 // pred_region
      _
    $region13: #{tpu_custom_call.1} parent=1 // pred_fallthru
      _
    // Predicated region
    $region14: #{tpu_custom_call.1} parent=1 // pred_check
      _
    $region15: #{tpu_custom_call.1} parent=1 // pred_check_branch
      %22 = sbr.rel (0) target = $region17
    $region16: #{tpu_custom_call.1} parent=1 // pred_region
      _
    $region17: #{tpu_custom_call.1} parent=1 // pred_fallthru
      _
    // Predicated region
    $region18: #{tpu_custom_call.1} parent=1 // pred_check
      _
    $region19: #{tpu_custom_call.1} parent=1 // pred_check_branch
      %24 = sbr.rel (0) target = $region21
    $region20: #{tpu_custom_call.1} parent=1 // pred_region
      _
    $region21: #{tpu_custom_call.1} parent=1 // pred_fallthru
      _
    // Predicated region
    $region22: #{tpu_custom_call.1} parent=1 // pred_check
      _
    $region23: #{tpu_custom_call.1} parent=1 // pred_check_branch
      %26 = sbr.rel (0) target = $region25
    $region24: #{tpu_custom_call.1} parent=1 // pred_region
      _
    $region25: #{tpu_custom_call.1} parent=1 // pred_fallthru
      _
    // Predicated region
    $region26: #{tpu_custom_call.1} parent=1 // pred_check
      _
    $region27: #{tpu_custom_call.1} parent=1 // pred_check_branch
      %28 = sbr.rel (0) target = $region29
    $region28: #{tpu_custom_call.1} parent=1 // pred_region
      _
    $region29: #{tpu_custom_call.1} parent=1 // pred_fallthru
      _
    // Predicated region
    $region30: #{tpu_custom_call.1} parent=1 // pred_check
      _
    $region31: #{tpu_custom_call.1} parent=1 // pred_check_branch
      %30 = sbr.rel (0) target = $region33
    $region32: #{tpu_custom_call.1} parent=1 // pred_region
      _
    $region33: #{tpu_custom_call.1} parent=1 // pred_fallthru
      _
    // Predicated region
    $region34: #{tpu_custom_call.1} parent=1 // pred_check
      _
    $region35: #{tpu_custom_call.1} parent=1 // pred_check_branch
      %32 = sbr.rel (0) target = $region37
    $region36: #{tpu_custom_call.1} parent=1 // pred_region
      _
    $region37: #{tpu_custom_call.1} parent=1 // pred_fallthru
      _
    %v33 = vld [vmem:[%s1] sm:$0xff]
    %v34 = vld [vmem:[%s4] sm:$0xff]
    %v35 = vld [vmem:[%s4 + $0x8] sm:$0xff]
    %v36 = vld [vmem:[%s4 + $0x10] sm:$0xff]
    %v37 = vld [vmem:[%s4 + $0x18] sm:$0xff]
    %v38 = vld [vmem:[%s2] sm:$0xff]
    %v39 = vld [vmem:[%s2 + $0x8] sm:$0xff]
    %v40 = vld [vmem:[%s2 + $0x10] sm:$0xff]
    %v41 = vld [vmem:[%s2 + $0x18] sm:$0xff]
    %v42 = vld [vmem:[%s5] sm:$0xff]
    %v43 = vld [vmem:[%s5 + $0x8] sm:$0xff]
    %v44 = vld [vmem:[%s5 + $0x10] sm:$0xff]
    %v45 = vld [vmem:[%s5 + $0x18] sm:$0xff]
    %v46 = vld [vmem:[%s3] sm:$0x1]
    %v47 = vld [vmem:[%s6] sm:$0x1]
    %v48 = vld [vmem:[%s7] sm:$0xff]
    %v49 = vld [vmem:[%s7 + $0x8] sm:$0xff]
    %v50 = vld [vmem:[%s7 + $0x10] sm:$0xff]
    %v51 = vld [vmem:[%s7 + $0x18] sm:$0xff]
    %v52 = vld [vmem:[%s7 + $0x20] sm:$0xff]
    %v53 = vld [vmem:[%s7 + $0x28] sm:$0xff]
    %v54 = vld [vmem:[%s7 + $0x30] sm:$0xff]
    %v55 = vld [vmem:[%s7 + $0x38] sm:$0xff]
    %v56 = vld [vmem:[%s7 + $0x40] sm:$0xff]
    %v57 = vld [vmem:[%s7 + $0x48] sm:$0xff]
    %v58 = vld [vmem:[%s7 + $0x50] sm:$0xff]
    %v59 = vld [vmem:[%s7 + $0x58] sm:$0xff]
    %v60 = vld [vmem:[%s7 + $0x60] sm:$0xff]
    %v61 = vld [vmem:[%s7 + $0x68] sm:$0xff]
    %v62 = vld [vmem:[%s7 + $0x70] sm:$0xff]
    %v63 = vld [vmem:[%s7 + $0x78] sm:$0xff]
    %v64 = vld [vmem:[%s7 + $0x80] sm:$0xff]
    %v65 = vld [vmem:[%s7 + $0x88] sm:$0xff]
    %v66 = vld [vmem:[%s7 + $0x90] sm:$0xff]
    %v67 = vld [vmem:[%s7 + $0x98] sm:$0xff]
    %v68 = vld [vmem:[%s7 + $0xa0] sm:$0xff]
    %v69 = vld [vmem:[%s7 + $0xa8] sm:$0xff]
    %v70 = vld [vmem:[%s7 + $0xb0] sm:$0xff]
    %v71 = vld [vmem:[%s7 + $0xb8] sm:$0xff]
    %v72 = vld [vmem:[%s7 + $0xc0] sm:$0xff]
    %v73 = vld [vmem:[%s7 + $0xc8] sm:$0xff]
    %v74 = vld [vmem:[%s7 + $0xd0] sm:$0xff]
    %v75 = vld [vmem:[%s7 + $0xd8] sm:$0xff]
    %v76 = vld [vmem:[%s7 + $0xe0] sm:$0xff]
    %v77 = vld [vmem:[%s7 + $0xe8] sm:$0xff]
    %v78 = vld [vmem:[%s7 + $0xf0] sm:$0xff]
    %v79 = vld [vmem:[%s7 + $0xf8] sm:$0xff]
    %v80 = vld [vmem:[%s7 + $0x100] sm:$0xff]
    %v81 = vld [vmem:[%s7 + $0x108] sm:$0xff]
    %v82 = vld [vmem:[%s7 + $0x110] sm:$0xff]
    %v83 = vld [vmem:[%s7 + $0x118] sm:$0xff]
    %v84 = vld [vmem:[%s7 + $0x120] sm:$0xff]
    %v85 = vld [vmem:[%s7 + $0x128] sm:$0xff]
    %v86 = vld [vmem:[%s7 + $0x130] sm:$0xff]
    %v87 = vld [vmem:[%s7 + $0x138] sm:$0xff]
    %v88 = vld [vmem:[%s7 + $0x140] sm:$0xff]
    %v89 = vld [vmem:[%s7 + $0x148] sm:$0xff]
    %v90 = vld [vmem:[%s7 + $0x150] sm:$0xff]
    %v91 = vld [vmem:[%s7 + $0x158] sm:$0xff]
    %v92 = vld [vmem:[%s7 + $0x160] sm:$0xff]
    %v93 = vld [vmem:[%s7 + $0x168] sm:$0xff]
    %v94 = vld [vmem:[%s7 + $0x170] sm:$0xff]
    %v95 = vld [vmem:[%s7 + $0x178] sm:$0xff]
    %v96 = vld [vmem:[%s0] sm:$0x1]
    %v97 = vld [vmem:[%s0 + $0x10] sm:$0x1]
    %v98 = vld [vmem:[%s0 + $0x20] sm:$0x1]
    %v99 = vld [vmem:[%s0 + $0x30] sm:$0x1]
    %v100 = vld [vmem:[%s0 + $0x40] sm:$0x1]
    %v101 = vld [vmem:[%s0 + $0x50] sm:$0x1]
    %v102 = vld [vmem:[%s0 + $0x60] sm:$0x1]
    %v103 = vld [vmem:[%s0 + $0x70] sm:$0x1]
    %vm104 = vcmask 261120
    %v106 = vsel %vm104, 0.0, 0
    %108 = vmatpush.msra.mxu0 0.0
    %109 = vmatpush.msra.mxu0 0.0
    %110 = vmatpush.msra.mxu0 0.0
    %111 = vmatpush.msra.mxu0 0.0
    %112 = vmatpush.msra.mxu0 0.0
    %113 = vmatpush.msra.mxu0 0.0
    %114 = vmatpush.msra.mxu0 0.0
    %115 = vmatpush.msra.mxu0 0.0
    %116 = vmatpush.msra.mxu0 0.0
    %117 = vmatpush.msra.mxu0 0.0
    %118 = vmatpush.msra.mxu0 0.0
    %119 = vmatpush.msra.mxu0 0.0
    %120 = vmatpush.msra.mxu0 %v41
    %121 = vmatpush.msra.mxu0 %v40
    %122 = vmatpush.msra.mxu0 %v39
    %123 = vmatpush.msra.mxu0 %v38
    %124 = vmatmul.f32.gmra.mxu0 %v106
    %v125 = vpop.f32.mrf.mxu0
    %v126 = vadd.f32 0.0, %v125
    %127 = vdwg.mxu0
    %v136 = vrot.slane %v97, 7
    %vm137 = vcmask 1041409
    %v138 = vsel %vm137, %v136, %v96
    %v139 = vrot.slane %v98, 6
    %vm140 = vcmask 1042434
    %v141 = vsel %vm140, %v139, %v138
    %v142 = vrot.slane %v99, 5
    %vm143 = vcmask 1043459
    %v144 = vsel %vm143, %v142, %v141
    %v145 = vrot.slane %v100, 4
    %vm146 = vcmask 1044484
    %v147 = vsel %vm146, %v145, %v144
    %v148 = vrot.slane %v101, 3
    %vm149 = vcmask 1045509
    %v150 = vsel %vm149, %v148, %v147
    %v151 = vrot.slane %v102, 2
    %vm152 = vcmask 1046534
    %v153 = vsel %vm152, %v151, %v150
    %v154 = vrot.slane %v103, 1
    %vm155 = vcmask 1047559
    %v156 = vsel %vm155, %v154, %v153
    %vm157 = vcmask 64512
    %v158 = vsel %vm157, %v156, 0
    %160 = vmatpush.msra.mxu0 0.0
    %161 = vmatpush.msra.mxu0 0.0
    %162 = vmatpush.msra.mxu0 0.0
    %163 = vmatpush.msra.mxu0 0.0
    %164 = vmatpush.msra.mxu0 0.0
    %165 = vmatpush.msra.mxu0 0.0
    %166 = vmatpush.msra.mxu0 0.0
    %167 = vmatpush.msra.mxu0 0.0
    %168 = vmatpush.msra.mxu0 0.0
    %169 = vmatpush.msra.mxu0 0.0
    %170 = vmatpush.msra.mxu0 0.0
    %171 = vmatpush.msra.mxu0 0.0
    %172 = vmatpush.msra.mxu0 0.0
    %173 = vmatpush.msra.mxu0 0.0
    %174 = vmatpush.msra.mxu0 0.0
    %175 = vmatpush.msra.mxu0 %v33
    %176 = vmatmul.f32.gmra.mxu0 %v158
    %v177 = vpop.f32.mrf.mxu0
    %v178 = vadd.f32 %v126, %v177
    %179 = vdwg.mxu0
    %v181 = vperm.slane %v46, 0
    %v183 = vadd.f32 %v178, %v181
    %v184 = vxor.u32 %v183, 2147483648
    %v185 = vmul.f32 %v184, 1.442695
    %v186 = vpow.pop %v185
    %v187 = vadd.f32 %v186, 1.0
    %v188 = vrcp.pop %v187
    %v189 = vmul.f32 %v187, %v188
    %v190 = vsub.f32 1.0, %v189
    %v191 = vmul.f32 %v188, %v190
    %v192 = vadd.f32 %v188, %v191
    %vm193 = vweird.f32 %v187
    %vm194 = vweird.f32 %v188
    %vm195 = vmor %vm193, %vm194
    %v196 = vsel %vm195, %v188, %v192
    %v197 = vand.u32 2147483647, %v187
    %vm198 = vcmp.eq.f32.partialorder %v197, 8.507059e+37
    %v199 = vand.u32 %v187, 2147483648
    %v200 = vor.u32 1.1754944e-38, %v199
    %v201 = vsel %vm198, %v200, %v196
    %v202 = vmul.f32 1.0, %v201
    %v203 = vtanh.pop %v183
    %v204 = vmul.f32 %v202, 0.0
    %206 = vrot.lane.b32.xlu0 %v203, 64
    %v207 = vpop.permute.xlu0 %206
    %v209 = vmul.f32 %v202, %v207
    %211 = vrot.lane.b32.xlu0 %v209, 32
    %v212 = vpop.permute.xlu0 %211
    %v214 = vadd.f32 %v204, %v212
    %v215 = vtanh.pop %v214
    %217 = vrot.lane.b32.xlu0 %v215, 64
    %v218 = vpop.permute.xlu0 %217
    %v220 = vmul.f32 %v202, %v218
    %221 = vmatpush.msra.mxu0 0.0
    %222 = vmatpush.msra.mxu0 0.0
    %223 = vmatpush.msra.mxu0 0.0
    %224 = vmatpush.msra.mxu0 0.0
    %225 = vmatpush.msra.mxu0 0.0
    %226 = vmatpush.msra.mxu0 0.0
    %227 = vmatpush.msra.mxu0 0.0
    %228 = vmatpush.msra.mxu0 0.0
    %229 = vmatpush.msra.mxu0 0.0
    %230 = vmatpush.msra.mxu0 0.0
    %231 = vmatpush.msra.mxu0 0.0
    %232 = vmatpush.msra.mxu0 0.0
    %233 = vmatpush.msra.mxu0 %v45
    %234 = vmatpush.msra.mxu0 %v44
    %235 = vmatpush.msra.mxu0 %v43
    %236 = vmatpush.msra.mxu0 %v42
    %237 = vmatmul.f32.gmra.mxu0 %v106
    %v238 = vpop.f32.mrf.mxu0
    %v239 = vadd.f32 0.0, %v238
    %240 = vdwg.mxu0
    %242 = vrot.lane.b32.xlu0 %v220, 32
    %v243 = vpop.permute.xlu0 %242
    %v244 = vsel %vm104, %v243, 0
    %246 = vmatpush.msra.mxu0 0.0
    %247 = vmatpush.msra.mxu0 0.0
    %248 = vmatpush.msra.mxu0 0.0
    %249 = vmatpush.msra.mxu0 0.0
    %250 = vmatpush.msra.mxu0 0.0
    %251 = vmatpush.msra.mxu0 0.0
    %252 = vmatpush.msra.mxu0 0.0
    %253 = vmatpush.msra.mxu0 0.0
    %254 = vmatpush.msra.mxu0 0.0
    %255 = vmatpush.msra.mxu0 0.0
    %256 = vmatpush.msra.mxu0 0.0
    %257 = vmatpush.msra.mxu0 0.0
    %258 = vmatpush.msra.mxu0 %v37
    %259 = vmatpush.msra.mxu0 %v36
    %260 = vmatpush.msra.mxu0 %v35
    %261 = vmatpush.msra.mxu0 %v34
    %262 = vmatmul.f32.gmra.mxu0 %v244
    %v263 = vpop.f32.mrf.mxu0
    %v264 = vadd.f32 %v239, %v263
    %265 = vdwg.mxu0
    %v267 = vperm.slane %v47, 0
    %v269 = vadd.f32 %v264, %v267
    %v270 = vxor.u32 %v269, 2147483648
    %v271 = vmul.f32 %v270, 1.442695
    %v272 = vpow.pop %v271
    %v273 = vadd.f32 %v272, 1.0
    %v274 = vrcp.pop %v273
    %v275 = vmul.f32 %v273, %v274
    %v276 = vsub.f32 1.0, %v275
    %v277 = vmul.f32 %v274, %v276
    %v278 = vadd.f32 %v274, %v277
    %vm279 = vweird.f32 %v273
    %vm280 = vweird.f32 %v274
    %vm281 = vmor %vm279, %vm280
    %v282 = vsel %vm281, %v274, %v278
    %v283 = vand.u32 2147483647, %v273
    %vm284 = vcmp.eq.f32.partialorder %v283, 8.507059e+37
    %v285 = vand.u32 %v273, 2147483648
    %v286 = vor.u32 1.1754944e-38, %v285
    %v287 = vsel %vm284, %v286, %v282
    %v288 = vmul.f32 1.0, %v287
    %v289 = vtanh.pop %v269
    %v290 = vmul.f32 %v288, 0.0
    %292 = vrot.lane.b32.xlu0 %v289, 64
    %v293 = vpop.permute.xlu0 %292
    %v295 = vmul.f32 %v288, %v293
    %297 = vrot.lane.b32.xlu0 %v295, 32
    %v298 = vpop.permute.xlu0 %297
    %v300 = vadd.f32 %v290, %v298
    %v301 = vtanh.pop %v300
    %303 = vrot.lane.b32.xlu0 %v301, 64
    %v304 = vpop.permute.xlu0 %303
    %v306 = vmul.f32 %v288, %v304
    %v307 = vld [vmem:[%s0 + $0x1] sm:$0x1]
    %v308 = vld [vmem:[%s0 + $0x11] sm:$0x1]
    %v309 = vld [vmem:[%s0 + $0x21] sm:$0x1]
    %v310 = vld [vmem:[%s0 + $0x31] sm:$0x1]
    %v311 = vld [vmem:[%s0 + $0x41] sm:$0x1]
    %v312 = vld [vmem:[%s0 + $0x51] sm:$0x1]
    %v313 = vld [vmem:[%s0 + $0x61] sm:$0x1]
    %v314 = vld [vmem:[%s0 + $0x71] sm:$0x1]
    %315 = vmatpush.msra.mxu0 0.0
    %316 = vmatpush.msra.mxu0 0.0
    %317 = vmatpush.msra.mxu0 0.0
    %318 = vmatpush.msra.mxu0 0.0
    %319 = vmatpush.msra.mxu0 0.0
    %320 = vmatpush.msra.mxu0 0.0
    %321 = vmatpush.msra.mxu0 0.0
    %322 = vmatpush.msra.mxu0 0.0
    %323 = vmatpush.msra.mxu0 0.0
    %324 = vmatpush.msra.mxu0 0.0
    %325 = vmatpush.msra.mxu0 0.0
    %326 = vmatpush.msra.mxu0 0.0
    %327 = vmatpush.msra.mxu0 %v41
    %328 = vmatpush.msra.mxu0 %v40
    %329 = vmatpush.msra.mxu0 %v39
    %330 = vmatpush.msra.mxu0 %v38
    %331 = vmatmul.f32.gmra.mxu0 %v244
    %v332 = vpop.f32.mrf.mxu0
    %v333 = vadd.f32 0.0, %v332
    %334 = vdwg.mxu0
    %v343 = vrot.slane %v308, 7
    %v344 = vsel %vm137, %v343, %v307
    %v345 = vrot.slane %v309, 6
    %v346 = vsel %vm140, %v345, %v344
    %v347 = vrot.slane %v310, 5
    %v348 = vsel %vm143, %v347, %v346
    %v349 = vrot.slane %v311, 4
    %v350 = vsel %vm146, %v349, %v348
    %v351 = vrot.slane %v312, 3
    %v352 = vsel %vm149, %v351, %v350
    %v353 = vrot.slane %v313, 2
    %v354 = vsel %vm152, %v353, %v352
    %v355 = vrot.slane %v314, 1
    %v356 = vsel %vm155, %v355, %v354
    %v357 = vsel %vm157, %v356, 0
    %359 = vmatpush.msra.mxu0 0.0
    %360 = vmatpush.msra.mxu0 0.0
    %361 = vmatpush.msra.mxu0 0.0
    %362 = vmatpush.msra.mxu0 0.0
    %363 = vmatpush.msra.mxu0 0.0
    %364 = vmatpush.msra.mxu0 0.0
    %365 = vmatpush.msra.mxu0 0.0
    %366 = vmatpush.msra.mxu0 0.0
    %367 = vmatpush.msra.mxu0 0.0
    %368 = vmatpush.msra.mxu0 0.0
    %369 = vmatpush.msra.mxu0 0.0
    %370 = vmatpush.msra.mxu0 0.0
    %371 = vmatpush.msra.mxu0 0.0
    %372 = vmatpush.msra.mxu0 0.0
    %373 = vmatpush.msra.mxu0 0.0
    %374 = vmatpush.msra.mxu0 %v33
    %375 = vmatmul.f32.gmra.mxu0 %v357
    %v376 = vpop.f32.mrf.mxu0
    %v377 = vadd.f32 %v333, %v376
    %378 = vdwg.mxu0
    %v379 = vadd.f32 %v377, %v181
    %v380 = vxor.u32 %v379, 2147483648
    %v381 = vmul.f32 %v380, 1.442695
    %v382 = vpow.pop %v381
    %v383 = vadd.f32 %v382, 1.0
    %v384 = vrcp.pop %v383
    %v385 = vmul.f32 %v383, %v384
    %v386 = vsub.f32 1.0, %v385
    %v387 = vmul.f32 %v384, %v386
    %v388 = vadd.f32 %v384, %v387
    %vm389 = vweird.f32 %v383
    %vm390 = vweird.f32 %v384
    %vm391 = vmor %vm389, %vm390
    %v392 = vsel %vm391, %v384, %v388
    %v393 = vand.u32 2147483647, %v383
    %vm394 = vcmp.eq.f32.partialorder %v393, 8.507059e+37
    %v395 = vand.u32 %v383, 2147483648
    %v396 = vor.u32 1.1754944e-38, %v395
    %v397 = vsel %vm394, %v396, %v392
    %v398 = vmul.f32 1.0, %v397
    %v399 = vtanh.pop %v379
    %v400 = vmul.f32 %v398, %v214
    %402 = vrot.lane.b32.xlu0 %v399, 64
    %v403 = vpop.permute.xlu0 %402
    %v405 = vmul.f32 %v398, %v403
    %407 = vrot.lane.b32.xlu0 %v405, 32
    %v408 = vpop.permute.xlu0 %407
    %v410 = vadd.f32 %v400, %v408
    %v411 = vtanh.pop %v410
    %413 = vrot.lane.b32.xlu0 %v411, 64
    %v414 = vpop.permute.xlu0 %413
    %v416 = vmul.f32 %v398, %v414
    %418 = vrot.lane.b32.xlu0 %v306, 32
    %v419 = vpop.permute.xlu0 %418
    %v420 = vsel %vm104, %v419, 0
    %422 = vmatpush.msra.mxu0 0.0
    %423 = vmatpush.msra.mxu0 0.0
    %424 = vmatpush.msra.mxu0 0.0
    %425 = vmatpush.msra.mxu0 0.0
    %426 = vmatpush.msra.mxu0 0.0
    %427 = vmatpush.msra.mxu0 0.0
    %428 = vmatpush.msra.mxu0 0.0
    %429 = vmatpush.msra.mxu0 0.0
    %430 = vmatpush.msra.mxu0 0.0
    %431 = vmatpush.msra.mxu0 0.0
    %432 = vmatpush.msra.mxu0 0.0
    %433 = vmatpush.msra.mxu0 0.0
    %434 = vmatpush.msra.mxu0 %v45
    %435 = vmatpush.msra.mxu0 %v44
    %436 = vmatpush.msra.mxu0 %v43
    %437 = vmatpush.msra.mxu0 %v42
    %438 = vmatmul.f32.gmra.mxu0 %v420
    %v439 = vpop.f32.mrf.mxu0
    %v440 = vadd.f32 0.0, %v439
    %441 = vdwg.mxu0
    %443 = vrot.lane.b32.xlu0 %v416, 32
    %v444 = vpop.permute.xlu0 %443
    %v445 = vsel %vm104, %v444, 0
    %447 = vmatpush.msra.mxu0 0.0
    %448 = vmatpush.msra.mxu0 0.0
    %449 = vmatpush.msra.mxu0 0.0
    %450 = vmatpush.msra.mxu0 0.0
    %451 = vmatpush.msra.mxu0 0.0
    %452 = vmatpush.msra.mxu0 0.0
    %453 = vmatpush.msra.mxu0 0.0
    %454 = vmatpush.msra.mxu0 0.0
    %455 = vmatpush.msra.mxu0 0.0
    %456 = vmatpush.msra.mxu0 0.0
    %457 = vmatpush.msra.mxu0 0.0
    %458 = vmatpush.msra.mxu0 0.0
    %459 = vmatpush.msra.mxu0 %v37
    %460 = vmatpush.msra.mxu0 %v36
    %461 = vmatpush.msra.mxu0 %v35
    %462 = vmatpush.msra.mxu0 %v34
    %463 = vmatmul.f32.gmra.mxu0 %v445
    %v464 = vpop.f32.mrf.mxu0
    %v465 = vadd.f32 %v440, %v464
    %466 = vdwg.mxu0
    %v467 = vadd.f32 %v465, %v267
    %v468 = vxor.u32 %v467, 2147483648
    %v469 = vmul.f32 %v468, 1.442695
    %v470 = vpow.pop %v469
    %v471 = vadd.f32 %v470, 1.0
    %v472 = vrcp.pop %v471
    %v473 = vmul.f32 %v471, %v472
    %v474 = vsub.f32 1.0, %v473
    %v475 = vmul.f32 %v472, %v474
    %v476 = vadd.f32 %v472, %v475
    %vm477 = vweird.f32 %v471
    %vm478 = vweird.f32 %v472
    %vm479 = vmor %vm477, %vm478
    %v480 = vsel %vm479, %v472, %v476
    %v481 = vand.u32 2147483647, %v471
    %vm482 = vcmp.eq.f32.partialorder %v481, 8.507059e+37
    %v483 = vand.u32 %v471, 2147483648
    %v484 = vor.u32 1.1754944e-38, %v483
    %v485 = vsel %vm482, %v484, %v480
    %v486 = vmul.f32 1.0, %v485
    %v487 = vtanh.pop %v467
    %v488 = vmul.f32 %v486, %v300
    %490 = vrot.lane.b32.xlu0 %v487, 64
    %v491 = vpop.permute.xlu0 %490
    %v493 = vmul.f32 %v486, %v491
    %495 = vrot.lane.b32.xlu0 %v493, 32
    %v496 = vpop.permute.xlu0 %495
    %v498 = vadd.f32 %v488, %v496
    %v499 = vtanh.pop %v498
    %501 = vrot.lane.b32.xlu0 %v499, 64
    %v502 = vpop.permute.xlu0 %501
    %v504 = vmul.f32 %v486, %v502
    %506 = vrot.lane.b32.xlu0 %v504, 32
    %v507 = vpop.permute.xlu0 %506
    %v508 = vsel %vm104, %v507, 0
    %510 = vmatpush.msra.mxu0 0.0
    %511 = vmatpush.msra.mxu0 0.0
    %512 = vmatpush.msra.mxu0 0.0
    %513 = vmatpush.msra.mxu0 0.0
    %514 = vmatpush.msra.mxu0 0.0
    %515 = vmatpush.msra.mxu0 0.0
    %516 = vmatpush.msra.mxu0 0.0
    %517 = vmatpush.msra.mxu0 0.0
    %518 = vmatpush.msra.mxu0 0.0
    %519 = vmatpush.msra.mxu0 0.0
    %520 = vmatpush.msra.mxu0 0.0
    %521 = vmatpush.msra.mxu0 0.0
    %522 = vmatpush.msra.mxu0 %v55
    %523 = vmatpush.msra.mxu0 %v54
    %524 = vmatpush.msra.mxu0 %v53
    %525 = vmatpush.msra.mxu0 %v52
    %526 = vmatmul.f32.gmra.mxu0 %v508
    %v527 = vpop.f32.mrf.mxu0
    %v528 = vadd.f32 0.0, %v527
    %529 = vdwg.mxu0
    %530 = vmatpush.msra.mxu0 0.0
    %531 = vmatpush.msra.mxu0 0.0
    %532 = vmatpush.msra.mxu0 0.0
    %533 = vmatpush.msra.mxu0 0.0
    %534 = vmatpush.msra.mxu0 0.0
    %535 = vmatpush.msra.mxu0 0.0
    %536 = vmatpush.msra.mxu0 0.0
    %537 = vmatpush.msra.mxu0 0.0
    %538 = vmatpush.msra.mxu0 0.0
    %539 = vmatpush.msra.mxu0 0.0
    %540 = vmatpush.msra.mxu0 0.0
    %541 = vmatpush.msra.mxu0 0.0
    %542 = vmatpush.msra.mxu0 %v51
    %543 = vmatpush.msra.mxu0 %v50
    %544 = vmatpush.msra.mxu0 %v49
    %545 = vmatpush.msra.mxu0 %v48
    %546 = vmatmul.f32.gmra.mxu0 %v420
    %v547 = vpop.f32.mrf.mxu0
    %v548 = vadd.f32 %v528, %v547
    %549 = vdwg.mxu0
    %v550 = vld [vmem:[%s0 + $0x2] sm:$0x1]
    %v551 = vld [vmem:[%s0 + $0x12] sm:$0x1]
    %v552 = vld [vmem:[%s0 + $0x22] sm:$0x1]
    %v553 = vld [vmem:[%s0 + $0x32] sm:$0x1]
    %v554 = vld [vmem:[%s0 + $0x42] sm:$0x1]
    %v555 = vld [vmem:[%s0 + $0x52] sm:$0x1]
    %v556 = vld [vmem:[%s0 + $0x62] sm:$0x1]
    %v557 = vld [vmem:[%s0 + $0x72] sm:$0x1]
    %558 = vmatpush.msra.mxu0 0.0
    %559 = vmatpush.msra.mxu0 0.0
    %560 = vmatpush.msra.mxu0 0.0
    %561 = vmatpush.msra.mxu0 0.0
    %562 = vmatpush.msra.mxu0 0.0
    %563 = vmatpush.msra.mxu0 0.0
    %564 = vmatpush.msra.mxu0 0.0
    %565 = vmatpush.msra.mxu0 0.0
    %566 = vmatpush.msra.mxu0 0.0
    %567 = vmatpush.msra.mxu0 0.0
    %568 = vmatpush.msra.mxu0 0.0
    %569 = vmatpush.msra.mxu0 0.0
    %570 = vmatpush.msra.mxu0 %v41
    %571 = vmatpush.msra.mxu0 %v40
    %572 = vmatpush.msra.mxu0 %v39
    %573 = vmatpush.msra.mxu0 %v38
    %574 = vmatmul.f32.gmra.mxu0 %v445
    %v575 = vpop.f32.mrf.mxu0
    %v576 = vadd.f32 0.0, %v575
    %577 = vdwg.mxu0
    %v586 = vrot.slane %v551, 7
    %v587 = vsel %vm137, %v586, %v550
    %v588 = vrot.slane %v552, 6
    %v589 = vsel %vm140, %v588, %v587
    %v590 = vrot.slane %v553, 5
    %v591 = vsel %vm143, %v590, %v589
    %v592 = vrot.slane %v554, 4
    %v593 = vsel %vm146, %v592, %v591
    %v594 = vrot.slane %v555, 3
    %v595 = vsel %vm149, %v594, %v593
    %v596 = vrot.slane %v556, 2
    %v597 = vsel %vm152, %v596, %v595
    %v598 = vrot.slane %v557, 1
    %v599 = vsel %vm155, %v598, %v597
    %v600 = vsel %vm157, %v599, 0
    %602 = vmatpush.msra.mxu0 0.0
    %603 = vmatpush.msra.mxu0 0.0
    %604 = vmatpush.msra.mxu0 0.0
    %605 = vmatpush.msra.mxu0 0.0
    %606 = vmatpush.msra.mxu0 0.0
    %607 = vmatpush.msra.mxu0 0.0
    %608 = vmatpush.msra.mxu0 0.0
    %609 = vmatpush.msra.mxu0 0.0
    %610 = vmatpush.msra.mxu0 0.0
    %611 = vmatpush.msra.mxu0 0.0
    %612 = vmatpush.msra.mxu0 0.0
    %613 = vmatpush.msra.mxu0 0.0
    %614 = vmatpush.msra.mxu0 0.0
    %615 = vmatpush.msra.mxu0 0.0
    %616 = vmatpush.msra.mxu0 0.0
    %617 = vmatpush.msra.mxu0 %v33
    %618 = vmatmul.f32.gmra.mxu0 %v600
    %v619 = vpop.f32.mrf.mxu0
    %v620 = vadd.f32 %v576, %v619
    %621 = vdwg.mxu0
    %v622 = vadd.f32 %v620, %v181
    %v623 = vxor.u32 %v622, 2147483648
    %v624 = vmul.f32 %v623, 1.442695
    %v625 = vpow.pop %v624
    %v626 = vadd.f32 %v625, 1.0
    %v627 = vrcp.pop %v626
    %v628 = vmul.f32 %v626, %v627
    %v629 = vsub.f32 1.0, %v628
    %v630 = vmul.f32 %v627, %v629
    %v631 = vadd.f32 %v627, %v630
    %vm632 = vweird.f32 %v626
    %vm633 = vweird.f32 %v627
    %vm634 = vmor %vm632, %vm633
    %v635 = vsel %vm634, %v627, %v631
    %v636 = vand.u32 2147483647, %v626
    %vm637 = vcmp.eq.f32.partialorder %v636, 8.507059e+37
    %v638 = vand.u32 %v626, 2147483648
    %v639 = vor.u32 1.1754944e-38, %v638
    %v640 = vsel %vm637, %v639, %v635
    %v641 = vmul.f32 1.0, %v640
    %v642 = vtanh.pop %v622
    %v643 = vmul.f32 %v641, %v410
    %645 = vrot.lane.b32.xlu0 %v642, 64
    %v646 = vpop.permute.xlu0 %645
    %v648 = vmul.f32 %v641, %v646
    %650 = vrot.lane.b32.xlu0 %v648, 32
    %v651 = vpop.permute.xlu0 %650
    %v653 = vadd.f32 %v643, %v651
    %v654 = vtanh.pop %v653
    %656 = vrot.lane.b32.xlu0 %v654, 64
    %v657 = vpop.permute.xlu0 %656
    %v659 = vmul.f32 %v641, %v657
    %660 = vmatpush.msra.mxu0 0.0
    %661 = vmatpush.msra.mxu0 0.0
    %662 = vmatpush.msra.mxu0 0.0
    %663 = vmatpush.msra.mxu0 0.0
    %664 = vmatpush.msra.mxu0 0.0
    %665 = vmatpush.msra.mxu0 0.0
    %666 = vmatpush.msra.mxu0 0.0
    %667 = vmatpush.msra.mxu0 0.0
    %668 = vmatpush.msra.mxu0 0.0
    %669 = vmatpush.msra.mxu0 0.0
    %670 = vmatpush.msra.mxu0 0.0
    %671 = vmatpush.msra.mxu0 0.0
    %672 = vmatpush.msra.mxu0 %v45
    %673 = vmatpush.msra.mxu0 %v44
    %674 = vmatpush.msra.mxu0 %v43
    %675 = vmatpush.msra.mxu0 %v42
    %676 = vmatmul.f32.gmra.mxu0 %v508
    %v677 = vpop.f32.mrf.mxu0
    %v678 = vadd.f32 0.0, %v677
    %679 = vdwg.mxu0
    %681 = vrot.lane.b32.xlu0 %v659, 32
    %v682 = vpop.permute.xlu0 %681
    %v683 = vsel %vm104, %v682, 0
    %685 = vmatpush.msra.mxu0 0.0
    %686 = vmatpush.msra.mxu0 0.0
    %687 = vmatpush.msra.mxu0 0.0
    %688 = vmatpush.msra.mxu0 0.0
    %689 = vmatpush.msra.mxu0 0.0
    %690 = vmatpush.msra.mxu0 0.0
    %691 = vmatpush.msra.mxu0 0.0
    %692 = vmatpush.msra.mxu0 0.0
    %693 = vmatpush.msra.mxu0 0.0
    %694 = vmatpush.msra.mxu0 0.0
    %695 = vmatpush.msra.mxu0 0.0
    %696 = vmatpush.msra.mxu0 0.0
    %697 = vmatpush.msra.mxu0 %v37
    %698 = vmatpush.msra.mxu0 %v36
    %699 = vmatpush.msra.mxu0 %v35
    %700 = vmatpush.msra.mxu0 %v34
    %701 = vmatmul.f32.gmra.mxu0 %v683
    %v702 = vpop.f32.mrf.mxu0
    %v703 = vadd.f32 %v678, %v702
    %704 = vdwg.mxu0
    %v705 = vadd.f32 %v703, %v267
    %v706 = vxor.u32 %v705, 2147483648
    %v707 = vmul.f32 %v706, 1.442695
    %v708 = vpow.pop %v707
    %v709 = vadd.f32 %v708, 1.0
    %v710 = vrcp.pop %v709
    %v711 = vmul.f32 %v709, %v710
    %v712 = vsub.f32 1.0, %v711
    %v713 = vmul.f32 %v710, %v712
    %v714 = vadd.f32 %v710, %v713
    %vm715 = vweird.f32 %v709
    %vm716 = vweird.f32 %v710
    %vm717 = vmor %vm715, %vm716
    %v718 = vsel %vm717, %v710, %v714
    %v719 = vand.u32 2147483647, %v709
    %vm720 = vcmp.eq.f32.partialorder %v719, 8.507059e+37
    %v721 = vand.u32 %v709, 2147483648
    %v722 = vor.u32 1.1754944e-38, %v721
    %v723 = vsel %vm720, %v722, %v718
    %v724 = vmul.f32 1.0, %v723
    %v725 = vtanh.pop %v705
    %v726 = vmul.f32 %v724, %v498
    %728 = vrot.lane.b32.xlu0 %v725, 64
    %v729 = vpop.permute.xlu0 %728
    %v731 = vmul.f32 %v724, %v729
    %733 = vrot.lane.b32.xlu0 %v731, 32
    %v734 = vpop.permute.xlu0 %733
    %v736 = vadd.f32 %v726, %v734
    %v737 = vtanh.pop %v736
    %739 = vrot.lane.b32.xlu0 %v737, 64
    %v740 = vpop.permute.xlu0 %739
    %v742 = vmul.f32 %v724, %v740
    %744 = vrot.lane.b32.xlu0 %v742, 32
    %v745 = vpop.permute.xlu0 %744
    %v746 = vsel %vm104, %v745, 0
    %748 = vmatpush.msra.mxu0 0.0
    %749 = vmatpush.msra.mxu0 0.0
    %750 = vmatpush.msra.mxu0 0.0
    %751 = vmatpush.msra.mxu0 0.0
    %752 = vmatpush.msra.mxu0 0.0
    %753 = vmatpush.msra.mxu0 0.0
    %754 = vmatpush.msra.mxu0 0.0
    %755 = vmatpush.msra.mxu0 0.0
    %756 = vmatpush.msra.mxu0 0.0
    %757 = vmatpush.msra.mxu0 0.0
    %758 = vmatpush.msra.mxu0 0.0
    %759 = vmatpush.msra.mxu0 0.0
    %760 = vmatpush.msra.mxu0 %v59
    %761 = vmatpush.msra.mxu0 %v58
    %762 = vmatpush.msra.mxu0 %v57
    %763 = vmatpush.msra.mxu0 %v56
    %764 = vmatmul.f32.gmra.mxu0 %v746
    %v765 = vpop.f32.mrf.mxu0
    %v766 = vadd.f32 0.0, %v765
    %767 = vdwg.mxu0
    %v768 = vadd.f32 %v548, %v766
    %v769 = vld [vmem:[%s0 + $0x3] sm:$0x1]
    %v770 = vld [vmem:[%s0 + $0x13] sm:$0x1]
    %v771 = vld [vmem:[%s0 + $0x23] sm:$0x1]
    %v772 = vld [vmem:[%s0 + $0x33] sm:$0x1]
    %v773 = vld [vmem:[%s0 + $0x43] sm:$0x1]
    %v774 = vld [vmem:[%s0 + $0x53] sm:$0x1]
    %v775 = vld [vmem:[%s0 + $0x63] sm:$0x1]
    %v776 = vld [vmem:[%s0 + $0x73] sm:$0x1]
    %777 = vmatpush.msra.mxu0 0.0
    %778 = vmatpush.msra.mxu0 0.0
    %779 = vmatpush.msra.mxu0 0.0
    %780 = vmatpush.msra.mxu0 0.0
    %781 = vmatpush.msra.mxu0 0.0
    %782 = vmatpush.msra.mxu0 0.0
    %783 = vmatpush.msra.mxu0 0.0
    %784 = vmatpush.msra.mxu0 0.0
    %785 = vmatpush.msra.mxu0 0.0
    %786 = vmatpush.msra.mxu0 0.0
    %787 = vmatpush.msra.mxu0 0.0
    %788 = vmatpush.msra.mxu0 0.0
    %789 = vmatpush.msra.mxu0 %v41
    %790 = vmatpush.msra.mxu0 %v40
    %791 = vmatpush.msra.mxu0 %v39
    %792 = vmatpush.msra.mxu0 %v38
    %793 = vmatmul.f32.gmra.mxu0 %v683
    %v794 = vpop.f32.mrf.mxu0
    %v795 = vadd.f32 0.0, %v794
    %796 = vdwg.mxu0
    %v805 = vrot.slane %v770, 7
    %v806 = vsel %vm137, %v805, %v769
    %v807 = vrot.slane %v771, 6
    %v808 = vsel %vm140, %v807, %v806
    %v809 = vrot.slane %v772, 5
    %v810 = vsel %vm143, %v809, %v808
    %v811 = vrot.slane %v773, 4
    %v812 = vsel %vm146, %v811, %v810
    %v813 = vrot.slane %v774, 3
    %v814 = vsel %vm149, %v813, %v812
    %v815 = vrot.slane %v775, 2
    %v816 = vsel %vm152, %v815, %v814
    %v817 = vrot.slane %v776, 1
    %v818 = vsel %vm155, %v817, %v816
    %v819 = vsel %vm157, %v818, 0
    %821 = vmatpush.msra.mxu0 0.0
    %822 = vmatpush.msra.mxu0 0.0
    %823 = vmatpush.msra.mxu0 0.0
    %824 = vmatpush.msra.mxu0 0.0
    %825 = vmatpush.msra.mxu0 0.0
    %826 = vmatpush.msra.mxu0 0.0
    %827 = vmatpush.msra.mxu0 0.0
    %828 = vmatpush.msra.mxu0 0.0
    %829 = vmatpush.msra.mxu0 0.0
    %830 = vmatpush.msra.mxu0 0.0
    %831 = vmatpush.msra.mxu0 0.0
    %832 = vmatpush.msra.mxu0 0.0
    %833 = vmatpush.msra.mxu0 0.0
    %834 = vmatpush.msra.mxu0 0.0
    %835 = vmatpush.msra.mxu0 0.0
    %836 = vmatpush.msra.mxu0 %v33
    %837 = vmatmul.f32.gmra.mxu0 %v819
    %v838 = vpop.f32.mrf.mxu0
    %v839 = vadd.f32 %v795, %v838
    %840 = vdwg.mxu0
    %v841 = vadd.f32 %v839, %v181
    %v842 = vxor.u32 %v841, 2147483648
    %v843 = vmul.f32 %v842, 1.442695
    %v844 = vpow.pop %v843
    %v845 = vadd.f32 %v844, 1.0
    %v846 = vrcp.pop %v845
    %v847 = vmul.f32 %v845, %v846
    %v848 = vsub.f32 1.0, %v847
    %v849 = vmul.f32 %v846, %v848
    %v850 = vadd.f32 %v846, %v849
    %vm851 = vweird.f32 %v845
    %vm852 = vweird.f32 %v846
    %vm853 = vmor %vm851, %vm852
    %v854 = vsel %vm853, %v846, %v850
    %v855 = vand.u32 2147483647, %v845
    %vm856 = vcmp.eq.f32.partialorder %v855, 8.507059e+37
    %v857 = vand.u32 %v845, 2147483648
    %v858 = vor.u32 1.1754944e-38, %v857
    %v859 = vsel %vm856, %v858, %v854
    %v860 = vmul.f32 1.0, %v859
    %v861 = vtanh.pop %v841
    %v862 = vmul.f32 %v860, %v653
    %864 = vrot.lane.b32.xlu0 %v861, 64
    %v865 = vpop.permute.xlu0 %864
    %v867 = vmul.f32 %v860, %v865
    %869 = vrot.lane.b32.xlu0 %v867, 32
    %v870 = vpop.permute.xlu0 %869
    %v872 = vadd.f32 %v862, %v870
    %v873 = vtanh.pop %v872
    %875 = vrot.lane.b32.xlu0 %v873, 64
    %v876 = vpop.permute.xlu0 %875
    %v878 = vmul.f32 %v860, %v876
    %879 = vmatpush.msra.mxu0 0.0
    %880 = vmatpush.msra.mxu0 0.0
    %881 = vmatpush.msra.mxu0 0.0
    %882 = vmatpush.msra.mxu0 0.0
    %883 = vmatpush.msra.mxu0 0.0
    %884 = vmatpush.msra.mxu0 0.0
    %885 = vmatpush.msra.mxu0 0.0
    %886 = vmatpush.msra.mxu0 0.0
    %887 = vmatpush.msra.mxu0 0.0
    %888 = vmatpush.msra.mxu0 0.0
    %889 = vmatpush.msra.mxu0 0.0
    %890 = vmatpush.msra.mxu0 0.0
    %891 = vmatpush.msra.mxu0 %v45
    %892 = vmatpush.msra.mxu0 %v44
    %893 = vmatpush.msra.mxu0 %v43
    %894 = vmatpush.msra.mxu0 %v42
    %895 = vmatmul.f32.gmra.mxu0 %v746
    %v896 = vpop.f32.mrf.mxu0
    %v897 = vadd.f32 0.0, %v896
    %898 = vdwg.mxu0
    %900 = vrot.lane.b32.xlu0 %v878, 32
    %v901 = vpop.permute.xlu0 %900
    %v902 = vsel %vm104, %v901, 0
    %904 = vmatpush.msra.mxu0 0.0
    %905 = vmatpush.msra.mxu0 0.0
    %906 = vmatpush.msra.mxu0 0.0
    %907 = vmatpush.msra.mxu0 0.0
    %908 = vmatpush.msra.mxu0 0.0
    %909 = vmatpush.msra.mxu0 0.0
    %910 = vmatpush.msra.mxu0 0.0
    %911 = vmatpush.msra.mxu0 0.0
    %912 = vmatpush.msra.mxu0 0.0
    %913 = vmatpush.msra.mxu0 0.0
    %914 = vmatpush.msra.mxu0 0.0
    %915 = vmatpush.msra.mxu0 0.0
    %916 = vmatpush.msra.mxu0 %v37
    %917 = vmatpush.msra.mxu0 %v36
    %918 = vmatpush.msra.mxu0 %v35
    %919 = vmatpush.msra.mxu0 %v34
    %920 = vmatmul.f32.gmra.mxu0 %v902
    %v921 = vpop.f32.mrf.mxu0
    %v922 = vadd.f32 %v897, %v921
    %923 = vdwg.mxu0
    %v924 = vadd.f32 %v922, %v267
    %v925 = vxor.u32 %v924, 2147483648
    %v926 = vmul.f32 %v925, 1.442695
    %v927 = vpow.pop %v926
    %v928 = vadd.f32 %v927, 1.0
    %v929 = vrcp.pop %v928
    %v930 = vmul.f32 %v928, %v929
    %v931 = vsub.f32 1.0, %v930
    %v932 = vmul.f32 %v929, %v931
    %v933 = vadd.f32 %v929, %v932
    %vm934 = vweird.f32 %v928
    %vm935 = vweird.f32 %v929
    %vm936 = vmor %vm934, %vm935
    %v937 = vsel %vm936, %v929, %v933
    %v938 = vand.u32 2147483647, %v928
    %vm939 = vcmp.eq.f32.partialorder %v938, 8.507059e+37
    %v940 = vand.u32 %v928, 2147483648
    %v941 = vor.u32 1.1754944e-38, %v940
    %v942 = vsel %vm939, %v941, %v937
    %v943 = vmul.f32 1.0, %v942
    %v944 = vtanh.pop %v924
    %v945 = vmul.f32 %v943, %v736
    %947 = vrot.lane.b32.xlu0 %v944, 64
    %v948 = vpop.permute.xlu0 %947
    %v950 = vmul.f32 %v943, %v948
    %952 = vrot.lane.b32.xlu0 %v950, 32
    %v953 = vpop.permute.xlu0 %952
    %v955 = vadd.f32 %v945, %v953
    %v956 = vtanh.pop %v955
    %958 = vrot.lane.b32.xlu0 %v956, 64
    %v959 = vpop.permute.xlu0 %958
    %v961 = vmul.f32 %v943, %v959
    %963 = vrot.lane.b32.xlu0 %v961, 32
    %v964 = vpop.permute.xlu0 %963
    %v965 = vsel %vm104, %v964, 0
    %967 = vmatpush.msra.mxu0 0.0
    %968 = vmatpush.msra.mxu0 0.0
    %969 = vmatpush.msra.mxu0 0.0
    %970 = vmatpush.msra.mxu0 0.0
    %971 = vmatpush.msra.mxu0 0.0
    %972 = vmatpush.msra.mxu0 0.0
    %973 = vmatpush.msra.mxu0 0.0
    %974 = vmatpush.msra.mxu0 0.0
    %975 = vmatpush.msra.mxu0 0.0
    %976 = vmatpush.msra.mxu0 0.0
    %977 = vmatpush.msra.mxu0 0.0
    %978 = vmatpush.msra.mxu0 0.0
    %979 = vmatpush.msra.mxu0 %v63
    %980 = vmatpush.msra.mxu0 %v62
    %981 = vmatpush.msra.mxu0 %v61
    %982 = vmatpush.msra.mxu0 %v60
    %983 = vmatmul.f32.gmra.mxu0 %v965
    %v984 = vpop.f32.mrf.mxu0
    %v985 = vadd.f32 0.0, %v984
    %986 = vdwg.mxu0
    %v987 = vadd.f32 %v768, %v985
    %v988 = vld [vmem:[%s0 + $0x4] sm:$0x1]
    %v989 = vld [vmem:[%s0 + $0x14] sm:$0x1]
    %v990 = vld [vmem:[%s0 + $0x24] sm:$0x1]
    %v991 = vld [vmem:[%s0 + $0x34] sm:$0x1]
    %v992 = vld [vmem:[%s0 + $0x44] sm:$0x1]
    %v993 = vld [vmem:[%s0 + $0x54] sm:$0x1]
    %v994 = vld [vmem:[%s0 + $0x64] sm:$0x1]
    %v995 = vld [vmem:[%s0 + $0x74] sm:$0x1]
    %996 = vmatpush.msra.mxu0 0.0
    %997 = vmatpush.msra.mxu0 0.0
    %998 = vmatpush.msra.mxu0 0.0
    %999 = vmatpush.msra.mxu0 0.0
    %1000 = vmatpush.msra.mxu0 0.0
    %1001 = vmatpush.msra.mxu0 0.0
    %1002 = vmatpush.msra.mxu0 0.0
    %1003 = vmatpush.msra.mxu0 0.0
    %1004 = vmatpush.msra.mxu0 0.0
    %1005 = vmatpush.msra.mxu0 0.0
    %1006 = vmatpush.msra.mxu0 0.0
    %1007 = vmatpush.msra.mxu0 0.0
    %1008 = vmatpush.msra.mxu0 %v41
    %1009 = vmatpush.msra.mxu0 %v40
    %1010 = vmatpush.msra.mxu0 %v39
    %1011 = vmatpush.msra.mxu0 %v38
    %1012 = vmatmul.f32.gmra.mxu0 %v902
    %v1013 = vpop.f32.mrf.mxu0
    %v1014 = vadd.f32 0.0, %v1013
    %1015 = vdwg.mxu0
    %v1024 = vrot.slane %v989, 7
    %v1025 = vsel %vm137, %v1024, %v988
    %v1026 = vrot.slane %v990, 6
    %v1027 = vsel %vm140, %v1026, %v1025
    %v1028 = vrot.slane %v991, 5
    %v1029 = vsel %vm143, %v1028, %v1027
    %v1030 = vrot.slane %v992, 4
    %v1031 = vsel %vm146, %v1030, %v1029
    %v1032 = vrot.slane %v993, 3
    %v1033 = vsel %vm149, %v1032, %v1031
    %v1034 = vrot.slane %v994, 2
    %v1035 = vsel %vm152, %v1034, %v1033
    %v1036 = vrot.slane %v995, 1
    %v1037 = vsel %vm155, %v1036, %v1035
    %v1038 = vsel %vm157, %v1037, 0
    %1040 = vmatpush.msra.mxu0 0.0
    %1041 = vmatpush.msra.mxu0 0.0
    %1042 = vmatpush.msra.mxu0 0.0
    %1043 = vmatpush.msra.mxu0 0.0
    %1044 = vmatpush.msra.mxu0 0.0
    %1045 = vmatpush.msra.mxu0 0.0
    %1046 = vmatpush.msra.mxu0 0.0
    %1047 = vmatpush.msra.mxu0 0.0
    %1048 = vmatpush.msra.mxu0 0.0
    %1049 = vmatpush.msra.mxu0 0.0
    %1050 = vmatpush.msra.mxu0 0.0
    %1051 = vmatpush.msra.mxu0 0.0
    %1052 = vmatpush.msra.mxu0 0.0
    %1053 = vmatpush.msra.mxu0 0.0
    %1054 = vmatpush.msra.mxu0 0.0
    %1055 = vmatpush.msra.mxu0 %v33
    %1056 = vmatmul.f32.gmra.mxu0 %v1038
    %v1057 = vpop.f32.mrf.mxu0
    %v1058 = vadd.f32 %v1014, %v1057
    %1059 = vdwg.mxu0
    %v1060 = vadd.f32 %v1058, %v181
    %v1061 = vxor.u32 %v1060, 2147483648
    %v1062 = vmul.f32 %v1061, 1.442695
    %v1063 = vpow.pop %v1062
    %v1064 = vadd.f32 %v1063, 1.0
    %v1065 = vrcp.pop %v1064
    %v1066 = vmul.f32 %v1064, %v1065
    %v1067 = vsub.f32 1.0, %v1066
    %v1068 = vmul.f32 %v1065, %v1067
    %v1069 = vadd.f32 %v1065, %v1068
    %vm1070 = vweird.f32 %v1064
    %vm1071 = vweird.f32 %v1065
    %vm1072 = vmor %vm1070, %vm1071
    %v1073 = vsel %vm1072, %v1065, %v1069
    %v1074 = vand.u32 2147483647, %v1064
    %vm1075 = vcmp.eq.f32.partialorder %v1074, 8.507059e+37
    %v1076 = vand.u32 %v1064, 2147483648
    %v1077 = vor.u32 1.1754944e-38, %v1076
    %v1078 = vsel %vm1075, %v1077, %v1073
    %v1079 = vmul.f32 1.0, %v1078
    %v1080 = vtanh.pop %v1060
    %v1081 = vmul.f32 %v1079, %v872
    %1083 = vrot.lane.b32.xlu0 %v1080, 64
    %v1084 = vpop.permute.xlu0 %1083
    %v1086 = vmul.f32 %v1079, %v1084
    %1088 = vrot.lane.b32.xlu0 %v1086, 32
    %v1089 = vpop.permute.xlu0 %1088
    %v1091 = vadd.f32 %v1081, %v1089
    %v1092 = vtanh.pop %v1091
    %1094 = vrot.lane.b32.xlu0 %v1092, 64
    %v1095 = vpop.permute.xlu0 %1094
    %v1097 = vmul.f32 %v1079, %v1095
    %1098 = vmatpush.msra.mxu0 0.0
    %1099 = vmatpush.msra.mxu0 0.0
    %1100 = vmatpush.msra.mxu0 0.0
    %1101 = vmatpush.msra.mxu0 0.0
    %1102 = vmatpush.msra.mxu0 0.0
    %1103 = vmatpush.msra.mxu0 0.0
    %1104 = vmatpush.msra.mxu0 0.0
    %1105 = vmatpush.msra.mxu0 0.0
    %1106 = vmatpush.msra.mxu0 0.0
    %1107 = vmatpush.msra.mxu0 0.0
    %1108 = vmatpush.msra.mxu0 0.0
    %1109 = vmatpush.msra.mxu0 0.0
    %1110 = vmatpush.msra.mxu0 %v45
    %1111 = vmatpush.msra.mxu0 %v44
    %1112 = vmatpush.msra.mxu0 %v43
    %1113 = vmatpush.msra.mxu0 %v42
    %1114 = vmatmul.f32.gmra.mxu0 %v965
    %v1115 = vpop.f32.mrf.mxu0
    %v1116 = vadd.f32 0.0, %v1115
    %1117 = vdwg.mxu0
    %1119 = vrot.lane.b32.xlu0 %v1097, 32
    %v1120 = vpop.permute.xlu0 %1119
    %v1121 = vsel %vm104, %v1120, 0
    %1123 = vmatpush.msra.mxu0 0.0
    %1124 = vmatpush.msra.mxu0 0.0
    %1125 = vmatpush.msra.mxu0 0.0
    %1126 = vmatpush.msra.mxu0 0.0
    %1127 = vmatpush.msra.mxu0 0.0
    %1128 = vmatpush.msra.mxu0 0.0
    %1129 = vmatpush.msra.mxu0 0.0
    %1130 = vmatpush.msra.mxu0 0.0
    %1131 = vmatpush.msra.mxu0 0.0
    %1132 = vmatpush.msra.mxu0 0.0
    %1133 = vmatpush.msra.mxu0 0.0
    %1134 = vmatpush.msra.mxu0 0.0
    %1135 = vmatpush.msra.mxu0 %v37
    %1136 = vmatpush.msra.mxu0 %v36
    %1137 = vmatpush.msra.mxu0 %v35
    %1138 = vmatpush.msra.mxu0 %v34
    %1139 = vmatmul.f32.gmra.mxu0 %v1121
    %v1140 = vpop.f32.mrf.mxu0
    %v1141 = vadd.f32 %v1116, %v1140
    %1142 = vdwg.mxu0
    %v1143 = vadd.f32 %v1141, %v267
    %v1144 = vxor.u32 %v1143, 2147483648
    %v1145 = vmul.f32 %v1144, 1.442695
    %v1146 = vpow.pop %v1145
    %v1147 = vadd.f32 %v1146, 1.0
    %v1148 = vrcp.pop %v1147
    %v1149 = vmul.f32 %v1147, %v1148
    %v1150 = vsub.f32 1.0, %v1149
    %v1151 = vmul.f32 %v1148, %v1150
    %v1152 = vadd.f32 %v1148, %v1151
    %vm1153 = vweird.f32 %v1147
    %vm1154 = vweird.f32 %v1148
    %vm1155 = vmor %vm1153, %vm1154
    %v1156 = vsel %vm1155, %v1148, %v1152
    %v1157 = vand.u32 2147483647, %v1147
    %vm1158 = vcmp.eq.f32.partialorder %v1157, 8.507059e+37
    %v1159 = vand.u32 %v1147, 2147483648
    %v1160 = vor.u32 1.1754944e-38, %v1159
    %v1161 = vsel %vm1158, %v1160, %v1156
    %v1162 = vmul.f32 1.0, %v1161
    %v1163 = vtanh.pop %v1143
    %v1164 = vmul.f32 %v1162, %v955
    %1166 = vrot.lane.b32.xlu0 %v1163, 64
    %v1167 = vpop.permute.xlu0 %1166
    %v1169 = vmul.f32 %v1162, %v1167
    %1171 = vrot.lane.b32.xlu0 %v1169, 32
    %v1172 = vpop.permute.xlu0 %1171
    %v1174 = vadd.f32 %v1164, %v1172
    %v1175 = vtanh.pop %v1174
    %1177 = vrot.lane.b32.xlu0 %v1175, 64
    %v1178 = vpop.permute.xlu0 %1177
    %v1180 = vmul.f32 %v1162, %v1178
    %1182 = vrot.lane.b32.xlu0 %v1180, 32
    %v1183 = vpop.permute.xlu0 %1182
    %v1184 = vsel %vm104, %v1183, 0
    %1186 = vmatpush.msra.mxu0 0.0
    %1187 = vmatpush.msra.mxu0 0.0
    %1188 = vmatpush.msra.mxu0 0.0
    %1189 = vmatpush.msra.mxu0 0.0
    %1190 = vmatpush.msra.mxu0 0.0
    %1191 = vmatpush.msra.mxu0 0.0
    %1192 = vmatpush.msra.mxu0 0.0
    %1193 = vmatpush.msra.mxu0 0.0
    %1194 = vmatpush.msra.mxu0 0.0
    %1195 = vmatpush.msra.mxu0 0.0
    %1196 = vmatpush.msra.mxu0 0.0
    %1197 = vmatpush.msra.mxu0 0.0
    %1198 = vmatpush.msra.mxu0 %v67
    %1199 = vmatpush.msra.mxu0 %v66
    %1200 = vmatpush.msra.mxu0 %v65
    %1201 = vmatpush.msra.mxu0 %v64
    %1202 = vmatmul.f32.gmra.mxu0 %v1184
    %v1203 = vpop.f32.mrf.mxu0
    %v1204 = vadd.f32 0.0, %v1203
    %1205 = vdwg.mxu0
    %v1206 = vadd.f32 %v987, %v1204
    %v1207 = vld [vmem:[%s0 + $0x5] sm:$0x1]
    %v1208 = vld [vmem:[%s0 + $0x15] sm:$0x1]
    %v1209 = vld [vmem:[%s0 + $0x25] sm:$0x1]
    %v1210 = vld [vmem:[%s0 + $0x35] sm:$0x1]
    %v1211 = vld [vmem:[%s0 + $0x45] sm:$0x1]
    %v1212 = vld [vmem:[%s0 + $0x55] sm:$0x1]
    %v1213 = vld [vmem:[%s0 + $0x65] sm:$0x1]
    %v1214 = vld [vmem:[%s0 + $0x75] sm:$0x1]
    %1215 = vmatpush.msra.mxu0 0.0
    %1216 = vmatpush.msra.mxu0 0.0
    %1217 = vmatpush.msra.mxu0 0.0
    %1218 = vmatpush.msra.mxu0 0.0
    %1219 = vmatpush.msra.mxu0 0.0
    %1220 = vmatpush.msra.mxu0 0.0
    %1221 = vmatpush.msra.mxu0 0.0
    %1222 = vmatpush.msra.mxu0 0.0
    %1223 = vmatpush.msra.mxu0 0.0
    %1224 = vmatpush.msra.mxu0 0.0
    %1225 = vmatpush.msra.mxu0 0.0
    %1226 = vmatpush.msra.mxu0 0.0
    %1227 = vmatpush.msra.mxu0 %v41
    %1228 = vmatpush.msra.mxu0 %v40
    %1229 = vmatpush.msra.mxu0 %v39
    %1230 = vmatpush.msra.mxu0 %v38
    %1231 = vmatmul.f32.gmra.mxu0 %v1121
    %v1232 = vpop.f32.mrf.mxu0
    %v1233 = vadd.f32 0.0, %v1232
    %1234 = vdwg.mxu0
    %v1243 = vrot.slane %v1208, 7
    %v1244 = vsel %vm137, %v1243, %v1207
    %v1245 = vrot.slane %v1209, 6
    %v1246 = vsel %vm140, %v1245, %v1244
    %v1247 = vrot.slane %v1210, 5
    %v1248 = vsel %vm143, %v1247, %v1246
    %v1249 = vrot.slane %v1211, 4
    %v1250 = vsel %vm146, %v1249, %v1248
    %v1251 = vrot.slane %v1212, 3
    %v1252 = vsel %vm149, %v1251, %v1250
    %v1253 = vrot.slane %v1213, 2
    %v1254 = vsel %vm152, %v1253, %v1252
    %v1255 = vrot.slane %v1214, 1
    %v1256 = vsel %vm155, %v1255, %v1254
    %v1257 = vsel %vm157, %v1256, 0
    %1259 = vmatpush.msra.mxu0 0.0
    %1260 = vmatpush.msra.mxu0 0.0
    %1261 = vmatpush.msra.mxu0 0.0
    %1262 = vmatpush.msra.mxu0 0.0
    %1263 = vmatpush.msra.mxu0 0.0
    %1264 = vmatpush.msra.mxu0 0.0
    %1265 = vmatpush.msra.mxu0 0.0
    %1266 = vmatpush.msra.mxu0 0.0
    %1267 = vmatpush.msra.mxu0 0.0
    %1268 = vmatpush.msra.mxu0 0.0
    %1269 = vmatpush.msra.mxu0 0.0
    %1270 = vmatpush.msra.mxu0 0.0
    %1271 = vmatpush.msra.mxu0 0.0
    %1272 = vmatpush.msra.mxu0 0.0
    %1273 = vmatpush.msra.mxu0 0.0
    %1274 = vmatpush.msra.mxu0 %v33
    %1275 = vmatmul.f32.gmra.mxu0 %v1257
    %v1276 = vpop.f32.mrf.mxu0
    %v1277 = vadd.f32 %v1233, %v1276
    %1278 = vdwg.mxu0
    %v1279 = vadd.f32 %v1277, %v181
    %v1280 = vxor.u32 %v1279, 2147483648
    %v1281 = vmul.f32 %v1280, 1.442695
    %v1282 = vpow.pop %v1281
    %v1283 = vadd.f32 %v1282, 1.0
    %v1284 = vrcp.pop %v1283
    %v1285 = vmul.f32 %v1283, %v1284
    %v1286 = vsub.f32 1.0, %v1285
    %v1287 = vmul.f32 %v1284, %v1286
    %v1288 = vadd.f32 %v1284, %v1287
    %vm1289 = vweird.f32 %v1283
    %vm1290 = vweird.f32 %v1284
    %vm1291 = vmor %vm1289, %vm1290
    %v1292 = vsel %vm1291, %v1284, %v1288
    %v1293 = vand.u32 2147483647, %v1283
    %vm1294 = vcmp.eq.f32.partialorder %v1293, 8.507059e+37
    %v1295 = vand.u32 %v1283, 2147483648
    %v1296 = vor.u32 1.1754944e-38, %v1295
    %v1297 = vsel %vm1294, %v1296, %v1292
    %v1298 = vmul.f32 1.0, %v1297
    %v1299 = vtanh.pop %v1279
    %v1300 = vmul.f32 %v1298, %v1091
    %1302 = vrot.lane.b32.xlu0 %v1299, 64
    %v1303 = vpop.permute.xlu0 %1302
    %v1305 = vmul.f32 %v1298, %v1303
    %1307 = vrot.lane.b32.xlu0 %v1305, 32
    %v1308 = vpop.permute.xlu0 %1307
    %v1310 = vadd.f32 %v1300, %v1308
    %v1311 = vtanh.pop %v1310
    %1313 = vrot.lane.b32.xlu0 %v1311, 64
    %v1314 = vpop.permute.xlu0 %1313
    %v1316 = vmul.f32 %v1298, %v1314
    %1317 = vmatpush.msra.mxu0 0.0
    %1318 = vmatpush.msra.mxu0 0.0
    %1319 = vmatpush.msra.mxu0 0.0
    %1320 = vmatpush.msra.mxu0 0.0
    %1321 = vmatpush.msra.mxu0 0.0
    %1322 = vmatpush.msra.mxu0 0.0
    %1323 = vmatpush.msra.mxu0 0.0
    %1324 = vmatpush.msra.mxu0 0.0
    %1325 = vmatpush.msra.mxu0 0.0
    %1326 = vmatpush.msra.mxu0 0.0
    %1327 = vmatpush.msra.mxu0 0.0
    %1328 = vmatpush.msra.mxu0 0.0
    %1329 = vmatpush.msra.mxu0 %v45
    %1330 = vmatpush.msra.mxu0 %v44
    %1331 = vmatpush.msra.mxu0 %v43
    %1332 = vmatpush.msra.mxu0 %v42
    %1333 = vmatmul.f32.gmra.mxu0 %v1184
    %v1334 = vpop.f32.mrf.mxu0
    %v1335 = vadd.f32 0.0, %v1334
    %1336 = vdwg.mxu0
    %1338 = vrot.lane.b32.xlu0 %v1316, 32
    %v1339 = vpop.permute.xlu0 %1338
    %v1340 = vsel %vm104, %v1339, 0
    %1342 = vmatpush.msra.mxu0 0.0
    %1343 = vmatpush.msra.mxu0 0.0
    %1344 = vmatpush.msra.mxu0 0.0
    %1345 = vmatpush.msra.mxu0 0.0
    %1346 = vmatpush.msra.mxu0 0.0
    %1347 = vmatpush.msra.mxu0 0.0
    %1348 = vmatpush.msra.mxu0 0.0
    %1349 = vmatpush.msra.mxu0 0.0
    %1350 = vmatpush.msra.mxu0 0.0
    %1351 = vmatpush.msra.mxu0 0.0
    %1352 = vmatpush.msra.mxu0 0.0
    %1353 = vmatpush.msra.mxu0 0.0
    %1354 = vmatpush.msra.mxu0 %v37
    %1355 = vmatpush.msra.mxu0 %v36
    %1356 = vmatpush.msra.mxu0 %v35
    %1357 = vmatpush.msra.mxu0 %v34
    %1358 = vmatmul.f32.gmra.mxu0 %v1340
    %v1359 = vpop.f32.mrf.mxu0
    %v1360 = vadd.f32 %v1335, %v1359
    %1361 = vdwg.mxu0
    %v1362 = vadd.f32 %v1360, %v267
    %v1363 = vxor.u32 %v1362, 2147483648
    %v1364 = vmul.f32 %v1363, 1.442695
    %v1365 = vpow.pop %v1364
    %v1366 = vadd.f32 %v1365, 1.0
    %v1367 = vrcp.pop %v1366
    %v1368 = vmul.f32 %v1366, %v1367
    %v1369 = vsub.f32 1.0, %v1368
    %v1370 = vmul.f32 %v1367, %v1369
    %v1371 = vadd.f32 %v1367, %v1370
    %vm1372 = vweird.f32 %v1366
    %vm1373 = vweird.f32 %v1367
    %vm1374 = vmor %vm1372, %vm1373
    %v1375 = vsel %vm1374, %v1367, %v1371
    %v1376 = vand.u32 2147483647, %v1366
    %vm1377 = vcmp.eq.f32.partialorder %v1376, 8.507059e+37
    %v1378 = vand.u32 %v1366, 2147483648
    %v1379 = vor.u32 1.1754944e-38, %v1378
    %v1380 = vsel %vm1377, %v1379, %v1375
    %v1381 = vmul.f32 1.0, %v1380
    %v1382 = vtanh.pop %v1362
    %v1383 = vmul.f32 %v1381, %v1174
    %1385 = vrot.lane.b32.xlu0 %v1382, 64
    %v1386 = vpop.permute.xlu0 %1385
    %v1388 = vmul.f32 %v1381, %v1386
    %1390 = vrot.lane.b32.xlu0 %v1388, 32
    %v1391 = vpop.permute.xlu0 %1390
    %v1393 = vadd.f32 %v1383, %v1391
    %v1394 = vtanh.pop %v1393
    %1396 = vrot.lane.b32.xlu0 %v1394, 64
    %v1397 = vpop.permute.xlu0 %1396
    %v1399 = vmul.f32 %v1381, %v1397
    %1401 = vrot.lane.b32.xlu0 %v1399, 32
    %v1402 = vpop.permute.xlu0 %1401
    %v1403 = vsel %vm104, %v1402, 0
    %1405 = vmatpush.msra.mxu0 0.0
    %1406 = vmatpush.msra.mxu0 0.0
    %1407 = vmatpush.msra.mxu0 0.0
    %1408 = vmatpush.msra.mxu0 0.0
    %1409 = vmatpush.msra.mxu0 0.0
    %1410 = vmatpush.msra.mxu0 0.0
    %1411 = vmatpush.msra.mxu0 0.0
    %1412 = vmatpush.msra.mxu0 0.0
    %1413 = vmatpush.msra.mxu0 0.0
    %1414 = vmatpush.msra.mxu0 0.0
    %1415 = vmatpush.msra.mxu0 0.0
    %1416 = vmatpush.msra.mxu0 0.0
    %1417 = vmatpush.msra.mxu0 %v71
    %1418 = vmatpush.msra.mxu0 %v70
    %1419 = vmatpush.msra.mxu0 %v69
    %1420 = vmatpush.msra.mxu0 %v68
    %1421 = vmatmul.f32.gmra.mxu0 %v1403
    %v1422 = vpop.f32.mrf.mxu0
    %v1423 = vadd.f32 0.0, %v1422
    %1424 = vdwg.mxu0
    %v1425 = vadd.f32 %v1206, %v1423
    %v1426 = vld [vmem:[%s0 + $0x6] sm:$0x1]
    %v1427 = vld [vmem:[%s0 + $0x16] sm:$0x1]
    %v1428 = vld [vmem:[%s0 + $0x26] sm:$0x1]
    %v1429 = vld [vmem:[%s0 + $0x36] sm:$0x1]
    %v1430 = vld [vmem:[%s0 + $0x46] sm:$0x1]
    %v1431 = vld [vmem:[%s0 + $0x56] sm:$0x1]
    %v1432 = vld [vmem:[%s0 + $0x66] sm:$0x1]
    %v1433 = vld [vmem:[%s0 + $0x76] sm:$0x1]
    %1434 = vmatpush.msra.mxu0 0.0
    %1435 = vmatpush.msra.mxu0 0.0
    %1436 = vmatpush.msra.mxu0 0.0
    %1437 = vmatpush.msra.mxu0 0.0
    %1438 = vmatpush.msra.mxu0 0.0
    %1439 = vmatpush.msra.mxu0 0.0
    %1440 = vmatpush.msra.mxu0 0.0
    %1441 = vmatpush.msra.mxu0 0.0
    %1442 = vmatpush.msra.mxu0 0.0
    %1443 = vmatpush.msra.mxu0 0.0
    %1444 = vmatpush.msra.mxu0 0.0
    %1445 = vmatpush.msra.mxu0 0.0
    %1446 = vmatpush.msra.mxu0 %v41
    %1447 = vmatpush.msra.mxu0 %v40
    %1448 = vmatpush.msra.mxu0 %v39
    %1449 = vmatpush.msra.mxu0 %v38
    %1450 = vmatmul.f32.gmra.mxu0 %v1340
    %v1451 = vpop.f32.mrf.mxu0
    %v1452 = vadd.f32 0.0, %v1451
    %1453 = vdwg.mxu0
    %v1462 = vrot.slane %v1427, 7
    %v1463 = vsel %vm137, %v1462, %v1426
    %v1464 = vrot.slane %v1428, 6
    %v1465 = vsel %vm140, %v1464, %v1463
    %v1466 = vrot.slane %v1429, 5
    %v1467 = vsel %vm143, %v1466, %v1465
    %v1468 = vrot.slane %v1430, 4
    %v1469 = vsel %vm146, %v1468, %v1467
    %v1470 = vrot.slane %v1431, 3
    %v1471 = vsel %vm149, %v1470, %v1469
    %v1472 = vrot.slane %v1432, 2
    %v1473 = vsel %vm152, %v1472, %v1471
    %v1474 = vrot.slane %v1433, 1
    %v1475 = vsel %vm155, %v1474, %v1473
    %v1476 = vsel %vm157, %v1475, 0
    %1478 = vmatpush.msra.mxu0 0.0
    %1479 = vmatpush.msra.mxu0 0.0
    %1480 = vmatpush.msra.mxu0 0.0
    %1481 = vmatpush.msra.mxu0 0.0
    %1482 = vmatpush.msra.mxu0 0.0
    %1483 = vmatpush.msra.mxu0 0.0
    %1484 = vmatpush.msra.mxu0 0.0
    %1485 = vmatpush.msra.mxu0 0.0
    %1486 = vmatpush.msra.mxu0 0.0
    %1487 = vmatpush.msra.mxu0 0.0
    %1488 = vmatpush.msra.mxu0 0.0
    %1489 = vmatpush.msra.mxu0 0.0
    %1490 = vmatpush.msra.mxu0 0.0
    %1491 = vmatpush.msra.mxu0 0.0
    %1492 = vmatpush.msra.mxu0 0.0
    %1493 = vmatpush.msra.mxu0 %v33
    %1494 = vmatmul.f32.gmra.mxu0 %v1476
    %v1495 = vpop.f32.mrf.mxu0
    %v1496 = vadd.f32 %v1452, %v1495
    %1497 = vdwg.mxu0
    %v1498 = vadd.f32 %v1496, %v181
    %v1499 = vxor.u32 %v1498, 2147483648
    %v1500 = vmul.f32 %v1499, 1.442695
    %v1501 = vpow.pop %v1500
    %v1502 = vadd.f32 %v1501, 1.0
    %v1503 = vrcp.pop %v1502
    %v1504 = vmul.f32 %v1502, %v1503
    %v1505 = vsub.f32 1.0, %v1504
    %v1506 = vmul.f32 %v1503, %v1505
    %v1507 = vadd.f32 %v1503, %v1506
    %vm1508 = vweird.f32 %v1502
    %vm1509 = vweird.f32 %v1503
    %vm1510 = vmor %vm1508, %vm1509
    %v1511 = vsel %vm1510, %v1503, %v1507
    %v1512 = vand.u32 2147483647, %v1502
    %vm1513 = vcmp.eq.f32.partialorder %v1512, 8.507059e+37
    %v1514 = vand.u32 %v1502, 2147483648
    %v1515 = vor.u32 1.1754944e-38, %v1514
    %v1516 = vsel %vm1513, %v1515, %v1511
    %v1517 = vmul.f32 1.0, %v1516
    %v1518 = vtanh.pop %v1498
    %v1519 = vmul.f32 %v1517, %v1310
    %1521 = vrot.lane.b32.xlu0 %v1518, 64
    %v1522 = vpop.permute.xlu0 %1521
    %v1524 = vmul.f32 %v1517, %v1522
    %1526 = vrot.lane.b32.xlu0 %v1524, 32
    %v1527 = vpop.permute.xlu0 %1526
    %v1529 = vadd.f32 %v1519, %v1527
    %v1530 = vtanh.pop %v1529
    %1532 = vrot.lane.b32.xlu0 %v1530, 64
    %v1533 = vpop.permute.xlu0 %1532
    %v1535 = vmul.f32 %v1517, %v1533
    %1536 = vmatpush.msra.mxu0 0.0
    %1537 = vmatpush.msra.mxu0 0.0
    %1538 = vmatpush.msra.mxu0 0.0
    %1539 = vmatpush.msra.mxu0 0.0
    %1540 = vmatpush.msra.mxu0 0.0
    %1541 = vmatpush.msra.mxu0 0.0
    %1542 = vmatpush.msra.mxu0 0.0
    %1543 = vmatpush.msra.mxu0 0.0
    %1544 = vmatpush.msra.mxu0 0.0
    %1545 = vmatpush.msra.mxu0 0.0
    %1546 = vmatpush.msra.mxu0 0.0
    %1547 = vmatpush.msra.mxu0 0.0
    %1548 = vmatpush.msra.mxu0 %v45
    %1549 = vmatpush.msra.mxu0 %v44
    %1550 = vmatpush.msra.mxu0 %v43
    %1551 = vmatpush.msra.mxu0 %v42
    %1552 = vmatmul.f32.gmra.mxu0 %v1403
    %v1553 = vpop.f32.mrf.mxu0
    %v1554 = vadd.f32 0.0, %v1553
    %1555 = vdwg.mxu0
    %1557 = vrot.lane.b32.xlu0 %v1535, 32
    %v1558 = vpop.permute.xlu0 %1557
    %v1559 = vsel %vm104, %v1558, 0
    %1561 = vmatpush.msra.mxu0 0.0
    %1562 = vmatpush.msra.mxu0 0.0
    %1563 = vmatpush.msra.mxu0 0.0
    %1564 = vmatpush.msra.mxu0 0.0
    %1565 = vmatpush.msra.mxu0 0.0
    %1566 = vmatpush.msra.mxu0 0.0
    %1567 = vmatpush.msra.mxu0 0.0
    %1568 = vmatpush.msra.mxu0 0.0
    %1569 = vmatpush.msra.mxu0 0.0
    %1570 = vmatpush.msra.mxu0 0.0
    %1571 = vmatpush.msra.mxu0 0.0
    %1572 = vmatpush.msra.mxu0 0.0
    %1573 = vmatpush.msra.mxu0 %v37
    %1574 = vmatpush.msra.mxu0 %v36
    %1575 = vmatpush.msra.mxu0 %v35
    %1576 = vmatpush.msra.mxu0 %v34
    %1577 = vmatmul.f32.gmra.mxu0 %v1559
    %v1578 = vpop.f32.mrf.mxu0
    %v1579 = vadd.f32 %v1554, %v1578
    %1580 = vdwg.mxu0
    %v1581 = vadd.f32 %v1579, %v267
    %v1582 = vxor.u32 %v1581, 2147483648
    %v1583 = vmul.f32 %v1582, 1.442695
    %v1584 = vpow.pop %v1583
    %v1585 = vadd.f32 %v1584, 1.0
    %v1586 = vrcp.pop %v1585
    %v1587 = vmul.f32 %v1585, %v1586
    %v1588 = vsub.f32 1.0, %v1587
    %v1589 = vmul.f32 %v1586, %v1588
    %v1590 = vadd.f32 %v1586, %v1589
    %vm1591 = vweird.f32 %v1585
    %vm1592 = vweird.f32 %v1586
    %vm1593 = vmor %vm1591, %vm1592
    %v1594 = vsel %vm1593, %v1586, %v1590
    %v1595 = vand.u32 2147483647, %v1585
    %vm1596 = vcmp.eq.f32.partialorder %v1595, 8.507059e+37
    %v1597 = vand.u32 %v1585, 2147483648
    %v1598 = vor.u32 1.1754944e-38, %v1597
    %v1599 = vsel %vm1596, %v1598, %v1594
    %v1600 = vmul.f32 1.0, %v1599
    %v1601 = vtanh.pop %v1581
    %v1602 = vmul.f32 %v1600, %v1393
    %1604 = vrot.lane.b32.xlu0 %v1601, 64
    %v1605 = vpop.permute.xlu0 %1604
    %v1607 = vmul.f32 %v1600, %v1605
    %1609 = vrot.lane.b32.xlu0 %v1607, 32
    %v1610 = vpop.permute.xlu0 %1609
    %v1612 = vadd.f32 %v1602, %v1610
    %v1613 = vtanh.pop %v1612
    %1615 = vrot.lane.b32.xlu0 %v1613, 64
    %v1616 = vpop.permute.xlu0 %1615
    %v1618 = vmul.f32 %v1600, %v1616
    %1620 = vrot.lane.b32.xlu0 %v1618, 32
    %v1621 = vpop.permute.xlu0 %1620
    %v1622 = vsel %vm104, %v1621, 0
    %1624 = vmatpush.msra.mxu0 0.0
    %1625 = vmatpush.msra.mxu0 0.0
    %1626 = vmatpush.msra.mxu0 0.0
    %1627 = vmatpush.msra.mxu0 0.0
    %1628 = vmatpush.msra.mxu0 0.0
    %1629 = vmatpush.msra.mxu0 0.0
    %1630 = vmatpush.msra.mxu0 0.0
    %1631 = vmatpush.msra.mxu0 0.0
    %1632 = vmatpush.msra.mxu0 0.0
    %1633 = vmatpush.msra.mxu0 0.0
    %1634 = vmatpush.msra.mxu0 0.0
    %1635 = vmatpush.msra.mxu0 0.0
    %1636 = vmatpush.msra.mxu0 %v75
    %1637 = vmatpush.msra.mxu0 %v74
    %1638 = vmatpush.msra.mxu0 %v73
    %1639 = vmatpush.msra.mxu0 %v72
    %1640 = vmatmul.f32.gmra.mxu0 %v1622
    %v1641 = vpop.f32.mrf.mxu0
    %v1642 = vadd.f32 0.0, %v1641
    %1643 = vdwg.mxu0
    %v1644 = vadd.f32 %v1425, %v1642
    %v1645 = vld [vmem:[%s0 + $0x7] sm:$0x1]
    %v1646 = vld [vmem:[%s0 + $0x17] sm:$0x1]
    %v1647 = vld [vmem:[%s0 + $0x27] sm:$0x1]
    %v1648 = vld [vmem:[%s0 + $0x37] sm:$0x1]
    %v1649 = vld [vmem:[%s0 + $0x47] sm:$0x1]
    %v1650 = vld [vmem:[%s0 + $0x57] sm:$0x1]
    %v1651 = vld [vmem:[%s0 + $0x67] sm:$0x1]
    %v1652 = vld [vmem:[%s0 + $0x77] sm:$0x1]
    %1653 = vmatpush.msra.mxu0 0.0
    %1654 = vmatpush.msra.mxu0 0.0
    %1655 = vmatpush.msra.mxu0 0.0
    %1656 = vmatpush.msra.mxu0 0.0
    %1657 = vmatpush.msra.mxu0 0.0
    %1658 = vmatpush.msra.mxu0 0.0
    %1659 = vmatpush.msra.mxu0 0.0
    %1660 = vmatpush.msra.mxu0 0.0
    %1661 = vmatpush.msra.mxu0 0.0
    %1662 = vmatpush.msra.mxu0 0.0
    %1663 = vmatpush.msra.mxu0 0.0
    %1664 = vmatpush.msra.mxu0 0.0
    %1665 = vmatpush.msra.mxu0 %v41
    %1666 = vmatpush.msra.mxu0 %v40
    %1667 = vmatpush.msra.mxu0 %v39
    %1668 = vmatpush.msra.mxu0 %v38
    %1669 = vmatmul.f32.gmra.mxu0 %v1559
    %v1670 = vpop.f32.mrf.mxu0
    %v1671 = vadd.f32 0.0, %v1670
    %1672 = vdwg.mxu0
    %v1681 = vrot.slane %v1646, 7
    %v1682 = vsel %vm137, %v1681, %v1645
    %v1683 = vrot.slane %v1647, 6
    %v1684 = vsel %vm140, %v1683, %v1682
    %v1685 = vrot.slane %v1648, 5
    %v1686 = vsel %vm143, %v1685, %v1684
    %v1687 = vrot.slane %v1649, 4
    %v1688 = vsel %vm146, %v1687, %v1686
    %v1689 = vrot.slane %v1650, 3
    %v1690 = vsel %vm149, %v1689, %v1688
    %v1691 = vrot.slane %v1651, 2
    %v1692 = vsel %vm152, %v1691, %v1690
    %v1693 = vrot.slane %v1652, 1
    %v1694 = vsel %vm155, %v1693, %v1692
    %v1695 = vsel %vm157, %v1694, 0
    %1697 = vmatpush.msra.mxu0 0.0
    %1698 = vmatpush.msra.mxu0 0.0
    %1699 = vmatpush.msra.mxu0 0.0
    %1700 = vmatpush.msra.mxu0 0.0
    %1701 = vmatpush.msra.mxu0 0.0
    %1702 = vmatpush.msra.mxu0 0.0
    %1703 = vmatpush.msra.mxu0 0.0
    %1704 = vmatpush.msra.mxu0 0.0
    %1705 = vmatpush.msra.mxu0 0.0
    %1706 = vmatpush.msra.mxu0 0.0
    %1707 = vmatpush.msra.mxu0 0.0
    %1708 = vmatpush.msra.mxu0 0.0
    %1709 = vmatpush.msra.mxu0 0.0
    %1710 = vmatpush.msra.mxu0 0.0
    %1711 = vmatpush.msra.mxu0 0.0
    %1712 = vmatpush.msra.mxu0 %v33
    %1713 = vmatmul.f32.gmra.mxu0 %v1695
    %v1714 = vpop.f32.mrf.mxu0
    %v1715 = vadd.f32 %v1671, %v1714
    %1716 = vdwg.mxu0
    %v1717 = vadd.f32 %v1715, %v181
    %v1718 = vxor.u32 %v1717, 2147483648
    %v1719 = vmul.f32 %v1718, 1.442695
    %v1720 = vpow.pop %v1719
    %v1721 = vadd.f32 %v1720, 1.0
    %v1722 = vrcp.pop %v1721
    %v1723 = vmul.f32 %v1721, %v1722
    %v1724 = vsub.f32 1.0, %v1723
    %v1725 = vmul.f32 %v1722, %v1724
    %v1726 = vadd.f32 %v1722, %v1725
    %vm1727 = vweird.f32 %v1721
    %vm1728 = vweird.f32 %v1722
    %vm1729 = vmor %vm1727, %vm1728
    %v1730 = vsel %vm1729, %v1722, %v1726
    %v1731 = vand.u32 2147483647, %v1721
    %vm1732 = vcmp.eq.f32.partialorder %v1731, 8.507059e+37
    %v1733 = vand.u32 %v1721, 2147483648
    %v1734 = vor.u32 1.1754944e-38, %v1733
    %v1735 = vsel %vm1732, %v1734, %v1730
    %v1736 = vmul.f32 1.0, %v1735
    %v1737 = vtanh.pop %v1717
    %v1738 = vmul.f32 %v1736, %v1529
    %1740 = vrot.lane.b32.xlu0 %v1737, 64
    %v1741 = vpop.permute.xlu0 %1740
    %v1743 = vmul.f32 %v1736, %v1741
    %1745 = vrot.lane.b32.xlu0 %v1743, 32
    %v1746 = vpop.permute.xlu0 %1745
    %v1748 = vadd.f32 %v1738, %v1746
    %v1749 = vtanh.pop %v1748
    %1751 = vrot.lane.b32.xlu0 %v1749, 64
    %v1752 = vpop.permute.xlu0 %1751
    %v1754 = vmul.f32 %v1736, %v1752
    %1755 = vmatpush.msra.mxu0 0.0
    %1756 = vmatpush.msra.mxu0 0.0
    %1757 = vmatpush.msra.mxu0 0.0
    %1758 = vmatpush.msra.mxu0 0.0
    %1759 = vmatpush.msra.mxu0 0.0
    %1760 = vmatpush.msra.mxu0 0.0
    %1761 = vmatpush.msra.mxu0 0.0
    %1762 = vmatpush.msra.mxu0 0.0
    %1763 = vmatpush.msra.mxu0 0.0
    %1764 = vmatpush.msra.mxu0 0.0
    %1765 = vmatpush.msra.mxu0 0.0
    %1766 = vmatpush.msra.mxu0 0.0
    %1767 = vmatpush.msra.mxu0 %v45
    %1768 = vmatpush.msra.mxu0 %v44
    %1769 = vmatpush.msra.mxu0 %v43
    %1770 = vmatpush.msra.mxu0 %v42
    %1771 = vmatmul.f32.gmra.mxu0 %v1622
    %v1772 = vpop.f32.mrf.mxu0
    %v1773 = vadd.f32 0.0, %v1772
    %1774 = vdwg.mxu0
    %1776 = vrot.lane.b32.xlu0 %v1754, 32
    %v1777 = vpop.permute.xlu0 %1776
    %v1778 = vsel %vm104, %v1777, 0
    %1780 = vmatpush.msra.mxu0 0.0
    %1781 = vmatpush.msra.mxu0 0.0
    %1782 = vmatpush.msra.mxu0 0.0
    %1783 = vmatpush.msra.mxu0 0.0
    %1784 = vmatpush.msra.mxu0 0.0
    %1785 = vmatpush.msra.mxu0 0.0
    %1786 = vmatpush.msra.mxu0 0.0
    %1787 = vmatpush.msra.mxu0 0.0
    %1788 = vmatpush.msra.mxu0 0.0
    %1789 = vmatpush.msra.mxu0 0.0
    %1790 = vmatpush.msra.mxu0 0.0
    %1791 = vmatpush.msra.mxu0 0.0
    %1792 = vmatpush.msra.mxu0 %v37
    %1793 = vmatpush.msra.mxu0 %v36
    %1794 = vmatpush.msra.mxu0 %v35
    %1795 = vmatpush.msra.mxu0 %v34
    %1796 = vmatmul.f32.gmra.mxu0 %v1778
    %v1797 = vpop.f32.mrf.mxu0
    %v1798 = vadd.f32 %v1773, %v1797
    %1799 = vdwg.mxu0
    %v1800 = vadd.f32 %v1798, %v267
    %v1801 = vxor.u32 %v1800, 2147483648
    %v1802 = vmul.f32 %v1801, 1.442695
    %v1803 = vpow.pop %v1802
    %v1804 = vadd.f32 %v1803, 1.0
    %v1805 = vrcp.pop %v1804
    %v1806 = vmul.f32 %v1804, %v1805
    %v1807 = vsub.f32 1.0, %v1806
    %v1808 = vmul.f32 %v1805, %v1807
    %v1809 = vadd.f32 %v1805, %v1808
    %vm1810 = vweird.f32 %v1804
    %vm1811 = vweird.f32 %v1805
    %vm1812 = vmor %vm1810, %vm1811
    %v1813 = vsel %vm1812, %v1805, %v1809
    %v1814 = vand.u32 2147483647, %v1804
    %vm1815 = vcmp.eq.f32.partialorder %v1814, 8.507059e+37
    %v1816 = vand.u32 %v1804, 2147483648
    %v1817 = vor.u32 1.1754944e-38, %v1816
    %v1818 = vsel %vm1815, %v1817, %v1813
    %v1819 = vmul.f32 1.0, %v1818
    %v1820 = vtanh.pop %v1800
    %v1821 = vmul.f32 %v1819, %v1612
    %1823 = vrot.lane.b32.xlu0 %v1820, 64
    %v1824 = vpop.permute.xlu0 %1823
    %v1826 = vmul.f32 %v1819, %v1824
    %1828 = vrot.lane.b32.xlu0 %v1826, 32
    %v1829 = vpop.permute.xlu0 %1828
    %v1831 = vadd.f32 %v1821, %v1829
    %v1832 = vtanh.pop %v1831
    %1834 = vrot.lane.b32.xlu0 %v1832, 64
    %v1835 = vpop.permute.xlu0 %1834
    %v1837 = vmul.f32 %v1819, %v1835
    %1839 = vrot.lane.b32.xlu0 %v1837, 32
    %v1840 = vpop.permute.xlu0 %1839
    %v1841 = vsel %vm104, %v1840, 0
    %1843 = vmatpush.msra.mxu0 0.0
    %1844 = vmatpush.msra.mxu0 0.0
    %1845 = vmatpush.msra.mxu0 0.0
    %1846 = vmatpush.msra.mxu0 0.0
    %1847 = vmatpush.msra.mxu0 0.0
    %1848 = vmatpush.msra.mxu0 0.0
    %1849 = vmatpush.msra.mxu0 0.0
    %1850 = vmatpush.msra.mxu0 0.0
    %1851 = vmatpush.msra.mxu0 0.0
    %1852 = vmatpush.msra.mxu0 0.0
    %1853 = vmatpush.msra.mxu0 0.0
    %1854 = vmatpush.msra.mxu0 0.0
    %1855 = vmatpush.msra.mxu0 %v79
    %1856 = vmatpush.msra.mxu0 %v78
    %1857 = vmatpush.msra.mxu0 %v77
    %1858 = vmatpush.msra.mxu0 %v76
    %1859 = vmatmul.f32.gmra.mxu0 %v1841
    %v1860 = vpop.f32.mrf.mxu0
    %v1861 = vadd.f32 0.0, %v1860
    %1862 = vdwg.mxu0
    %v1863 = vadd.f32 %v1644, %v1861
    %v1864 = vld [vmem:[%s0 + $0x8] sm:$0x1]
    %v1865 = vld [vmem:[%s0 + $0x18] sm:$0x1]
    %v1866 = vld [vmem:[%s0 + $0x28] sm:$0x1]
    %v1867 = vld [vmem:[%s0 + $0x38] sm:$0x1]
    %v1868 = vld [vmem:[%s0 + $0x48] sm:$0x1]
    %v1869 = vld [vmem:[%s0 + $0x58] sm:$0x1]
    %v1870 = vld [vmem:[%s0 + $0x68] sm:$0x1]
    %v1871 = vld [vmem:[%s0 + $0x78] sm:$0x1]
    %1872 = vmatpush.msra.mxu0 0.0
    %1873 = vmatpush.msra.mxu0 0.0
    %1874 = vmatpush.msra.mxu0 0.0
    %1875 = vmatpush.msra.mxu0 0.0
    %1876 = vmatpush.msra.mxu0 0.0
    %1877 = vmatpush.msra.mxu0 0.0
    %1878 = vmatpush.msra.mxu0 0.0
    %1879 = vmatpush.msra.mxu0 0.0
    %1880 = vmatpush.msra.mxu0 0.0
    %1881 = vmatpush.msra.mxu0 0.0
    %1882 = vmatpush.msra.mxu0 0.0
    %1883 = vmatpush.msra.mxu0 0.0
    %1884 = vmatpush.msra.mxu0 %v41
    %1885 = vmatpush.msra.mxu0 %v40
    %1886 = vmatpush.msra.mxu0 %v39
    %1887 = vmatpush.msra.mxu0 %v38
    %1888 = vmatmul.f32.gmra.mxu0 %v1778
    %v1889 = vpop.f32.mrf.mxu0
    %v1890 = vadd.f32 0.0, %v1889
    %1891 = vdwg.mxu0
    %v1900 = vrot.slane %v1865, 7
    %v1901 = vsel %vm137, %v1900, %v1864
    %v1902 = vrot.slane %v1866, 6
    %v1903 = vsel %vm140, %v1902, %v1901
    %v1904 = vrot.slane %v1867, 5
    %v1905 = vsel %vm143, %v1904, %v1903
    %v1906 = vrot.slane %v1868, 4
    %v1907 = vsel %vm146, %v1906, %v1905
    %v1908 = vrot.slane %v1869, 3
    %v1909 = vsel %vm149, %v1908, %v1907
    %v1910 = vrot.slane %v1870, 2
    %v1911 = vsel %vm152, %v1910, %v1909
    %v1912 = vrot.slane %v1871, 1
    %v1913 = vsel %vm155, %v1912, %v1911
    %v1914 = vsel %vm157, %v1913, 0
    %1916 = vmatpush.msra.mxu0 0.0
    %1917 = vmatpush.msra.mxu0 0.0
    %1918 = vmatpush.msra.mxu0 0.0
    %1919 = vmatpush.msra.mxu0 0.0
    %1920 = vmatpush.msra.mxu0 0.0
    %1921 = vmatpush.msra.mxu0 0.0
    %1922 = vmatpush.msra.mxu0 0.0
    %1923 = vmatpush.msra.mxu0 0.0
    %1924 = vmatpush.msra.mxu0 0.0
    %1925 = vmatpush.msra.mxu0 0.0
    %1926 = vmatpush.msra.mxu0 0.0
    %1927 = vmatpush.msra.mxu0 0.0
    %1928 = vmatpush.msra.mxu0 0.0
    %1929 = vmatpush.msra.mxu0 0.0
    %1930 = vmatpush.msra.mxu0 0.0
    %1931 = vmatpush.msra.mxu0 %v33
    %1932 = vmatmul.f32.gmra.mxu0 %v1914
    %v1933 = vpop.f32.mrf.mxu0
    %v1934 = vadd.f32 %v1890, %v1933
    %1935 = vdwg.mxu0
    %v1936 = vadd.f32 %v1934, %v181
    %v1937 = vxor.u32 %v1936, 2147483648
    %v1938 = vmul.f32 %v1937, 1.442695
    %v1939 = vpow.pop %v1938
    %v1940 = vadd.f32 %v1939, 1.0
    %v1941 = vrcp.pop %v1940
    %v1942 = vmul.f32 %v1940, %v1941
    %v1943 = vsub.f32 1.0, %v1942
    %v1944 = vmul.f32 %v1941, %v1943
    %v1945 = vadd.f32 %v1941, %v1944
    %vm1946 = vweird.f32 %v1940
    %vm1947 = vweird.f32 %v1941
    %vm1948 = vmor %vm1946, %vm1947
    %v1949 = vsel %vm1948, %v1941, %v1945
    %v1950 = vand.u32 2147483647, %v1940
    %vm1951 = vcmp.eq.f32.partialorder %v1950, 8.507059e+37
    %v1952 = vand.u32 %v1940, 2147483648
    %v1953 = vor.u32 1.1754944e-38, %v1952
    %v1954 = vsel %vm1951, %v1953, %v1949
    %v1955 = vmul.f32 1.0, %v1954
    %v1956 = vtanh.pop %v1936
    %v1957 = vmul.f32 %v1955, %v1748
    %1959 = vrot.lane.b32.xlu0 %v1956, 64
    %v1960 = vpop.permute.xlu0 %1959
    %v1962 = vmul.f32 %v1955, %v1960
    %1964 = vrot.lane.b32.xlu0 %v1962, 32
    %v1965 = vpop.permute.xlu0 %1964
    %v1967 = vadd.f32 %v1957, %v1965
    %v1968 = vtanh.pop %v1967
    %1970 = vrot.lane.b32.xlu0 %v1968, 64
    %v1971 = vpop.permute.xlu0 %1970
    %v1973 = vmul.f32 %v1955, %v1971
    %1974 = vmatpush.msra.mxu0 0.0
    %1975 = vmatpush.msra.mxu0 0.0
    %1976 = vmatpush.msra.mxu0 0.0
    %1977 = vmatpush.msra.mxu0 0.0
    %1978 = vmatpush.msra.mxu0 0.0
    %1979 = vmatpush.msra.mxu0 0.0
    %1980 = vmatpush.msra.mxu0 0.0
    %1981 = vmatpush.msra.mxu0 0.0
    %1982 = vmatpush.msra.mxu0 0.0
    %1983 = vmatpush.msra.mxu0 0.0
    %1984 = vmatpush.msra.mxu0 0.0
    %1985 = vmatpush.msra.mxu0 0.0
    %1986 = vmatpush.msra.mxu0 %v45
    %1987 = vmatpush.msra.mxu0 %v44
    %1988 = vmatpush.msra.mxu0 %v43
    %1989 = vmatpush.msra.mxu0 %v42
    %1990 = vmatmul.f32.gmra.mxu0 %v1841
    %v1991 = vpop.f32.mrf.mxu0
    %v1992 = vadd.f32 0.0, %v1991
    %1993 = vdwg.mxu0
    %1995 = vrot.lane.b32.xlu0 %v1973, 32
    %v1996 = vpop.permute.xlu0 %1995
    %v1997 = vsel %vm104, %v1996, 0
    %1999 = vmatpush.msra.mxu0 0.0
    %2000 = vmatpush.msra.mxu0 0.0
    %2001 = vmatpush.msra.mxu0 0.0
    %2002 = vmatpush.msra.mxu0 0.0
    %2003 = vmatpush.msra.mxu0 0.0
    %2004 = vmatpush.msra.mxu0 0.0
    %2005 = vmatpush.msra.mxu0 0.0
    %2006 = vmatpush.msra.mxu0 0.0
    %2007 = vmatpush.msra.mxu0 0.0
    %2008 = vmatpush.msra.mxu0 0.0
    %2009 = vmatpush.msra.mxu0 0.0
    %2010 = vmatpush.msra.mxu0 0.0
    %2011 = vmatpush.msra.mxu0 %v37
    %2012 = vmatpush.msra.mxu0 %v36
    %2013 = vmatpush.msra.mxu0 %v35
    %2014 = vmatpush.msra.mxu0 %v34
    %2015 = vmatmul.f32.gmra.mxu0 %v1997
    %v2016 = vpop.f32.mrf.mxu0
    %v2017 = vadd.f32 %v1992, %v2016
    %2018 = vdwg.mxu0
    %v2019 = vadd.f32 %v2017, %v267
    %v2020 = vxor.u32 %v2019, 2147483648
    %v2021 = vmul.f32 %v2020, 1.442695
    %v2022 = vpow.pop %v2021
    %v2023 = vadd.f32 %v2022, 1.0
    %v2024 = vrcp.pop %v2023
    %v2025 = vmul.f32 %v2023, %v2024
    %v2026 = vsub.f32 1.0, %v2025
    %v2027 = vmul.f32 %v2024, %v2026
    %v2028 = vadd.f32 %v2024, %v2027
    %vm2029 = vweird.f32 %v2023
    %vm2030 = vweird.f32 %v2024
    %vm2031 = vmor %vm2029, %vm2030
    %v2032 = vsel %vm2031, %v2024, %v2028
    %v2033 = vand.u32 2147483647, %v2023
    %vm2034 = vcmp.eq.f32.partialorder %v2033, 8.507059e+37
    %v2035 = vand.u32 %v2023, 2147483648
    %v2036 = vor.u32 1.1754944e-38, %v2035
    %v2037 = vsel %vm2034, %v2036, %v2032
    %v2038 = vmul.f32 1.0, %v2037
    %v2039 = vtanh.pop %v2019
    %v2040 = vmul.f32 %v2038, %v1831
    %2042 = vrot.lane.b32.xlu0 %v2039, 64
    %v2043 = vpop.permute.xlu0 %2042
    %v2045 = vmul.f32 %v2038, %v2043
    %2047 = vrot.lane.b32.xlu0 %v2045, 32
    %v2048 = vpop.permute.xlu0 %2047
    %v2050 = vadd.f32 %v2040, %v2048
    %v2051 = vtanh.pop %v2050
    %2053 = vrot.lane.b32.xlu0 %v2051, 64
    %v2054 = vpop.permute.xlu0 %2053
    %v2056 = vmul.f32 %v2038, %v2054
    %2058 = vrot.lane.b32.xlu0 %v2056, 32
    %v2059 = vpop.permute.xlu0 %2058
    %v2060 = vsel %vm104, %v2059, 0
    %2062 = vmatpush.msra.mxu0 0.0
    %2063 = vmatpush.msra.mxu0 0.0
    %2064 = vmatpush.msra.mxu0 0.0
    %2065 = vmatpush.msra.mxu0 0.0
    %2066 = vmatpush.msra.mxu0 0.0
    %2067 = vmatpush.msra.mxu0 0.0
    %2068 = vmatpush.msra.mxu0 0.0
    %2069 = vmatpush.msra.mxu0 0.0
    %2070 = vmatpush.msra.mxu0 0.0
    %2071 = vmatpush.msra.mxu0 0.0
    %2072 = vmatpush.msra.mxu0 0.0
    %2073 = vmatpush.msra.mxu0 0.0
    %2074 = vmatpush.msra.mxu0 %v83
    %2075 = vmatpush.msra.mxu0 %v82
    %2076 = vmatpush.msra.mxu0 %v81
    %2077 = vmatpush.msra.mxu0 %v80
    %2078 = vmatmul.f32.gmra.mxu0 %v2060
    %v2079 = vpop.f32.mrf.mxu0
    %v2080 = vadd.f32 0.0, %v2079
    %2081 = vdwg.mxu0
    %v2082 = vadd.f32 %v1863, %v2080
    %v2083 = vld [vmem:[%s0 + $0x9] sm:$0x1]
    %v2084 = vld [vmem:[%s0 + $0x19] sm:$0x1]
    %v2085 = vld [vmem:[%s0 + $0x29] sm:$0x1]
    %v2086 = vld [vmem:[%s0 + $0x39] sm:$0x1]
    %v2087 = vld [vmem:[%s0 + $0x49] sm:$0x1]
    %v2088 = vld [vmem:[%s0 + $0x59] sm:$0x1]
    %v2089 = vld [vmem:[%s0 + $0x69] sm:$0x1]
    %v2090 = vld [vmem:[%s0 + $0x79] sm:$0x1]
    %2091 = vmatpush.msra.mxu0 0.0
    %2092 = vmatpush.msra.mxu0 0.0
    %2093 = vmatpush.msra.mxu0 0.0
    %2094 = vmatpush.msra.mxu0 0.0
    %2095 = vmatpush.msra.mxu0 0.0
    %2096 = vmatpush.msra.mxu0 0.0
    %2097 = vmatpush.msra.mxu0 0.0
    %2098 = vmatpush.msra.mxu0 0.0
    %2099 = vmatpush.msra.mxu0 0.0
    %2100 = vmatpush.msra.mxu0 0.0
    %2101 = vmatpush.msra.mxu0 0.0
    %2102 = vmatpush.msra.mxu0 0.0
    %2103 = vmatpush.msra.mxu0 %v41
    %2104 = vmatpush.msra.mxu0 %v40
    %2105 = vmatpush.msra.mxu0 %v39
    %2106 = vmatpush.msra.mxu0 %v38
    %2107 = vmatmul.f32.gmra.mxu0 %v1997
    %v2108 = vpop.f32.mrf.mxu0
    %v2109 = vadd.f32 0.0, %v2108
    %2110 = vdwg.mxu0
    %v2119 = vrot.slane %v2084, 7
    %v2120 = vsel %vm137, %v2119, %v2083
    %v2121 = vrot.slane %v2085, 6
    %v2122 = vsel %vm140, %v2121, %v2120
    %v2123 = vrot.slane %v2086, 5
    %v2124 = vsel %vm143, %v2123, %v2122
    %v2125 = vrot.slane %v2087, 4
    %v2126 = vsel %vm146, %v2125, %v2124
    %v2127 = vrot.slane %v2088, 3
    %v2128 = vsel %vm149, %v2127, %v2126
    %v2129 = vrot.slane %v2089, 2
    %v2130 = vsel %vm152, %v2129, %v2128
    %v2131 = vrot.slane %v2090, 1
    %v2132 = vsel %vm155, %v2131, %v2130
    %v2133 = vsel %vm157, %v2132, 0
    %2135 = vmatpush.msra.mxu0 0.0
    %2136 = vmatpush.msra.mxu0 0.0
    %2137 = vmatpush.msra.mxu0 0.0
    %2138 = vmatpush.msra.mxu0 0.0
    %2139 = vmatpush.msra.mxu0 0.0
    %2140 = vmatpush.msra.mxu0 0.0
    %2141 = vmatpush.msra.mxu0 0.0
    %2142 = vmatpush.msra.mxu0 0.0
    %2143 = vmatpush.msra.mxu0 0.0
    %2144 = vmatpush.msra.mxu0 0.0
    %2145 = vmatpush.msra.mxu0 0.0
    %2146 = vmatpush.msra.mxu0 0.0
    %2147 = vmatpush.msra.mxu0 0.0
    %2148 = vmatpush.msra.mxu0 0.0
    %2149 = vmatpush.msra.mxu0 0.0
    %2150 = vmatpush.msra.mxu0 %v33
    %2151 = vmatmul.f32.gmra.mxu0 %v2133
    %v2152 = vpop.f32.mrf.mxu0
    %v2153 = vadd.f32 %v2109, %v2152
    %2154 = vdwg.mxu0
    %v2155 = vadd.f32 %v2153, %v181
    %v2156 = vxor.u32 %v2155, 2147483648
    %v2157 = vmul.f32 %v2156, 1.442695
    %v2158 = vpow.pop %v2157
    %v2159 = vadd.f32 %v2158, 1.0
    %v2160 = vrcp.pop %v2159
    %v2161 = vmul.f32 %v2159, %v2160
    %v2162 = vsub.f32 1.0, %v2161
    %v2163 = vmul.f32 %v2160, %v2162
    %v2164 = vadd.f32 %v2160, %v2163
    %vm2165 = vweird.f32 %v2159
    %vm2166 = vweird.f32 %v2160
    %vm2167 = vmor %vm2165, %vm2166
    %v2168 = vsel %vm2167, %v2160, %v2164
    %v2169 = vand.u32 2147483647, %v2159
    %vm2170 = vcmp.eq.f32.partialorder %v2169, 8.507059e+37
    %v2171 = vand.u32 %v2159, 2147483648
    %v2172 = vor.u32 1.1754944e-38, %v2171
    %v2173 = vsel %vm2170, %v2172, %v2168
    %v2174 = vmul.f32 1.0, %v2173
    %v2175 = vtanh.pop %v2155
    %v2176 = vmul.f32 %v2174, %v1967
    %2178 = vrot.lane.b32.xlu0 %v2175, 64
    %v2179 = vpop.permute.xlu0 %2178
    %v2181 = vmul.f32 %v2174, %v2179
    %2183 = vrot.lane.b32.xlu0 %v2181, 32
    %v2184 = vpop.permute.xlu0 %2183
    %v2186 = vadd.f32 %v2176, %v2184
    %v2187 = vtanh.pop %v2186
    %2189 = vrot.lane.b32.xlu0 %v2187, 64
    %v2190 = vpop.permute.xlu0 %2189
    %v2192 = vmul.f32 %v2174, %v2190
    %2193 = vmatpush.msra.mxu0 0.0
    %2194 = vmatpush.msra.mxu0 0.0
    %2195 = vmatpush.msra.mxu0 0.0
    %2196 = vmatpush.msra.mxu0 0.0
    %2197 = vmatpush.msra.mxu0 0.0
    %2198 = vmatpush.msra.mxu0 0.0
    %2199 = vmatpush.msra.mxu0 0.0
    %2200 = vmatpush.msra.mxu0 0.0
    %2201 = vmatpush.msra.mxu0 0.0
    %2202 = vmatpush.msra.mxu0 0.0
    %2203 = vmatpush.msra.mxu0 0.0
    %2204 = vmatpush.msra.mxu0 0.0
    %2205 = vmatpush.msra.mxu0 %v45
    %2206 = vmatpush.msra.mxu0 %v44
    %2207 = vmatpush.msra.mxu0 %v43
    %2208 = vmatpush.msra.mxu0 %v42
    %2209 = vmatmul.f32.gmra.mxu0 %v2060
    %v2210 = vpop.f32.mrf.mxu0
    %v2211 = vadd.f32 0.0, %v2210
    %2212 = vdwg.mxu0
    %2214 = vrot.lane.b32.xlu0 %v2192, 32
    %v2215 = vpop.permute.xlu0 %2214
    %v2216 = vsel %vm104, %v2215, 0
    %2218 = vmatpush.msra.mxu0 0.0
    %2219 = vmatpush.msra.mxu0 0.0
    %2220 = vmatpush.msra.mxu0 0.0
    %2221 = vmatpush.msra.mxu0 0.0
    %2222 = vmatpush.msra.mxu0 0.0
    %2223 = vmatpush.msra.mxu0 0.0
    %2224 = vmatpush.msra.mxu0 0.0
    %2225 = vmatpush.msra.mxu0 0.0
    %2226 = vmatpush.msra.mxu0 0.0
    %2227 = vmatpush.msra.mxu0 0.0
    %2228 = vmatpush.msra.mxu0 0.0
    %2229 = vmatpush.msra.mxu0 0.0
    %2230 = vmatpush.msra.mxu0 %v37
    %2231 = vmatpush.msra.mxu0 %v36
    %2232 = vmatpush.msra.mxu0 %v35
    %2233 = vmatpush.msra.mxu0 %v34
    %2234 = vmatmul.f32.gmra.mxu0 %v2216
    %v2235 = vpop.f32.mrf.mxu0
    %v2236 = vadd.f32 %v2211, %v2235
    %2237 = vdwg.mxu0
    %v2238 = vadd.f32 %v2236, %v267
    %v2239 = vxor.u32 %v2238, 2147483648
    %v2240 = vmul.f32 %v2239, 1.442695
    %v2241 = vpow.pop %v2240
    %v2242 = vadd.f32 %v2241, 1.0
    %v2243 = vrcp.pop %v2242
    %v2244 = vmul.f32 %v2242, %v2243
    %v2245 = vsub.f32 1.0, %v2244
    %v2246 = vmul.f32 %v2243, %v2245
    %v2247 = vadd.f32 %v2243, %v2246
    %vm2248 = vweird.f32 %v2242
    %vm2249 = vweird.f32 %v2243
    %vm2250 = vmor %vm2248, %vm2249
    %v2251 = vsel %vm2250, %v2243, %v2247
    %v2252 = vand.u32 2147483647, %v2242
    %vm2253 = vcmp.eq.f32.partialorder %v2252, 8.507059e+37
    %v2254 = vand.u32 %v2242, 2147483648
    %v2255 = vor.u32 1.1754944e-38, %v2254
    %v2256 = vsel %vm2253, %v2255, %v2251
    %v2257 = vmul.f32 1.0, %v2256
    %v2258 = vtanh.pop %v2238
    %v2259 = vmul.f32 %v2257, %v2050
    %2261 = vrot.lane.b32.xlu0 %v2258, 64
    %v2262 = vpop.permute.xlu0 %2261
    %v2264 = vmul.f32 %v2257, %v2262
    %2266 = vrot.lane.b32.xlu0 %v2264, 32
    %v2267 = vpop.permute.xlu0 %2266
    %v2269 = vadd.f32 %v2259, %v2267
    %v2270 = vtanh.pop %v2269
    %2272 = vrot.lane.b32.xlu0 %v2270, 64
    %v2273 = vpop.permute.xlu0 %2272
    %v2275 = vmul.f32 %v2257, %v2273
    %2277 = vrot.lane.b32.xlu0 %v2275, 32
    %v2278 = vpop.permute.xlu0 %2277
    %v2279 = vsel %vm104, %v2278, 0
    %2281 = vmatpush.msra.mxu0 0.0
    %2282 = vmatpush.msra.mxu0 0.0
    %2283 = vmatpush.msra.mxu0 0.0
    %2284 = vmatpush.msra.mxu0 0.0
    %2285 = vmatpush.msra.mxu0 0.0
    %2286 = vmatpush.msra.mxu0 0.0
    %2287 = vmatpush.msra.mxu0 0.0
    %2288 = vmatpush.msra.mxu0 0.0
    %2289 = vmatpush.msra.mxu0 0.0
    %2290 = vmatpush.msra.mxu0 0.0
    %2291 = vmatpush.msra.mxu0 0.0
    %2292 = vmatpush.msra.mxu0 0.0
    %2293 = vmatpush.msra.mxu0 %v87
    %2294 = vmatpush.msra.mxu0 %v86
    %2295 = vmatpush.msra.mxu0 %v85
    %2296 = vmatpush.msra.mxu0 %v84
    %2297 = vmatmul.f32.gmra.mxu0 %v2279
    %v2298 = vpop.f32.mrf.mxu0
    %v2299 = vadd.f32 0.0, %v2298
    %2300 = vdwg.mxu0
    %v2301 = vadd.f32 %v2082, %v2299
    %v2302 = vld [vmem:[%s0 + $0xa] sm:$0x1]
    %v2303 = vld [vmem:[%s0 + $0x1a] sm:$0x1]
    %v2304 = vld [vmem:[%s0 + $0x2a] sm:$0x1]
    %v2305 = vld [vmem:[%s0 + $0x3a] sm:$0x1]
    %v2306 = vld [vmem:[%s0 + $0x4a] sm:$0x1]
    %v2307 = vld [vmem:[%s0 + $0x5a] sm:$0x1]
    %v2308 = vld [vmem:[%s0 + $0x6a] sm:$0x1]
    %v2309 = vld [vmem:[%s0 + $0x7a] sm:$0x1]
    %2310 = vmatpush.msra.mxu0 0.0
    %2311 = vmatpush.msra.mxu0 0.0
    %2312 = vmatpush.msra.mxu0 0.0
    %2313 = vmatpush.msra.mxu0 0.0
    %2314 = vmatpush.msra.mxu0 0.0
    %2315 = vmatpush.msra.mxu0 0.0
    %2316 = vmatpush.msra.mxu0 0.0
    %2317 = vmatpush.msra.mxu0 0.0
    %2318 = vmatpush.msra.mxu0 0.0
    %2319 = vmatpush.msra.mxu0 0.0
    %2320 = vmatpush.msra.mxu0 0.0
    %2321 = vmatpush.msra.mxu0 0.0
    %2322 = vmatpush.msra.mxu0 %v41
    %2323 = vmatpush.msra.mxu0 %v40
    %2324 = vmatpush.msra.mxu0 %v39
    %2325 = vmatpush.msra.mxu0 %v38
    %2326 = vmatmul.f32.gmra.mxu0 %v2216
    %v2327 = vpop.f32.mrf.mxu0
    %v2328 = vadd.f32 0.0, %v2327
    %2329 = vdwg.mxu0
    %v2338 = vrot.slane %v2303, 7
    %v2339 = vsel %vm137, %v2338, %v2302
    %v2340 = vrot.slane %v2304, 6
    %v2341 = vsel %vm140, %v2340, %v2339
    %v2342 = vrot.slane %v2305, 5
    %v2343 = vsel %vm143, %v2342, %v2341
    %v2344 = vrot.slane %v2306, 4
    %v2345 = vsel %vm146, %v2344, %v2343
    %v2346 = vrot.slane %v2307, 3
    %v2347 = vsel %vm149, %v2346, %v2345
    %v2348 = vrot.slane %v2308, 2
    %v2349 = vsel %vm152, %v2348, %v2347
    %v2350 = vrot.slane %v2309, 1
    %v2351 = vsel %vm155, %v2350, %v2349
    %v2352 = vsel %vm157, %v2351, 0
    %2354 = vmatpush.msra.mxu0 0.0
    %2355 = vmatpush.msra.mxu0 0.0
    %2356 = vmatpush.msra.mxu0 0.0
    %2357 = vmatpush.msra.mxu0 0.0
    %2358 = vmatpush.msra.mxu0 0.0
    %2359 = vmatpush.msra.mxu0 0.0
    %2360 = vmatpush.msra.mxu0 0.0
    %2361 = vmatpush.msra.mxu0 0.0
    %2362 = vmatpush.msra.mxu0 0.0
    %2363 = vmatpush.msra.mxu0 0.0
    %2364 = vmatpush.msra.mxu0 0.0
    %2365 = vmatpush.msra.mxu0 0.0
    %2366 = vmatpush.msra.mxu0 0.0
    %2367 = vmatpush.msra.mxu0 0.0
    %2368 = vmatpush.msra.mxu0 0.0
    %2369 = vmatpush.msra.mxu0 %v33
    %2370 = vmatmul.f32.gmra.mxu0 %v2352
    %v2371 = vpop.f32.mrf.mxu0
    %v2372 = vadd.f32 %v2328, %v2371
    %2373 = vdwg.mxu0
    %v2374 = vadd.f32 %v2372, %v181
    %v2375 = vxor.u32 %v2374, 2147483648
    %v2376 = vmul.f32 %v2375, 1.442695
    %v2377 = vpow.pop %v2376
    %v2378 = vadd.f32 %v2377, 1.0
    %v2379 = vrcp.pop %v2378
    %v2380 = vmul.f32 %v2378, %v2379
    %v2381 = vsub.f32 1.0, %v2380
    %v2382 = vmul.f32 %v2379, %v2381
    %v2383 = vadd.f32 %v2379, %v2382
    %vm2384 = vweird.f32 %v2378
    %vm2385 = vweird.f32 %v2379
    %vm2386 = vmor %vm2384, %vm2385
    %v2387 = vsel %vm2386, %v2379, %v2383
    %v2388 = vand.u32 2147483647, %v2378
    %vm2389 = vcmp.eq.f32.partialorder %v2388, 8.507059e+37
    %v2390 = vand.u32 %v2378, 2147483648
    %v2391 = vor.u32 1.1754944e-38, %v2390
    %v2392 = vsel %vm2389, %v2391, %v2387
    %v2393 = vmul.f32 1.0, %v2392
    %v2394 = vtanh.pop %v2374
    %v2395 = vmul.f32 %v2393, %v2186
    %2397 = vrot.lane.b32.xlu0 %v2394, 64
    %v2398 = vpop.permute.xlu0 %2397
    %v2400 = vmul.f32 %v2393, %v2398
    %2402 = vrot.lane.b32.xlu0 %v2400, 32
    %v2403 = vpop.permute.xlu0 %2402
    %v2405 = vadd.f32 %v2395, %v2403
    %v2406 = vtanh.pop %v2405
    %2408 = vrot.lane.b32.xlu0 %v2406, 64
    %v2409 = vpop.permute.xlu0 %2408
    %v2411 = vmul.f32 %v2393, %v2409
    %2412 = vmatpush.msra.mxu0 0.0
    %2413 = vmatpush.msra.mxu0 0.0
    %2414 = vmatpush.msra.mxu0 0.0
    %2415 = vmatpush.msra.mxu0 0.0
    %2416 = vmatpush.msra.mxu0 0.0
    %2417 = vmatpush.msra.mxu0 0.0
    %2418 = vmatpush.msra.mxu0 0.0
    %2419 = vmatpush.msra.mxu0 0.0
    %2420 = vmatpush.msra.mxu0 0.0
    %2421 = vmatpush.msra.mxu0 0.0
    %2422 = vmatpush.msra.mxu0 0.0
    %2423 = vmatpush.msra.mxu0 0.0
    %2424 = vmatpush.msra.mxu0 %v45
    %2425 = vmatpush.msra.mxu0 %v44
    %2426 = vmatpush.msra.mxu0 %v43
    %2427 = vmatpush.msra.mxu0 %v42
    %2428 = vmatmul.f32.gmra.mxu0 %v2279
    %v2429 = vpop.f32.mrf.mxu0
    %v2430 = vadd.f32 0.0, %v2429
    %2431 = vdwg.mxu0
    %2433 = vrot.lane.b32.xlu0 %v2411, 32
    %v2434 = vpop.permute.xlu0 %2433
    %v2435 = vsel %vm104, %v2434, 0
    %2437 = vmatpush.msra.mxu0 0.0
    %2438 = vmatpush.msra.mxu0 0.0
    %2439 = vmatpush.msra.mxu0 0.0
    %2440 = vmatpush.msra.mxu0 0.0
    %2441 = vmatpush.msra.mxu0 0.0
    %2442 = vmatpush.msra.mxu0 0.0
    %2443 = vmatpush.msra.mxu0 0.0
    %2444 = vmatpush.msra.mxu0 0.0
    %2445 = vmatpush.msra.mxu0 0.0
    %2446 = vmatpush.msra.mxu0 0.0
    %2447 = vmatpush.msra.mxu0 0.0
    %2448 = vmatpush.msra.mxu0 0.0
    %2449 = vmatpush.msra.mxu0 %v37
    %2450 = vmatpush.msra.mxu0 %v36
    %2451 = vmatpush.msra.mxu0 %v35
    %2452 = vmatpush.msra.mxu0 %v34
    %2453 = vmatmul.f32.gmra.mxu0 %v2435
    %v2454 = vpop.f32.mrf.mxu0
    %v2455 = vadd.f32 %v2430, %v2454
    %2456 = vdwg.mxu0
    %v2457 = vadd.f32 %v2455, %v267
    %v2458 = vxor.u32 %v2457, 2147483648
    %v2459 = vmul.f32 %v2458, 1.442695
    %v2460 = vpow.pop %v2459
    %v2461 = vadd.f32 %v2460, 1.0
    %v2462 = vrcp.pop %v2461
    %v2463 = vmul.f32 %v2461, %v2462
    %v2464 = vsub.f32 1.0, %v2463
    %v2465 = vmul.f32 %v2462, %v2464
    %v2466 = vadd.f32 %v2462, %v2465
    %vm2467 = vweird.f32 %v2461
    %vm2468 = vweird.f32 %v2462
    %vm2469 = vmor %vm2467, %vm2468
    %v2470 = vsel %vm2469, %v2462, %v2466
    %v2471 = vand.u32 2147483647, %v2461
    %vm2472 = vcmp.eq.f32.partialorder %v2471, 8.507059e+37
    %v2473 = vand.u32 %v2461, 2147483648
    %v2474 = vor.u32 1.1754944e-38, %v2473
    %v2475 = vsel %vm2472, %v2474, %v2470
    %v2476 = vmul.f32 1.0, %v2475
    %v2477 = vtanh.pop %v2457
    %v2478 = vmul.f32 %v2476, %v2269
    %2480 = vrot.lane.b32.xlu0 %v2477, 64
    %v2481 = vpop.permute.xlu0 %2480
    %v2483 = vmul.f32 %v2476, %v2481
    %2485 = vrot.lane.b32.xlu0 %v2483, 32
    %v2486 = vpop.permute.xlu0 %2485
    %v2488 = vadd.f32 %v2478, %v2486
    %v2489 = vtanh.pop %v2488
    %2491 = vrot.lane.b32.xlu0 %v2489, 64
    %v2492 = vpop.permute.xlu0 %2491
    %v2494 = vmul.f32 %v2476, %v2492
    %2496 = vrot.lane.b32.xlu0 %v2494, 32
    %v2497 = vpop.permute.xlu0 %2496
    %v2498 = vsel %vm104, %v2497, 0
    %2500 = vmatpush.msra.mxu0 0.0
    %2501 = vmatpush.msra.mxu0 0.0
    %2502 = vmatpush.msra.mxu0 0.0
    %2503 = vmatpush.msra.mxu0 0.0
    %2504 = vmatpush.msra.mxu0 0.0
    %2505 = vmatpush.msra.mxu0 0.0
    %2506 = vmatpush.msra.mxu0 0.0
    %2507 = vmatpush.msra.mxu0 0.0
    %2508 = vmatpush.msra.mxu0 0.0
    %2509 = vmatpush.msra.mxu0 0.0
    %2510 = vmatpush.msra.mxu0 0.0
    %2511 = vmatpush.msra.mxu0 0.0
    %2512 = vmatpush.msra.mxu0 %v91
    %2513 = vmatpush.msra.mxu0 %v90
    %2514 = vmatpush.msra.mxu0 %v89
    %2515 = vmatpush.msra.mxu0 %v88
    %2516 = vmatmul.f32.gmra.mxu0 %v2498
    %v2517 = vpop.f32.mrf.mxu0
    %v2518 = vadd.f32 0.0, %v2517
    %2519 = vdwg.mxu0
    %v2520 = vadd.f32 %v2301, %v2518
    %v2521 = vld [vmem:[%s0 + $0xb] sm:$0x1]
    %v2522 = vld [vmem:[%s0 + $0x1b] sm:$0x1]
    %v2523 = vld [vmem:[%s0 + $0x2b] sm:$0x1]
    %v2524 = vld [vmem:[%s0 + $0x3b] sm:$0x1]
    %v2525 = vld [vmem:[%s0 + $0x4b] sm:$0x1]
    %v2526 = vld [vmem:[%s0 + $0x5b] sm:$0x1]
    %v2527 = vld [vmem:[%s0 + $0x6b] sm:$0x1]
    %v2528 = vld [vmem:[%s0 + $0x7b] sm:$0x1]
    %2529 = vmatpush.msra.mxu0 0.0
    %2530 = vmatpush.msra.mxu0 0.0
    %2531 = vmatpush.msra.mxu0 0.0
    %2532 = vmatpush.msra.mxu0 0.0
    %2533 = vmatpush.msra.mxu0 0.0
    %2534 = vmatpush.msra.mxu0 0.0
    %2535 = vmatpush.msra.mxu0 0.0
    %2536 = vmatpush.msra.mxu0 0.0
    %2537 = vmatpush.msra.mxu0 0.0
    %2538 = vmatpush.msra.mxu0 0.0
    %2539 = vmatpush.msra.mxu0 0.0
    %2540 = vmatpush.msra.mxu0 0.0
    %2541 = vmatpush.msra.mxu0 %v41
    %2542 = vmatpush.msra.mxu0 %v40
    %2543 = vmatpush.msra.mxu0 %v39
    %2544 = vmatpush.msra.mxu0 %v38
    %2545 = vmatmul.f32.gmra.mxu0 %v2435
    %v2546 = vpop.f32.mrf.mxu0
    %v2547 = vadd.f32 0.0, %v2546
    %2548 = vdwg.mxu0
    %v2557 = vrot.slane %v2522, 7
    %v2558 = vsel %vm137, %v2557, %v2521
    %v2559 = vrot.slane %v2523, 6
    %v2560 = vsel %vm140, %v2559, %v2558
    %v2561 = vrot.slane %v2524, 5
    %v2562 = vsel %vm143, %v2561, %v2560
    %v2563 = vrot.slane %v2525, 4
    %v2564 = vsel %vm146, %v2563, %v2562
    %v2565 = vrot.slane %v2526, 3
    %v2566 = vsel %vm149, %v2565, %v2564
    %v2567 = vrot.slane %v2527, 2
    %v2568 = vsel %vm152, %v2567, %v2566
    %v2569 = vrot.slane %v2528, 1
    %v2570 = vsel %vm155, %v2569, %v2568
    %v2571 = vsel %vm157, %v2570, 0
    %2573 = vmatpush.msra.mxu0 0.0
    %2574 = vmatpush.msra.mxu0 0.0
    %2575 = vmatpush.msra.mxu0 0.0
    %2576 = vmatpush.msra.mxu0 0.0
    %2577 = vmatpush.msra.mxu0 0.0
    %2578 = vmatpush.msra.mxu0 0.0
    %2579 = vmatpush.msra.mxu0 0.0
    %2580 = vmatpush.msra.mxu0 0.0
    %2581 = vmatpush.msra.mxu0 0.0
    %2582 = vmatpush.msra.mxu0 0.0
    %2583 = vmatpush.msra.mxu0 0.0
    %2584 = vmatpush.msra.mxu0 0.0
    %2585 = vmatpush.msra.mxu0 0.0
    %2586 = vmatpush.msra.mxu0 0.0
    %2587 = vmatpush.msra.mxu0 0.0
    %2588 = vmatpush.msra.mxu0 %v33
    %2589 = vmatmul.f32.gmra.mxu0 %v2571
    %v2590 = vpop.f32.mrf.mxu0
    %v2591 = vadd.f32 %v2547, %v2590
    %2592 = vdwg.mxu0
    %v2593 = vadd.f32 %v2591, %v181
    %v2594 = vxor.u32 %v2593, 2147483648
    %v2595 = vmul.f32 %v2594, 1.442695
    %v2596 = vpow.pop %v2595
    %v2597 = vadd.f32 %v2596, 1.0
    %v2598 = vrcp.pop %v2597
    %v2599 = vmul.f32 %v2597, %v2598
    %v2600 = vsub.f32 1.0, %v2599
    %v2601 = vmul.f32 %v2598, %v2600
    %v2602 = vadd.f32 %v2598, %v2601
    %vm2603 = vweird.f32 %v2597
    %vm2604 = vweird.f32 %v2598
    %vm2605 = vmor %vm2603, %vm2604
    %v2606 = vsel %vm2605, %v2598, %v2602
    %v2607 = vand.u32 2147483647, %v2597
    %vm2608 = vcmp.eq.f32.partialorder %v2607, 8.507059e+37
    %v2609 = vand.u32 %v2597, 2147483648
    %v2610 = vor.u32 1.1754944e-38, %v2609
    %v2611 = vsel %vm2608, %v2610, %v2606
    %v2612 = vmul.f32 1.0, %v2611
    %v2613 = vtanh.pop %v2593
    %v2614 = vmul.f32 %v2612, %v2405
    %2616 = vrot.lane.b32.xlu0 %v2613, 64
    %v2617 = vpop.permute.xlu0 %2616
    %v2619 = vmul.f32 %v2612, %v2617
    %2621 = vrot.lane.b32.xlu0 %v2619, 32
    %v2622 = vpop.permute.xlu0 %2621
    %v2624 = vadd.f32 %v2614, %v2622
    %v2625 = vtanh.pop %v2624
    %2627 = vrot.lane.b32.xlu0 %v2625, 64
    %v2628 = vpop.permute.xlu0 %2627
    %v2630 = vmul.f32 %v2612, %v2628
    %2631 = vmatpush.msra.mxu0 0.0
    %2632 = vmatpush.msra.mxu0 0.0
    %2633 = vmatpush.msra.mxu0 0.0
    %2634 = vmatpush.msra.mxu0 0.0
    %2635 = vmatpush.msra.mxu0 0.0
    %2636 = vmatpush.msra.mxu0 0.0
    %2637 = vmatpush.msra.mxu0 0.0
    %2638 = vmatpush.msra.mxu0 0.0
    %2639 = vmatpush.msra.mxu0 0.0
    %2640 = vmatpush.msra.mxu0 0.0
    %2641 = vmatpush.msra.mxu0 0.0
    %2642 = vmatpush.msra.mxu0 0.0
    %2643 = vmatpush.msra.mxu0 %v45
    %2644 = vmatpush.msra.mxu0 %v44
    %2645 = vmatpush.msra.mxu0 %v43
    %2646 = vmatpush.msra.mxu0 %v42
    %2647 = vmatmul.f32.gmra.mxu0 %v2498
    %v2648 = vpop.f32.mrf.mxu0
    %v2649 = vadd.f32 0.0, %v2648
    %2650 = vdwg.mxu0
    %2652 = vrot.lane.b32.xlu0 %v2630, 32
    %v2653 = vpop.permute.xlu0 %2652
    %v2654 = vsel %vm104, %v2653, 0
    %2656 = vmatpush.msra.mxu0 0.0
    %2657 = vmatpush.msra.mxu0 0.0
    %2658 = vmatpush.msra.mxu0 0.0
    %2659 = vmatpush.msra.mxu0 0.0
    %2660 = vmatpush.msra.mxu0 0.0
    %2661 = vmatpush.msra.mxu0 0.0
    %2662 = vmatpush.msra.mxu0 0.0
    %2663 = vmatpush.msra.mxu0 0.0
    %2664 = vmatpush.msra.mxu0 0.0
    %2665 = vmatpush.msra.mxu0 0.0
    %2666 = vmatpush.msra.mxu0 0.0
    %2667 = vmatpush.msra.mxu0 0.0
    %2668 = vmatpush.msra.mxu0 %v37
    %2669 = vmatpush.msra.mxu0 %v36
    %2670 = vmatpush.msra.mxu0 %v35
    %2671 = vmatpush.msra.mxu0 %v34
    %2672 = vmatmul.f32.gmra.mxu0 %v2654
    %v2673 = vpop.f32.mrf.mxu0
    %v2674 = vadd.f32 %v2649, %v2673
    %2675 = vdwg.mxu0
    %v2676 = vadd.f32 %v2674, %v267
    %v2677 = vxor.u32 %v2676, 2147483648
    %v2678 = vmul.f32 %v2677, 1.442695
    %v2679 = vpow.pop %v2678
    %v2680 = vadd.f32 %v2679, 1.0
    %v2681 = vrcp.pop %v2680
    %v2682 = vmul.f32 %v2680, %v2681
    %v2683 = vsub.f32 1.0, %v2682
    %v2684 = vmul.f32 %v2681, %v2683
    %v2685 = vadd.f32 %v2681, %v2684
    %vm2686 = vweird.f32 %v2680
    %vm2687 = vweird.f32 %v2681
    %vm2688 = vmor %vm2686, %vm2687
    %v2689 = vsel %vm2688, %v2681, %v2685
    %v2690 = vand.u32 2147483647, %v2680
    %vm2691 = vcmp.eq.f32.partialorder %v2690, 8.507059e+37
    %v2692 = vand.u32 %v2680, 2147483648
    %v2693 = vor.u32 1.1754944e-38, %v2692
    %v2694 = vsel %vm2691, %v2693, %v2689
    %v2695 = vmul.f32 1.0, %v2694
    %v2696 = vtanh.pop %v2676
    %v2697 = vmul.f32 %v2695, %v2488
    %2699 = vrot.lane.b32.xlu0 %v2696, 64
    %v2700 = vpop.permute.xlu0 %2699
    %v2702 = vmul.f32 %v2695, %v2700
    %2704 = vrot.lane.b32.xlu0 %v2702, 32
    %v2705 = vpop.permute.xlu0 %2704
    %v2707 = vadd.f32 %v2697, %v2705
    %v2708 = vtanh.pop %v2707
    %2710 = vrot.lane.b32.xlu0 %v2708, 64
    %v2711 = vpop.permute.xlu0 %2710
    %v2713 = vmul.f32 %v2695, %v2711
    %2715 = vrot.lane.b32.xlu0 %v2713, 32
    %v2716 = vpop.permute.xlu0 %2715
    %v2717 = vsel %vm104, %v2716, 0
    %2719 = vmatpush.msra.mxu0 0.0
    %2720 = vmatpush.msra.mxu0 0.0
    %2721 = vmatpush.msra.mxu0 0.0
    %2722 = vmatpush.msra.mxu0 0.0
    %2723 = vmatpush.msra.mxu0 0.0
    %2724 = vmatpush.msra.mxu0 0.0
    %2725 = vmatpush.msra.mxu0 0.0
    %2726 = vmatpush.msra.mxu0 0.0
    %2727 = vmatpush.msra.mxu0 0.0
    %2728 = vmatpush.msra.mxu0 0.0
    %2729 = vmatpush.msra.mxu0 0.0
    %2730 = vmatpush.msra.mxu0 0.0
    %2731 = vmatpush.msra.mxu0 %v95
    %2732 = vmatpush.msra.mxu0 %v94
    %2733 = vmatpush.msra.mxu0 %v93
    %2734 = vmatpush.msra.mxu0 %v92
    %2735 = vmatmul.f32.gmra.mxu0 %v2717
    %v2736 = vpop.f32.mrf.mxu0
    %v2737 = vadd.f32 0.0, %v2736
    %2738 = vdwg.mxu0
    %v2739 = vadd.f32 %v2520, %v2737
    %v2740 = vld [vmem:[%s8] sm:$0x1]
    %v2742 = vperm.slane %v2740, 0
    %v2744 = vadd.f32 %v2739, %v2742
    %vm2745 = vcmask 130048
    %2746 = vst.msk [vmem:[#allocation2] sm:$0xff] %vm2745, %v2744
    // Predicated region
    $region38: #{tpu_custom_call.1} parent=1 // pred_check
      _
    $region39: #{tpu_custom_call.1} parent=1 // pred_check_branch
      %2748 = sbr.rel (0) target = $region41
    $region40: #{tpu_custom_call.1} parent=1 // pred_region
      %2750 = vsyncadd [#allocation3], 0
      %s2752 = sshll.u32 [#allocation2], 4
      %s2753 = int_to_ptr.vmem [resolvable:$true] %s2752
      %s2754 = sshll.u32 %s9, 4
      %s2755 = int_to_ptr.hbm [resolvable:$true] %s2754
      %2757 = dma.vmem_to_hbm [thread:$0]  %s2753, 128, %s2755, [#allocation3]
    $region41: #{tpu_custom_call.1} parent=1 // pred_fallthru
      _
    // Predicated region
    $region42: #{tpu_custom_call.1} parent=1 // pred_check
      _
    $region43: #{tpu_custom_call.1} parent=1 // pred_check_branch
      %2759 = sbr.rel (0) target = $region45
    $region44: #{tpu_custom_call.1} parent=1 // pred_region
      %2761 = dma.done [#allocation3], 128
    $region45: #{tpu_custom_call.1} parent=1 // pred_fallthru
      _
    %2762 = vsyncpa [#allocation3], 1

</llo_original>
